<compile_context>
chip_gen: v6e
topology: v6e:2x2x1
jax: 0.10.0
libtpu: 0.0.40
codegen_flags: <defaults>
</compile_context>

<pallas_src>
import functools

import numpy as np
import jax
import jax.numpy as jnp
from jax.experimental import pallas as pl
from jax.experimental.pallas import tpu as pltpu

K = 4        # conv kernel size (fixed by the module)
PAD = 1      # conv padding (fixed by the module)
EPS = 1e-5   # InstanceNorm2d default eps
LANE = 128   # TPU lane width
SUB = 8      # f32 sublane granule
T = K * K    # taps per conv


def _round_up(x, m):
    return -(-x // m) * m


def _conv_out_hw(h, w, stride):
    return (h + 2 * PAD - K) // stride + 1, (w + 2 * PAD - K) // stride + 1


# ----------------------------------------------------------------------------
# Module construction (mirrors the PyTorch __init__ loop) and parameter init.
# ----------------------------------------------------------------------------
def build_layer_configs(input_nc, ndf, patch_size, num_classes):
    layers = []
    num_filters = ndf
    rf = float(patch_size)
    cin = input_nc
    while rf > 4 and num_filters <= 512:
        layers.append(dict(cin=cin, cout=num_filters, stride=2, norm_act=True))
        cin = num_filters
        num_filters *= 2
        rf /= 2
    layers.append(dict(cin=cin, cout=num_filters, stride=1, norm_act=True))
    layers.append(dict(cin=num_filters, cout=num_classes, stride=1,
                       norm_act=False))
    return layers


def init_params(key, cfgs):
    """Weights stored as (K*K*Cin, Cout), flattened in (kh, kw, cin) order."""
    params = []
    for cfg in cfgs:
        key, k1, k2 = jax.random.split(key, 3)
        fan_in = K * K * cfg['cin']
        w = jax.random.normal(k1, (K * K * cfg['cin'], cfg['cout']),
                              jnp.float32) / jnp.sqrt(float(fan_in))
        b = 0.01 * jax.random.normal(k2, (1, cfg['cout']), jnp.float32)
        params.append((w, b))
    return params


# ----------------------------------------------------------------------------
# In-kernel building blocks
# ----------------------------------------------------------------------------
def _bias_norm_act(y3, b_ref, meta):
    """Bias + (optional) InstanceNorm2d(affine=False) + LeakyReLU(0.2).

    y3: (B, Op, C) with padded rows [o_real:Op) exactly zero on entry; they are
    exactly zero again on exit (masked bias, masked two-pass variance).
    """
    o_real, olp = meta['o'], meta['op']
    bias = b_ref[...][None]                                    # (1, 1, C)
    if olp != o_real:
        row = jax.lax.broadcasted_iota(jnp.int32, (1, olp, 1), 1)
        mask = (row < o_real).astype(jnp.float32)              # (1, Op, 1)
        y3 = y3 + bias * mask
    else:
        mask = None
        y3 = y3 + bias
    if not meta['norm_act']:
        return y3
    inv = 1.0 / float(o_real)
    mu = jnp.sum(y3, axis=1, keepdims=True) * inv              # per-sample/chan
    d = y3 - mu
    if mask is not None:
        d = d * mask                                           # re-zero pad rows
    var = jnp.sum(d * d, axis=1, keepdims=True) * inv          # two-pass var
    y3 = d * jax.lax.rsqrt(var + EPS)
    return jnp.where(y3 > 0, y3, 0.2 * y3)


def make_fused_kernel(metas, bblk):
    """One grid step = one batch block of `bblk` samples, whole network."""
    n_layers = len(metas)

    def kernel(*refs):
        out_ref = refs[-1]
        in_refs = refs[:-1]

        # ---- layer 0: wrapper-built im2col slab -> ONE big-M matmul --------
        slab_ref, w_ref, b_ref = in_refs[0], in_refs[1], in_refs[2]
        m0 = metas[0]
        y = jnp.dot(slab_ref[...].reshape(bblk * m0['op'], m0['kcols']),
                    w_ref[...], preferred_element_type=jnp.float32)
        y = _bias_norm_act(y.reshape(bblk, m0['op'], m0['cout']), b_ref, m0)

        # ---- layers >= 1: stacked gather matmul + T accumulating dots ------
        for li in range(1, n_layers):
            sel_ref, w_ref, b_ref = in_refs[3 * li:3 * li + 3]
            m = metas[li]
            olp, cprev, cout = m['op'], m['cin'], m['cout']
            # (a) one batched 0/1 gather matmul, M = T*olp (exact in bf16).
            g = jnp.einsum('btp,bpc->btc', sel_ref[...],
                           y.astype(jnp.bfloat16),
                           preferred_element_type=jnp.float32)
            # (b) T accumulating MXU matmuls, M = bblk*olp, real contraction
            #     depth cprev -- no K*K*C lane-concat slab is materialized.
            acc = None
            for t in range(T):
                g_t = g[:, t * olp:(t + 1) * olp, :].reshape(bblk * olp, cprev)
                p = jnp.dot(g_t.astype(jnp.bfloat16), w_ref[t],
                            preferred_element_type=jnp.float32)
                acc = p if acc is None else acc + p
            y = _bias_norm_act(acc.reshape(bblk, olp, cout), b_ref, m)

        # ---- fused final spatial mean (padded rows are exactly zero) -------
        mean = jnp.sum(y, axis=1, keepdims=True) * (1.0 / float(metas[-1]['o']))
        out_ref[...] = mean.astype(out_ref.dtype)

    return kernel


# ----------------------------------------------------------------------------
# Wrapper-side constants / layout plumbing
# ----------------------------------------------------------------------------
def _input_im2col(x_nhwc, stride, o_pad):
    """im2col of the raw input; columns ordered (kh, kw, cin); rows padded to 8.
    # TODO(synk): at realistic image sizes do this in-kernel with strided
    # pl.ds slices on the padded NHWC input so the inflated slab never hits HBM.
    """
    n, h, w, cin = x_nhwc.shape
    ho, wo = _conv_out_hw(h, w, stride)
    xp = jnp.pad(x_nhwc, ((0, 0), (PAD, PAD), (PAD, PAD), (0, 0)))
    cols = []
    for dh in range(K):
        for dw in range(K):
            cols.append(xp[:, dh:dh + stride * (ho - 1) + 1:stride,
                           dw:dw + stride * (wo - 1) + 1:stride, :])
    slab = jnp.concatenate(cols, axis=-1).reshape(n, ho * wo, K * K * cin)
    if o_pad != ho * wo:
        slab = jnp.pad(slab, ((0, 0), (0, o_pad - ho * wo), (0, 0)))
    return slab.astype(jnp.bfloat16)


def _selection_matrix(h_in, w_in, h_out, w_out, stride, o_in_pad, o_out_pad):
    """Constant 0/1 gather: row (t*o_out_pad + o) selects the input position for
    tap t at output o; all-zero rows encode conv zero-padding / spatial pad rows.
    # TODO(synk): quadratic in spatial area -- replace with strided slicing at
    # realistic image sizes.
    """
    sel = np.zeros((T, o_out_pad, o_in_pad), np.float32)
    for dh in range(K):
        for dw in range(K):
            t = dh * K + dw
            for oh in range(h_out):
                ih = stride * oh + dh - PAD
                if ih < 0 or ih >= h_in:
                    continue
                for ow in range(w_out):
                    iw = stride * ow + dw - PAD
                    if 0 <= iw < w_in:
                        sel[t, oh * w_out + ow, ih * w_in + iw] = 1.0
    return sel.reshape(T * o_out_pad, o_in_pad)


def _pack_params(params, cfgs, c_last):
    """bf16 weights at their REAL channel sizes; only the final cout is padded
    to 128 lanes (padded classes stay exactly zero: zero weight cols + bias)."""
    packed = []
    last = len(cfgs) - 1
    for li, (cfg, (w, b)) in enumerate(zip(cfgs, params)):
        cin, cout = cfg['cin'], cfg['cout']
        if li == last and c_last != cout:
            w = jnp.zeros((K * K * cin, c_last), jnp.float32).at[:, :cout].set(w)
            b = jnp.zeros((1, c_last), jnp.float32).at[:, :cout].set(b)
        if li == 0:
            wp = w.astype(jnp.bfloat16)                        # (K*K*cin, cout)
        else:
            wp = w.reshape(T, cin, -1).astype(jnp.bfloat16)    # (T, cin, cout)
        packed.append((wp, b.astype(jnp.float32)))
    return packed


# ----------------------------------------------------------------------------
# Forward pass
# ----------------------------------------------------------------------------
def discriminator_forward(x_nchw, params, cfgs, batch_block=None):
    """Full forward pass.  Input is NCHW (PyTorch convention)."""
    x = jnp.transpose(x_nchw, (0, 2, 3, 1)).astype(jnp.float32)   # -> NHWC
    n, h, w, _ = x.shape
    num_classes = cfgs[-1]['cout']
    c_last = _round_up(max(num_classes, LANE), LANE)

    # Batch blocking: fold bblk samples into every matmul's M dim; keep the
    # grid even / >= 2 steps where possible (v7x megacore sharding).
    if batch_block is None:
        batch_block = max(1, min(8, n // 2))
    bblk = batch_block
    n_pad = _round_up(n, bblk)
    if n_pad != n:
        x = jnp.pad(x, ((0, n_pad - n), (0, 0), (0, 0), (0, 0)))

    # Static per-layer spatial geometry (rows padded to the 8-sublane granule).
    spat = []
    hi, wi = h, w
    for cfg in cfgs:
        ho, wo = _conv_out_hw(hi, wi, cfg['stride'])
        spat.append(dict(hi=hi, wi=wi, ho=ho, wo=wo,
                         o=ho * wo, op=_round_up(ho * wo, SUB)))
        hi, wi = ho, wo

    packed = _pack_params(params, cfgs, c_last)

    # Layer 0 operands: im2col slab with its REAL contraction depth K*K*cin.
    slab0 = _input_im2col(x, cfgs[0]['stride'], spat[0]['op'])
    kcols = K * K * cfgs[0]['cin']

    metas = [dict(o=spat[0]['o'], op=spat[0]['op'], cin=cfgs[0]['cin'],
                  cout=cfgs[0]['cout'], kcols=kcols,
                  norm_act=cfgs[0]['norm_act'])]
    inputs = [slab0, packed[0][0], packed[0][1]]
    in_specs = [
        pl.BlockSpec((bblk, spat[0]['op'], kcols), lambda i: (i, 0, 0)),
        pl.BlockSpec((kcols, cfgs[0]['cout']), lambda i: (0, 0)),
        pl.BlockSpec((1, cfgs[0]['cout']), lambda i: (0, 0)),
    ]

    for li in range(1, len(cfgs)):
        s = spat[li]
        cout = c_last if li == len(cfgs) - 1 else cfgs[li]['cout']
        sel = _selection_matrix(s['hi'], s['wi'], s['ho'], s['wo'],
                                cfgs[li]['stride'],
                                o_in_pad=spat[li - 1]['op'], o_out_pad=s['op'])
        # Pre-broadcast over the batch block so the in-kernel gather is a plain
        # batched matmul (no in-kernel transpose / broadcast lowering risk).
        sel_b = jnp.tile(jnp.asarray(sel, jnp.bfloat16)[None], (bblk, 1, 1))
        wp, bp = packed[li]
        inputs += [sel_b, wp, bp]
        in_specs += [
            pl.BlockSpec(sel_b.shape, lambda i: (0, 0, 0)),
            pl.BlockSpec(wp.shape, lambda i: (0, 0, 0)),
            pl.BlockSpec(bp.shape, lambda i: (0, 0)),
        ]
        metas.append(dict(o=s['o'], op=s['op'], cin=cfgs[li]['cin'], cout=cout,
                          norm_act=cfgs[li]['norm_act']))

    out = pl.pallas_call(
        make_fused_kernel(metas, bblk),
        out_shape=jax.ShapeDtypeStruct((n_pad, 1, c_last), jnp.float32),
        grid=(n_pad // bblk,),
        in_specs=in_specs,
        out_specs=pl.BlockSpec((bblk, 1, c_last), lambda i: (i, 0, 0)),
        compiler_params=pltpu.CompilerParams(
            dimension_semantics=("parallel",),
            vmem_limit_bytes=32 * 1024 * 1024),
    )(*inputs)
    return out.reshape(n_pad, c_last)[:n, :num_classes]       # (N, num_classes)


# ----------------------------------------------------------------------------
# Pure-JAX references.  matmul_dtype=bf16 mimics the kernel's MXU precision
# (the 0/1 gather is exact in bf16, so only the convs themselves are quantized).
# ----------------------------------------------------------------------------
def reference_forward(x_nchw, params, cfgs, matmul_dtype=jnp.float32):
    x = jnp.transpose(x_nchw, (0, 2, 3, 1)).astype(jnp.float32)
    for cfg, (w, b) in zip(cfgs, params):
        s, cin, cout = cfg['stride'], cfg['cin'], cfg['cout']
        wk = w.reshape(K, K, cin, cout)
        y = jax.lax.conv_general_dilated(
            x.astype(matmul_dtype), wk.astype(matmul_dtype), (s, s),
            [(PAD, PAD), (PAD, PAD)],
            dimension_numbers=('NHWC', 'HWIO', 'NHWC'),
            preferred_element_type=jnp.float32) + b.reshape(1, 1, 1, cout)
        if cfg['norm_act']:
            mu = jnp.mean(y, axis=(1, 2), keepdims=True)
            var = jnp.mean(jnp.square(y - mu), axis=(1, 2), keepdims=True)
            y = (y - mu) * jax.lax.rsqrt(var + EPS)
            y = jnp.where(y > 0, y, 0.2 * y)
        x = y
    return jnp.mean(x, axis=(1, 2))


if __name__ == "__main__":
    # Small config consistent with the module: input_nc=4, ndf=8, patch_size=16,
    # num_classes=10 -> conv(4->8,s2), conv(8->16,s2), conv(16->32,s1),
    # conv(32->10,s1), spatial mean.
    key = jax.random.PRNGKey(0)
    kx, kp = jax.random.split(key)
    x = jax.random.normal(kx, (2, 4, 16, 16), jnp.float32)   # NCHW, like PyTorch

    cfgs = build_layer_configs(input_nc=4, ndf=8, patch_size=16, num_classes=10)
    params = init_params(kp, cfgs)

    fwd = jax.jit(functools.partial(discriminator_forward, cfgs=cfgs))
    out = jax.block_until_ready(fwd(x, params))
    assert out.shape == (2, 10), out.shape
    assert bool(jnp.all(jnp.isfinite(out)))

    # Tight structural check vs. a reference using the SAME bf16 matmul precision.
    ref_bf16 = jax.block_until_ready(
        reference_forward(x, params, cfgs, matmul_dtype=jnp.bfloat16))
    assert float(jnp.max(jnp.abs(out - ref_bf16))) < 5e-3

    # Sanity check vs. the full-f32 reference (difference = intentional bf16
    # MXU quantization recommended by the perf review).
    ref_f32 = jax.block_until_ready(reference_forward(x, params, cfgs))
    assert float(jnp.max(jnp.abs(out - ref_f32))) < 5e-2

    print("KERNEL_OK")
</pallas_src>

<mosaic_0001>
module attributes {stable_mosaic.version = 11 : i64} {
  func.func @kernel(%arg0: i32, %arg1: memref<1x64x64xbf16, #tpu.memory_space<vmem>>, %arg2: memref<64x8xbf16, #tpu.memory_space<vmem>>, %arg3: memref<1x8xf32, #tpu.memory_space<vmem>>, %arg4: memref<1x256x64xbf16, #tpu.memory_space<vmem>>, %arg5: memref<16x8x16xbf16, #tpu.memory_space<vmem>>, %arg6: memref<1x16xf32, #tpu.memory_space<vmem>>, %arg7: memref<1x256x16xbf16, #tpu.memory_space<vmem>>, %arg8: memref<16x16x32xbf16, #tpu.memory_space<vmem>>, %arg9: memref<1x32xf32, #tpu.memory_space<vmem>>, %arg10: memref<1x128x16xbf16, #tpu.memory_space<vmem>>, %arg11: memref<16x32x128xbf16, #tpu.memory_space<vmem>>, %arg12: memref<1x128xf32, #tpu.memory_space<vmem>>, %arg13: memref<1x1x128xf32, #tpu.memory_space<vmem>>) attributes {dimension_semantics = [#tpu.dimension_semantics<parallel>], iteration_bounds = array<i64: 2>, scalar_prefetch = 0 : i64, scratch_operands = 0 : i64, tpu.core_type = #tpu.core_type<tc>, window_params = [{transform_indices = @transform_0, window_bounds = array<i64: 1, 64, 64>}, {pipeline_mode = #tpu.pipeline_mode<synchronous>, transform_indices = @transform_1, window_bounds = array<i64: 64, 8>}, {pipeline_mode = #tpu.pipeline_mode<synchronous>, transform_indices = @transform_2, window_bounds = array<i64: 1, 8>}, {pipeline_mode = #tpu.pipeline_mode<synchronous>, transform_indices = @transform_3, window_bounds = array<i64: 1, 256, 64>}, {pipeline_mode = #tpu.pipeline_mode<synchronous>, transform_indices = @transform_4, window_bounds = array<i64: 16, 8, 16>}, {pipeline_mode = #tpu.pipeline_mode<synchronous>, transform_indices = @transform_5, window_bounds = array<i64: 1, 16>}, {pipeline_mode = #tpu.pipeline_mode<synchronous>, transform_indices = @transform_6, window_bounds = array<i64: 1, 256, 16>}, {pipeline_mode = #tpu.pipeline_mode<synchronous>, transform_indices = @transform_7, window_bounds = array<i64: 16, 16, 32>}, {pipeline_mode = #tpu.pipeline_mode<synchronous>, transform_indices = @transform_8, window_bounds = array<i64: 1, 32>}, {pipeline_mode = #tpu.pipeline_mode<synchronous>, transform_indices = @transform_9, window_bounds = array<i64: 1, 128, 16>}, {pipeline_mode = #tpu.pipeline_mode<synchronous>, transform_indices = @transform_10, window_bounds = array<i64: 16, 32, 128>}, {pipeline_mode = #tpu.pipeline_mode<synchronous>, transform_indices = @transform_11, window_bounds = array<i64: 1, 128>}, {transform_indices = @transform_12, window_bounds = array<i64: 1, 1, 128>}]} {
    %c0 = arith.constant 0 : index
    %c0_0 = arith.constant 0 : index
    %c0_1 = arith.constant 0 : index
    %0 = vector.load %arg1[%c0, %c0_0, %c0_1] : memref<1x64x64xbf16, #tpu.memory_space<vmem>>, vector<1x64x64xbf16>
    %1 = vector.shape_cast %0 : vector<1x64x64xbf16> to vector<64x64xbf16>
    %c0_2 = arith.constant 0 : index
    %c0_3 = arith.constant 0 : index
    %2 = vector.load %arg2[%c0_2, %c0_3] : memref<64x8xbf16, #tpu.memory_space<vmem>>, vector<64x8xbf16>
    %cst = arith.constant dense<0.000000e+00> : vector<64x8xf32>
    %3 = tpu.matmul %1, %2, %cst {dimension_numbers = #tpu.dot_dimension_numbers<[1], [0], [0], [1], [0, 0, 1, 1], [], []>} : vector<64x64xbf16>, vector<64x8xbf16>, vector<64x8xf32> -> vector<64x8xf32>
    %4 = vector.shape_cast %3 : vector<64x8xf32> to vector<1x64x8xf32>
    %c0_4 = arith.constant 0 : index
    %c0_5 = arith.constant 0 : index
    %5 = vector.load %arg3[%c0_4, %c0_5] : memref<1x8xf32, #tpu.memory_space<vmem>>, vector<1x8xf32>
    %6 = vector.shape_cast %5 : vector<1x8xf32> to vector<1x1x8xf32>
    %7 = vector.broadcast %6 : vector<1x1x8xf32> to vector<1x64x8xf32>
    %8 = arith.addf %4, %7 : vector<1x64x8xf32>
    %cst_6 = arith.constant dense<0.000000e+00> : vector<1x8xf32>
    %9 = vector.multi_reduction <add>, %8, %cst_6 [1] : vector<1x64x8xf32> to vector<1x8xf32>
    %10 = vector.shape_cast %9 : vector<1x8xf32> to vector<1x1x8xf32>
    %cst_7 = arith.constant 1.562500e-02 : f32
    %11 = vector.broadcast %cst_7 : f32 to vector<1x1x8xf32>
    %12 = arith.mulf %10, %11 : vector<1x1x8xf32>
    %13 = vector.broadcast %12 : vector<1x1x8xf32> to vector<1x64x8xf32>
    %14 = arith.subf %8, %13 : vector<1x64x8xf32>
    %15 = arith.mulf %14, %14 : vector<1x64x8xf32>
    %cst_8 = arith.constant dense<0.000000e+00> : vector<1x8xf32>
    %16 = vector.multi_reduction <add>, %15, %cst_8 [1] : vector<1x64x8xf32> to vector<1x8xf32>
    %17 = vector.shape_cast %16 : vector<1x8xf32> to vector<1x1x8xf32>
    %cst_9 = arith.constant 1.562500e-02 : f32
    %18 = vector.broadcast %cst_9 : f32 to vector<1x1x8xf32>
    %19 = arith.mulf %17, %18 : vector<1x1x8xf32>
    %cst_10 = arith.constant 9.99999974E-6 : f32
    %20 = vector.broadcast %cst_10 : f32 to vector<1x1x8xf32>
    %21 = arith.addf %19, %20 : vector<1x1x8xf32>
    %22 = math.rsqrt %21 : vector<1x1x8xf32>
    %23 = vector.broadcast %22 : vector<1x1x8xf32> to vector<1x64x8xf32>
    %24 = arith.mulf %14, %23 : vector<1x64x8xf32>
    %cst_11 = arith.constant 0.000000e+00 : f32
    %25 = vector.broadcast %cst_11 : f32 to vector<1x64x8xf32>
    %26 = arith.cmpf ogt, %24, %25 : vector<1x64x8xf32>
    %cst_12 = arith.constant 2.000000e-01 : f32
    %27 = vector.broadcast %cst_12 : f32 to vector<1x64x8xf32>
    %28 = arith.mulf %27, %24 : vector<1x64x8xf32>
    %29 = arith.select %26, %24, %28 : vector<1x64x8xi1>, vector<1x64x8xf32>
    %c0_13 = arith.constant 0 : index
    %c0_14 = arith.constant 0 : index
    %c0_15 = arith.constant 0 : index
    %30 = vector.load %arg4[%c0_13, %c0_14, %c0_15] : memref<1x256x64xbf16, #tpu.memory_space<vmem>>, vector<1x256x64xbf16>
    %31 = arith.truncf %29 : vector<1x64x8xf32> to vector<1x64x8xbf16>
    "tpu.trace_start"() <{level = 10 : i32, message = "btp,bpc->btc"}> : () -> ()
    %cst_16 = arith.constant dense<0.000000e+00> : vector<1x256x8xf32>
    %32 = tpu.matmul %30, %31, %cst_16 {dimension_numbers = #tpu.dot_dimension_numbers<[2], [1], [1], [2], [0, 0, 0, 1, 1, 2], [0], [0]>} : vector<1x256x64xbf16>, vector<1x64x8xbf16>, vector<1x256x8xf32> -> vector<1x256x8xf32>
    "tpu.trace_stop"() : () -> ()
    %33 = vector.extract_strided_slice %32 {offsets = [0, 0, 0], sizes = [1, 16, 8], strides = [1, 1, 1]} : vector<1x256x8xf32> to vector<1x16x8xf32>
    %34 = vector.shape_cast %33 : vector<1x16x8xf32> to vector<16x8xf32>
    %35 = arith.truncf %34 : vector<16x8xf32> to vector<16x8xbf16>
    %c0_17 = arith.constant 0 : index
    %c0_18 = arith.constant 0 : index
    %c0_19 = arith.constant 0 : index
    %36 = vector.load %arg5[%c0_17, %c0_18, %c0_19] : memref<16x8x16xbf16, #tpu.memory_space<vmem>>, vector<1x8x16xbf16>
    %37 = vector.shape_cast %36 : vector<1x8x16xbf16> to vector<8x16xbf16>
    %cst_20 = arith.constant dense<0.000000e+00> : vector<16x16xf32>
    %38 = tpu.matmul %35, %37, %cst_20 {dimension_numbers = #tpu.dot_dimension_numbers<[1], [0], [0], [1], [0, 0, 1, 1], [], []>} : vector<16x8xbf16>, vector<8x16xbf16>, vector<16x16xf32> -> vector<16x16xf32>
    %39 = vector.extract_strided_slice %32 {offsets = [0, 16, 0], sizes = [1, 16, 8], strides = [1, 1, 1]} : vector<1x256x8xf32> to vector<1x16x8xf32>
    %40 = vector.shape_cast %39 : vector<1x16x8xf32> to vector<16x8xf32>
    %41 = arith.truncf %40 : vector<16x8xf32> to vector<16x8xbf16>
    %c1 = arith.constant 1 : index
    %c0_21 = arith.constant 0 : index
    %c0_22 = arith.constant 0 : index
    %42 = vector.load %arg5[%c1, %c0_21, %c0_22] : memref<16x8x16xbf16, #tpu.memory_space<vmem>>, vector<1x8x16xbf16>
    %43 = vector.shape_cast %42 : vector<1x8x16xbf16> to vector<8x16xbf16>
    %cst_23 = arith.constant dense<0.000000e+00> : vector<16x16xf32>
    %44 = tpu.matmul %41, %43, %cst_23 {dimension_numbers = #tpu.dot_dimension_numbers<[1], [0], [0], [1], [0, 0, 1, 1], [], []>} : vector<16x8xbf16>, vector<8x16xbf16>, vector<16x16xf32> -> vector<16x16xf32>
    %45 = arith.addf %38, %44 : vector<16x16xf32>
    %46 = vector.extract_strided_slice %32 {offsets = [0, 32, 0], sizes = [1, 16, 8], strides = [1, 1, 1]} : vector<1x256x8xf32> to vector<1x16x8xf32>
    %47 = vector.shape_cast %46 : vector<1x16x8xf32> to vector<16x8xf32>
    %48 = arith.truncf %47 : vector<16x8xf32> to vector<16x8xbf16>
    %c2 = arith.constant 2 : index
    %c0_24 = arith.constant 0 : index
    %c0_25 = arith.constant 0 : index
    %49 = vector.load %arg5[%c2, %c0_24, %c0_25] : memref<16x8x16xbf16, #tpu.memory_space<vmem>>, vector<1x8x16xbf16>
    %50 = vector.shape_cast %49 : vector<1x8x16xbf16> to vector<8x16xbf16>
    %cst_26 = arith.constant dense<0.000000e+00> : vector<16x16xf32>
    %51 = tpu.matmul %48, %50, %cst_26 {dimension_numbers = #tpu.dot_dimension_numbers<[1], [0], [0], [1], [0, 0, 1, 1], [], []>} : vector<16x8xbf16>, vector<8x16xbf16>, vector<16x16xf32> -> vector<16x16xf32>
    %52 = arith.addf %45, %51 : vector<16x16xf32>
    %53 = vector.extract_strided_slice %32 {offsets = [0, 48, 0], sizes = [1, 16, 8], strides = [1, 1, 1]} : vector<1x256x8xf32> to vector<1x16x8xf32>
    %54 = vector.shape_cast %53 : vector<1x16x8xf32> to vector<16x8xf32>
    %55 = arith.truncf %54 : vector<16x8xf32> to vector<16x8xbf16>
    %c3 = arith.constant 3 : index
    %c0_27 = arith.constant 0 : index
    %c0_28 = arith.constant 0 : index
    %56 = vector.load %arg5[%c3, %c0_27, %c0_28] : memref<16x8x16xbf16, #tpu.memory_space<vmem>>, vector<1x8x16xbf16>
    %57 = vector.shape_cast %56 : vector<1x8x16xbf16> to vector<8x16xbf16>
    %cst_29 = arith.constant dense<0.000000e+00> : vector<16x16xf32>
    %58 = tpu.matmul %55, %57, %cst_29 {dimension_numbers = #tpu.dot_dimension_numbers<[1], [0], [0], [1], [0, 0, 1, 1], [], []>} : vector<16x8xbf16>, vector<8x16xbf16>, vector<16x16xf32> -> vector<16x16xf32>
    %59 = arith.addf %52, %58 : vector<16x16xf32>
    %60 = vector.extract_strided_slice %32 {offsets = [0, 64, 0], sizes = [1, 16, 8], strides = [1, 1, 1]} : vector<1x256x8xf32> to vector<1x16x8xf32>
    %61 = vector.shape_cast %60 : vector<1x16x8xf32> to vector<16x8xf32>
    %62 = arith.truncf %61 : vector<16x8xf32> to vector<16x8xbf16>
    %c4 = arith.constant 4 : index
    %c0_30 = arith.constant 0 : index
    %c0_31 = arith.constant 0 : index
    %63 = vector.load %arg5[%c4, %c0_30, %c0_31] : memref<16x8x16xbf16, #tpu.memory_space<vmem>>, vector<1x8x16xbf16>
    %64 = vector.shape_cast %63 : vector<1x8x16xbf16> to vector<8x16xbf16>
    %cst_32 = arith.constant dense<0.000000e+00> : vector<16x16xf32>
    %65 = tpu.matmul %62, %64, %cst_32 {dimension_numbers = #tpu.dot_dimension_numbers<[1], [0], [0], [1], [0, 0, 1, 1], [], []>} : vector<16x8xbf16>, vector<8x16xbf16>, vector<16x16xf32> -> vector<16x16xf32>
    %66 = arith.addf %59, %65 : vector<16x16xf32>
    %67 = vector.extract_strided_slice %32 {offsets = [0, 80, 0], sizes = [1, 16, 8], strides = [1, 1, 1]} : vector<1x256x8xf32> to vector<1x16x8xf32>
    %68 = vector.shape_cast %67 : vector<1x16x8xf32> to vector<16x8xf32>
    %69 = arith.truncf %68 : vector<16x8xf32> to vector<16x8xbf16>
    %c5 = arith.constant 5 : index
    %c0_33 = arith.constant 0 : index
    %c0_34 = arith.constant 0 : index
    %70 = vector.load %arg5[%c5, %c0_33, %c0_34] : memref<16x8x16xbf16, #tpu.memory_space<vmem>>, vector<1x8x16xbf16>
    %71 = vector.shape_cast %70 : vector<1x8x16xbf16> to vector<8x16xbf16>
    %cst_35 = arith.constant dense<0.000000e+00> : vector<16x16xf32>
    %72 = tpu.matmul %69, %71, %cst_35 {dimension_numbers = #tpu.dot_dimension_numbers<[1], [0], [0], [1], [0, 0, 1, 1], [], []>} : vector<16x8xbf16>, vector<8x16xbf16>, vector<16x16xf32> -> vector<16x16xf32>
    %73 = arith.addf %66, %72 : vector<16x16xf32>
    %74 = vector.extract_strided_slice %32 {offsets = [0, 96, 0], sizes = [1, 16, 8], strides = [1, 1, 1]} : vector<1x256x8xf32> to vector<1x16x8xf32>
    %75 = vector.shape_cast %74 : vector<1x16x8xf32> to vector<16x8xf32>
    %76 = arith.truncf %75 : vector<16x8xf32> to vector<16x8xbf16>
    %c6 = arith.constant 6 : index
    %c0_36 = arith.constant 0 : index
    %c0_37 = arith.constant 0 : index
    %77 = vector.load %arg5[%c6, %c0_36, %c0_37] : memref<16x8x16xbf16, #tpu.memory_space<vmem>>, vector<1x8x16xbf16>
    %78 = vector.shape_cast %77 : vector<1x8x16xbf16> to vector<8x16xbf16>
    %cst_38 = arith.constant dense<0.000000e+00> : vector<16x16xf32>
    %79 = tpu.matmul %76, %78, %cst_38 {dimension_numbers = #tpu.dot_dimension_numbers<[1], [0], [0], [1], [0, 0, 1, 1], [], []>} : vector<16x8xbf16>, vector<8x16xbf16>, vector<16x16xf32> -> vector<16x16xf32>
    %80 = arith.addf %73, %79 : vector<16x16xf32>
    %81 = vector.extract_strided_slice %32 {offsets = [0, 112, 0], sizes = [1, 16, 8], strides = [1, 1, 1]} : vector<1x256x8xf32> to vector<1x16x8xf32>
    %82 = vector.shape_cast %81 : vector<1x16x8xf32> to vector<16x8xf32>
    %83 = arith.truncf %82 : vector<16x8xf32> to vector<16x8xbf16>
    %c7 = arith.constant 7 : index
    %c0_39 = arith.constant 0 : index
    %c0_40 = arith.constant 0 : index
    %84 = vector.load %arg5[%c7, %c0_39, %c0_40] : memref<16x8x16xbf16, #tpu.memory_space<vmem>>, vector<1x8x16xbf16>
    %85 = vector.shape_cast %84 : vector<1x8x16xbf16> to vector<8x16xbf16>
    %cst_41 = arith.constant dense<0.000000e+00> : vector<16x16xf32>
    %86 = tpu.matmul %83, %85, %cst_41 {dimension_numbers = #tpu.dot_dimension_numbers<[1], [0], [0], [1], [0, 0, 1, 1], [], []>} : vector<16x8xbf16>, vector<8x16xbf16>, vector<16x16xf32> -> vector<16x16xf32>
    %87 = arith.addf %80, %86 : vector<16x16xf32>
    %88 = vector.extract_strided_slice %32 {offsets = [0, 128, 0], sizes = [1, 16, 8], strides = [1, 1, 1]} : vector<1x256x8xf32> to vector<1x16x8xf32>
    %89 = vector.shape_cast %88 : vector<1x16x8xf32> to vector<16x8xf32>
    %90 = arith.truncf %89 : vector<16x8xf32> to vector<16x8xbf16>
    %c8 = arith.constant 8 : index
    %c0_42 = arith.constant 0 : index
    %c0_43 = arith.constant 0 : index
    %91 = vector.load %arg5[%c8, %c0_42, %c0_43] : memref<16x8x16xbf16, #tpu.memory_space<vmem>>, vector<1x8x16xbf16>
    %92 = vector.shape_cast %91 : vector<1x8x16xbf16> to vector<8x16xbf16>
    %cst_44 = arith.constant dense<0.000000e+00> : vector<16x16xf32>
    %93 = tpu.matmul %90, %92, %cst_44 {dimension_numbers = #tpu.dot_dimension_numbers<[1], [0], [0], [1], [0, 0, 1, 1], [], []>} : vector<16x8xbf16>, vector<8x16xbf16>, vector<16x16xf32> -> vector<16x16xf32>
    %94 = arith.addf %87, %93 : vector<16x16xf32>
    %95 = vector.extract_strided_slice %32 {offsets = [0, 144, 0], sizes = [1, 16, 8], strides = [1, 1, 1]} : vector<1x256x8xf32> to vector<1x16x8xf32>
    %96 = vector.shape_cast %95 : vector<1x16x8xf32> to vector<16x8xf32>
    %97 = arith.truncf %96 : vector<16x8xf32> to vector<16x8xbf16>
    %c9 = arith.constant 9 : index
    %c0_45 = arith.constant 0 : index
    %c0_46 = arith.constant 0 : index
    %98 = vector.load %arg5[%c9, %c0_45, %c0_46] : memref<16x8x16xbf16, #tpu.memory_space<vmem>>, vector<1x8x16xbf16>
    %99 = vector.shape_cast %98 : vector<1x8x16xbf16> to vector<8x16xbf16>
    %cst_47 = arith.constant dense<0.000000e+00> : vector<16x16xf32>
    %100 = tpu.matmul %97, %99, %cst_47 {dimension_numbers = #tpu.dot_dimension_numbers<[1], [0], [0], [1], [0, 0, 1, 1], [], []>} : vector<16x8xbf16>, vector<8x16xbf16>, vector<16x16xf32> -> vector<16x16xf32>
    %101 = arith.addf %94, %100 : vector<16x16xf32>
    %102 = vector.extract_strided_slice %32 {offsets = [0, 160, 0], sizes = [1, 16, 8], strides = [1, 1, 1]} : vector<1x256x8xf32> to vector<1x16x8xf32>
    %103 = vector.shape_cast %102 : vector<1x16x8xf32> to vector<16x8xf32>
    %104 = arith.truncf %103 : vector<16x8xf32> to vector<16x8xbf16>
    %c10 = arith.constant 10 : index
    %c0_48 = arith.constant 0 : index
    %c0_49 = arith.constant 0 : index
    %105 = vector.load %arg5[%c10, %c0_48, %c0_49] : memref<16x8x16xbf16, #tpu.memory_space<vmem>>, vector<1x8x16xbf16>
    %106 = vector.shape_cast %105 : vector<1x8x16xbf16> to vector<8x16xbf16>
    %cst_50 = arith.constant dense<0.000000e+00> : vector<16x16xf32>
    %107 = tpu.matmul %104, %106, %cst_50 {dimension_numbers = #tpu.dot_dimension_numbers<[1], [0], [0], [1], [0, 0, 1, 1], [], []>} : vector<16x8xbf16>, vector<8x16xbf16>, vector<16x16xf32> -> vector<16x16xf32>
    %108 = arith.addf %101, %107 : vector<16x16xf32>
    %109 = vector.extract_strided_slice %32 {offsets = [0, 176, 0], sizes = [1, 16, 8], strides = [1, 1, 1]} : vector<1x256x8xf32> to vector<1x16x8xf32>
    %110 = vector.shape_cast %109 : vector<1x16x8xf32> to vector<16x8xf32>
    %111 = arith.truncf %110 : vector<16x8xf32> to vector<16x8xbf16>
    %c11 = arith.constant 11 : index
    %c0_51 = arith.constant 0 : index
    %c0_52 = arith.constant 0 : index
    %112 = vector.load %arg5[%c11, %c0_51, %c0_52] : memref<16x8x16xbf16, #tpu.memory_space<vmem>>, vector<1x8x16xbf16>
    %113 = vector.shape_cast %112 : vector<1x8x16xbf16> to vector<8x16xbf16>
    %cst_53 = arith.constant dense<0.000000e+00> : vector<16x16xf32>
    %114 = tpu.matmul %111, %113, %cst_53 {dimension_numbers = #tpu.dot_dimension_numbers<[1], [0], [0], [1], [0, 0, 1, 1], [], []>} : vector<16x8xbf16>, vector<8x16xbf16>, vector<16x16xf32> -> vector<16x16xf32>
    %115 = arith.addf %108, %114 : vector<16x16xf32>
    %116 = vector.extract_strided_slice %32 {offsets = [0, 192, 0], sizes = [1, 16, 8], strides = [1, 1, 1]} : vector<1x256x8xf32> to vector<1x16x8xf32>
    %117 = vector.shape_cast %116 : vector<1x16x8xf32> to vector<16x8xf32>
    %118 = arith.truncf %117 : vector<16x8xf32> to vector<16x8xbf16>
    %c12 = arith.constant 12 : index
    %c0_54 = arith.constant 0 : index
    %c0_55 = arith.constant 0 : index
    %119 = vector.load %arg5[%c12, %c0_54, %c0_55] : memref<16x8x16xbf16, #tpu.memory_space<vmem>>, vector<1x8x16xbf16>
    %120 = vector.shape_cast %119 : vector<1x8x16xbf16> to vector<8x16xbf16>
    %cst_56 = arith.constant dense<0.000000e+00> : vector<16x16xf32>
    %121 = tpu.matmul %118, %120, %cst_56 {dimension_numbers = #tpu.dot_dimension_numbers<[1], [0], [0], [1], [0, 0, 1, 1], [], []>} : vector<16x8xbf16>, vector<8x16xbf16>, vector<16x16xf32> -> vector<16x16xf32>
    %122 = arith.addf %115, %121 : vector<16x16xf32>
    %123 = vector.extract_strided_slice %32 {offsets = [0, 208, 0], sizes = [1, 16, 8], strides = [1, 1, 1]} : vector<1x256x8xf32> to vector<1x16x8xf32>
    %124 = vector.shape_cast %123 : vector<1x16x8xf32> to vector<16x8xf32>
    %125 = arith.truncf %124 : vector<16x8xf32> to vector<16x8xbf16>
    %c13 = arith.constant 13 : index
    %c0_57 = arith.constant 0 : index
    %c0_58 = arith.constant 0 : index
    %126 = vector.load %arg5[%c13, %c0_57, %c0_58] : memref<16x8x16xbf16, #tpu.memory_space<vmem>>, vector<1x8x16xbf16>
    %127 = vector.shape_cast %126 : vector<1x8x16xbf16> to vector<8x16xbf16>
    %cst_59 = arith.constant dense<0.000000e+00> : vector<16x16xf32>
    %128 = tpu.matmul %125, %127, %cst_59 {dimension_numbers = #tpu.dot_dimension_numbers<[1], [0], [0], [1], [0, 0, 1, 1], [], []>} : vector<16x8xbf16>, vector<8x16xbf16>, vector<16x16xf32> -> vector<16x16xf32>
    %129 = arith.addf %122, %128 : vector<16x16xf32>
    %130 = vector.extract_strided_slice %32 {offsets = [0, 224, 0], sizes = [1, 16, 8], strides = [1, 1, 1]} : vector<1x256x8xf32> to vector<1x16x8xf32>
    %131 = vector.shape_cast %130 : vector<1x16x8xf32> to vector<16x8xf32>
    %132 = arith.truncf %131 : vector<16x8xf32> to vector<16x8xbf16>
    %c14 = arith.constant 14 : index
    %c0_60 = arith.constant 0 : index
    %c0_61 = arith.constant 0 : index
    %133 = vector.load %arg5[%c14, %c0_60, %c0_61] : memref<16x8x16xbf16, #tpu.memory_space<vmem>>, vector<1x8x16xbf16>
    %134 = vector.shape_cast %133 : vector<1x8x16xbf16> to vector<8x16xbf16>
    %cst_62 = arith.constant dense<0.000000e+00> : vector<16x16xf32>
    %135 = tpu.matmul %132, %134, %cst_62 {dimension_numbers = #tpu.dot_dimension_numbers<[1], [0], [0], [1], [0, 0, 1, 1], [], []>} : vector<16x8xbf16>, vector<8x16xbf16>, vector<16x16xf32> -> vector<16x16xf32>
    %136 = arith.addf %129, %135 : vector<16x16xf32>
    %137 = vector.extract_strided_slice %32 {offsets = [0, 240, 0], sizes = [1, 16, 8], strides = [1, 1, 1]} : vector<1x256x8xf32> to vector<1x16x8xf32>
    %138 = vector.shape_cast %137 : vector<1x16x8xf32> to vector<16x8xf32>
    %139 = arith.truncf %138 : vector<16x8xf32> to vector<16x8xbf16>
    %c15 = arith.constant 15 : index
    %c0_63 = arith.constant 0 : index
    %c0_64 = arith.constant 0 : index
    %140 = vector.load %arg5[%c15, %c0_63, %c0_64] : memref<16x8x16xbf16, #tpu.memory_space<vmem>>, vector<1x8x16xbf16>
    %141 = vector.shape_cast %140 : vector<1x8x16xbf16> to vector<8x16xbf16>
    %cst_65 = arith.constant dense<0.000000e+00> : vector<16x16xf32>
    %142 = tpu.matmul %139, %141, %cst_65 {dimension_numbers = #tpu.dot_dimension_numbers<[1], [0], [0], [1], [0, 0, 1, 1], [], []>} : vector<16x8xbf16>, vector<8x16xbf16>, vector<16x16xf32> -> vector<16x16xf32>
    %143 = arith.addf %136, %142 : vector<16x16xf32>
    %144 = vector.shape_cast %143 : vector<16x16xf32> to vector<1x16x16xf32>
    %c0_66 = arith.constant 0 : index
    %c0_67 = arith.constant 0 : index
    %145 = vector.load %arg6[%c0_66, %c0_67] : memref<1x16xf32, #tpu.memory_space<vmem>>, vector<1x16xf32>
    %146 = vector.shape_cast %145 : vector<1x16xf32> to vector<1x1x16xf32>
    %147 = vector.broadcast %146 : vector<1x1x16xf32> to vector<1x16x16xf32>
    %148 = arith.addf %144, %147 : vector<1x16x16xf32>
    %cst_68 = arith.constant dense<0.000000e+00> : vector<1x16xf32>
    %149 = vector.multi_reduction <add>, %148, %cst_68 [1] : vector<1x16x16xf32> to vector<1x16xf32>
    %150 = vector.shape_cast %149 : vector<1x16xf32> to vector<1x1x16xf32>
    %cst_69 = arith.constant 6.250000e-02 : f32
    %151 = vector.broadcast %cst_69 : f32 to vector<1x1x16xf32>
    %152 = arith.mulf %150, %151 : vector<1x1x16xf32>
    %153 = vector.broadcast %152 : vector<1x1x16xf32> to vector<1x16x16xf32>
    %154 = arith.subf %148, %153 : vector<1x16x16xf32>
    %155 = arith.mulf %154, %154 : vector<1x16x16xf32>
    %cst_70 = arith.constant dense<0.000000e+00> : vector<1x16xf32>
    %156 = vector.multi_reduction <add>, %155, %cst_70 [1] : vector<1x16x16xf32> to vector<1x16xf32>
    %157 = vector.shape_cast %156 : vector<1x16xf32> to vector<1x1x16xf32>
    %cst_71 = arith.constant 6.250000e-02 : f32
    %158 = vector.broadcast %cst_71 : f32 to vector<1x1x16xf32>
    %159 = arith.mulf %157, %158 : vector<1x1x16xf32>
    %cst_72 = arith.constant 9.99999974E-6 : f32
    %160 = vector.broadcast %cst_72 : f32 to vector<1x1x16xf32>
    %161 = arith.addf %159, %160 : vector<1x1x16xf32>
    %162 = math.rsqrt %161 : vector<1x1x16xf32>
    %163 = vector.broadcast %162 : vector<1x1x16xf32> to vector<1x16x16xf32>
    %164 = arith.mulf %154, %163 : vector<1x16x16xf32>
    %cst_73 = arith.constant 0.000000e+00 : f32
    %165 = vector.broadcast %cst_73 : f32 to vector<1x16x16xf32>
    %166 = arith.cmpf ogt, %164, %165 : vector<1x16x16xf32>
    %cst_74 = arith.constant 2.000000e-01 : f32
    %167 = vector.broadcast %cst_74 : f32 to vector<1x16x16xf32>
    %168 = arith.mulf %167, %164 : vector<1x16x16xf32>
    %169 = arith.select %166, %164, %168 : vector<1x16x16xi1>, vector<1x16x16xf32>
    %c0_75 = arith.constant 0 : index
    %c0_76 = arith.constant 0 : index
    %c0_77 = arith.constant 0 : index
    %170 = vector.load %arg7[%c0_75, %c0_76, %c0_77] : memref<1x256x16xbf16, #tpu.memory_space<vmem>>, vector<1x256x16xbf16>
    %171 = arith.truncf %169 : vector<1x16x16xf32> to vector<1x16x16xbf16>
    "tpu.trace_start"() <{level = 10 : i32, message = "btp,bpc->btc"}> : () -> ()
    %cst_78 = arith.constant dense<0.000000e+00> : vector<1x256x16xf32>
    %172 = tpu.matmul %170, %171, %cst_78 {dimension_numbers = #tpu.dot_dimension_numbers<[2], [1], [1], [2], [0, 0, 0, 1, 1, 2], [0], [0]>} : vector<1x256x16xbf16>, vector<1x16x16xbf16>, vector<1x256x16xf32> -> vector<1x256x16xf32>
    "tpu.trace_stop"() : () -> ()
    %173 = vector.extract_strided_slice %172 {offsets = [0, 0, 0], sizes = [1, 16, 16], strides = [1, 1, 1]} : vector<1x256x16xf32> to vector<1x16x16xf32>
    %174 = vector.shape_cast %173 : vector<1x16x16xf32> to vector<16x16xf32>
    %175 = arith.truncf %174 : vector<16x16xf32> to vector<16x16xbf16>
    %c0_79 = arith.constant 0 : index
    %c0_80 = arith.constant 0 : index
    %c0_81 = arith.constant 0 : index
    %176 = vector.load %arg8[%c0_79, %c0_80, %c0_81] : memref<16x16x32xbf16, #tpu.memory_space<vmem>>, vector<1x16x32xbf16>
    %177 = vector.shape_cast %176 : vector<1x16x32xbf16> to vector<16x32xbf16>
    %cst_82 = arith.constant dense<0.000000e+00> : vector<16x32xf32>
    %178 = tpu.matmul %175, %177, %cst_82 {dimension_numbers = #tpu.dot_dimension_numbers<[1], [0], [0], [1], [0, 0, 1, 1], [], []>} : vector<16x16xbf16>, vector<16x32xbf16>, vector<16x32xf32> -> vector<16x32xf32>
    %179 = vector.extract_strided_slice %172 {offsets = [0, 16, 0], sizes = [1, 16, 16], strides = [1, 1, 1]} : vector<1x256x16xf32> to vector<1x16x16xf32>
    %180 = vector.shape_cast %179 : vector<1x16x16xf32> to vector<16x16xf32>
    %181 = arith.truncf %180 : vector<16x16xf32> to vector<16x16xbf16>
    %c1_83 = arith.constant 1 : index
    %c0_84 = arith.constant 0 : index
    %c0_85 = arith.constant 0 : index
    %182 = vector.load %arg8[%c1_83, %c0_84, %c0_85] : memref<16x16x32xbf16, #tpu.memory_space<vmem>>, vector<1x16x32xbf16>
    %183 = vector.shape_cast %182 : vector<1x16x32xbf16> to vector<16x32xbf16>
    %cst_86 = arith.constant dense<0.000000e+00> : vector<16x32xf32>
    %184 = tpu.matmul %181, %183, %cst_86 {dimension_numbers = #tpu.dot_dimension_numbers<[1], [0], [0], [1], [0, 0, 1, 1], [], []>} : vector<16x16xbf16>, vector<16x32xbf16>, vector<16x32xf32> -> vector<16x32xf32>
    %185 = arith.addf %178, %184 : vector<16x32xf32>
    %186 = vector.extract_strided_slice %172 {offsets = [0, 32, 0], sizes = [1, 16, 16], strides = [1, 1, 1]} : vector<1x256x16xf32> to vector<1x16x16xf32>
    %187 = vector.shape_cast %186 : vector<1x16x16xf32> to vector<16x16xf32>
    %188 = arith.truncf %187 : vector<16x16xf32> to vector<16x16xbf16>
    %c2_87 = arith.constant 2 : index
    %c0_88 = arith.constant 0 : index
    %c0_89 = arith.constant 0 : index
    %189 = vector.load %arg8[%c2_87, %c0_88, %c0_89] : memref<16x16x32xbf16, #tpu.memory_space<vmem>>, vector<1x16x32xbf16>
    %190 = vector.shape_cast %189 : vector<1x16x32xbf16> to vector<16x32xbf16>
    %cst_90 = arith.constant dense<0.000000e+00> : vector<16x32xf32>
    %191 = tpu.matmul %188, %190, %cst_90 {dimension_numbers = #tpu.dot_dimension_numbers<[1], [0], [0], [1], [0, 0, 1, 1], [], []>} : vector<16x16xbf16>, vector<16x32xbf16>, vector<16x32xf32> -> vector<16x32xf32>
    %192 = arith.addf %185, %191 : vector<16x32xf32>
    %193 = vector.extract_strided_slice %172 {offsets = [0, 48, 0], sizes = [1, 16, 16], strides = [1, 1, 1]} : vector<1x256x16xf32> to vector<1x16x16xf32>
    %194 = vector.shape_cast %193 : vector<1x16x16xf32> to vector<16x16xf32>
    %195 = arith.truncf %194 : vector<16x16xf32> to vector<16x16xbf16>
    %c3_91 = arith.constant 3 : index
    %c0_92 = arith.constant 0 : index
    %c0_93 = arith.constant 0 : index
    %196 = vector.load %arg8[%c3_91, %c0_92, %c0_93] : memref<16x16x32xbf16, #tpu.memory_space<vmem>>, vector<1x16x32xbf16>
    %197 = vector.shape_cast %196 : vector<1x16x32xbf16> to vector<16x32xbf16>
    %cst_94 = arith.constant dense<0.000000e+00> : vector<16x32xf32>
    %198 = tpu.matmul %195, %197, %cst_94 {dimension_numbers = #tpu.dot_dimension_numbers<[1], [0], [0], [1], [0, 0, 1, 1], [], []>} : vector<16x16xbf16>, vector<16x32xbf16>, vector<16x32xf32> -> vector<16x32xf32>
    %199 = arith.addf %192, %198 : vector<16x32xf32>
    %200 = vector.extract_strided_slice %172 {offsets = [0, 64, 0], sizes = [1, 16, 16], strides = [1, 1, 1]} : vector<1x256x16xf32> to vector<1x16x16xf32>
    %201 = vector.shape_cast %200 : vector<1x16x16xf32> to vector<16x16xf32>
    %202 = arith.truncf %201 : vector<16x16xf32> to vector<16x16xbf16>
    %c4_95 = arith.constant 4 : index
    %c0_96 = arith.constant 0 : index
    %c0_97 = arith.constant 0 : index
    %203 = vector.load %arg8[%c4_95, %c0_96, %c0_97] : memref<16x16x32xbf16, #tpu.memory_space<vmem>>, vector<1x16x32xbf16>
    %204 = vector.shape_cast %203 : vector<1x16x32xbf16> to vector<16x32xbf16>
    %cst_98 = arith.constant dense<0.000000e+00> : vector<16x32xf32>
    %205 = tpu.matmul %202, %204, %cst_98 {dimension_numbers = #tpu.dot_dimension_numbers<[1], [0], [0], [1], [0, 0, 1, 1], [], []>} : vector<16x16xbf16>, vector<16x32xbf16>, vector<16x32xf32> -> vector<16x32xf32>
    %206 = arith.addf %199, %205 : vector<16x32xf32>
    %207 = vector.extract_strided_slice %172 {offsets = [0, 80, 0], sizes = [1, 16, 16], strides = [1, 1, 1]} : vector<1x256x16xf32> to vector<1x16x16xf32>
    %208 = vector.shape_cast %207 : vector<1x16x16xf32> to vector<16x16xf32>
    %209 = arith.truncf %208 : vector<16x16xf32> to vector<16x16xbf16>
    %c5_99 = arith.constant 5 : index
    %c0_100 = arith.constant 0 : index
    %c0_101 = arith.constant 0 : index
    %210 = vector.load %arg8[%c5_99, %c0_100, %c0_101] : memref<16x16x32xbf16, #tpu.memory_space<vmem>>, vector<1x16x32xbf16>
    %211 = vector.shape_cast %210 : vector<1x16x32xbf16> to vector<16x32xbf16>
    %cst_102 = arith.constant dense<0.000000e+00> : vector<16x32xf32>
    %212 = tpu.matmul %209, %211, %cst_102 {dimension_numbers = #tpu.dot_dimension_numbers<[1], [0], [0], [1], [0, 0, 1, 1], [], []>} : vector<16x16xbf16>, vector<16x32xbf16>, vector<16x32xf32> -> vector<16x32xf32>
    %213 = arith.addf %206, %212 : vector<16x32xf32>
    %214 = vector.extract_strided_slice %172 {offsets = [0, 96, 0], sizes = [1, 16, 16], strides = [1, 1, 1]} : vector<1x256x16xf32> to vector<1x16x16xf32>
    %215 = vector.shape_cast %214 : vector<1x16x16xf32> to vector<16x16xf32>
    %216 = arith.truncf %215 : vector<16x16xf32> to vector<16x16xbf16>
    %c6_103 = arith.constant 6 : index
    %c0_104 = arith.constant 0 : index
    %c0_105 = arith.constant 0 : index
    %217 = vector.load %arg8[%c6_103, %c0_104, %c0_105] : memref<16x16x32xbf16, #tpu.memory_space<vmem>>, vector<1x16x32xbf16>
    %218 = vector.shape_cast %217 : vector<1x16x32xbf16> to vector<16x32xbf16>
    %cst_106 = arith.constant dense<0.000000e+00> : vector<16x32xf32>
    %219 = tpu.matmul %216, %218, %cst_106 {dimension_numbers = #tpu.dot_dimension_numbers<[1], [0], [0], [1], [0, 0, 1, 1], [], []>} : vector<16x16xbf16>, vector<16x32xbf16>, vector<16x32xf32> -> vector<16x32xf32>
    %220 = arith.addf %213, %219 : vector<16x32xf32>
    %221 = vector.extract_strided_slice %172 {offsets = [0, 112, 0], sizes = [1, 16, 16], strides = [1, 1, 1]} : vector<1x256x16xf32> to vector<1x16x16xf32>
    %222 = vector.shape_cast %221 : vector<1x16x16xf32> to vector<16x16xf32>
    %223 = arith.truncf %222 : vector<16x16xf32> to vector<16x16xbf16>
    %c7_107 = arith.constant 7 : index
    %c0_108 = arith.constant 0 : index
    %c0_109 = arith.constant 0 : index
    %224 = vector.load %arg8[%c7_107, %c0_108, %c0_109] : memref<16x16x32xbf16, #tpu.memory_space<vmem>>, vector<1x16x32xbf16>
    %225 = vector.shape_cast %224 : vector<1x16x32xbf16> to vector<16x32xbf16>
    %cst_110 = arith.constant dense<0.000000e+00> : vector<16x32xf32>
    %226 = tpu.matmul %223, %225, %cst_110 {dimension_numbers = #tpu.dot_dimension_numbers<[1], [0], [0], [1], [0, 0, 1, 1], [], []>} : vector<16x16xbf16>, vector<16x32xbf16>, vector<16x32xf32> -> vector<16x32xf32>
    %227 = arith.addf %220, %226 : vector<16x32xf32>
    %228 = vector.extract_strided_slice %172 {offsets = [0, 128, 0], sizes = [1, 16, 16], strides = [1, 1, 1]} : vector<1x256x16xf32> to vector<1x16x16xf32>
    %229 = vector.shape_cast %228 : vector<1x16x16xf32> to vector<16x16xf32>
    %230 = arith.truncf %229 : vector<16x16xf32> to vector<16x16xbf16>
    %c8_111 = arith.constant 8 : index
    %c0_112 = arith.constant 0 : index
    %c0_113 = arith.constant 0 : index
    %231 = vector.load %arg8[%c8_111, %c0_112, %c0_113] : memref<16x16x32xbf16, #tpu.memory_space<vmem>>, vector<1x16x32xbf16>
    %232 = vector.shape_cast %231 : vector<1x16x32xbf16> to vector<16x32xbf16>
    %cst_114 = arith.constant dense<0.000000e+00> : vector<16x32xf32>
    %233 = tpu.matmul %230, %232, %cst_114 {dimension_numbers = #tpu.dot_dimension_numbers<[1], [0], [0], [1], [0, 0, 1, 1], [], []>} : vector<16x16xbf16>, vector<16x32xbf16>, vector<16x32xf32> -> vector<16x32xf32>
    %234 = arith.addf %227, %233 : vector<16x32xf32>
    %235 = vector.extract_strided_slice %172 {offsets = [0, 144, 0], sizes = [1, 16, 16], strides = [1, 1, 1]} : vector<1x256x16xf32> to vector<1x16x16xf32>
    %236 = vector.shape_cast %235 : vector<1x16x16xf32> to vector<16x16xf32>
    %237 = arith.truncf %236 : vector<16x16xf32> to vector<16x16xbf16>
    %c9_115 = arith.constant 9 : index
    %c0_116 = arith.constant 0 : index
    %c0_117 = arith.constant 0 : index
    %238 = vector.load %arg8[%c9_115, %c0_116, %c0_117] : memref<16x16x32xbf16, #tpu.memory_space<vmem>>, vector<1x16x32xbf16>
    %239 = vector.shape_cast %238 : vector<1x16x32xbf16> to vector<16x32xbf16>
    %cst_118 = arith.constant dense<0.000000e+00> : vector<16x32xf32>
    %240 = tpu.matmul %237, %239, %cst_118 {dimension_numbers = #tpu.dot_dimension_numbers<[1], [0], [0], [1], [0, 0, 1, 1], [], []>} : vector<16x16xbf16>, vector<16x32xbf16>, vector<16x32xf32> -> vector<16x32xf32>
    %241 = arith.addf %234, %240 : vector<16x32xf32>
    %242 = vector.extract_strided_slice %172 {offsets = [0, 160, 0], sizes = [1, 16, 16], strides = [1, 1, 1]} : vector<1x256x16xf32> to vector<1x16x16xf32>
    %243 = vector.shape_cast %242 : vector<1x16x16xf32> to vector<16x16xf32>
    %244 = arith.truncf %243 : vector<16x16xf32> to vector<16x16xbf16>
    %c10_119 = arith.constant 10 : index
    %c0_120 = arith.constant 0 : index
    %c0_121 = arith.constant 0 : index
    %245 = vector.load %arg8[%c10_119, %c0_120, %c0_121] : memref<16x16x32xbf16, #tpu.memory_space<vmem>>, vector<1x16x32xbf16>
    %246 = vector.shape_cast %245 : vector<1x16x32xbf16> to vector<16x32xbf16>
    %cst_122 = arith.constant dense<0.000000e+00> : vector<16x32xf32>
    %247 = tpu.matmul %244, %246, %cst_122 {dimension_numbers = #tpu.dot_dimension_numbers<[1], [0], [0], [1], [0, 0, 1, 1], [], []>} : vector<16x16xbf16>, vector<16x32xbf16>, vector<16x32xf32> -> vector<16x32xf32>
    %248 = arith.addf %241, %247 : vector<16x32xf32>
    %249 = vector.extract_strided_slice %172 {offsets = [0, 176, 0], sizes = [1, 16, 16], strides = [1, 1, 1]} : vector<1x256x16xf32> to vector<1x16x16xf32>
    %250 = vector.shape_cast %249 : vector<1x16x16xf32> to vector<16x16xf32>
    %251 = arith.truncf %250 : vector<16x16xf32> to vector<16x16xbf16>
    %c11_123 = arith.constant 11 : index
    %c0_124 = arith.constant 0 : index
    %c0_125 = arith.constant 0 : index
    %252 = vector.load %arg8[%c11_123, %c0_124, %c0_125] : memref<16x16x32xbf16, #tpu.memory_space<vmem>>, vector<1x16x32xbf16>
    %253 = vector.shape_cast %252 : vector<1x16x32xbf16> to vector<16x32xbf16>
    %cst_126 = arith.constant dense<0.000000e+00> : vector<16x32xf32>
    %254 = tpu.matmul %251, %253, %cst_126 {dimension_numbers = #tpu.dot_dimension_numbers<[1], [0], [0], [1], [0, 0, 1, 1], [], []>} : vector<16x16xbf16>, vector<16x32xbf16>, vector<16x32xf32> -> vector<16x32xf32>
    %255 = arith.addf %248, %254 : vector<16x32xf32>
    %256 = vector.extract_strided_slice %172 {offsets = [0, 192, 0], sizes = [1, 16, 16], strides = [1, 1, 1]} : vector<1x256x16xf32> to vector<1x16x16xf32>
    %257 = vector.shape_cast %256 : vector<1x16x16xf32> to vector<16x16xf32>
    %258 = arith.truncf %257 : vector<16x16xf32> to vector<16x16xbf16>
    %c12_127 = arith.constant 12 : index
    %c0_128 = arith.constant 0 : index
    %c0_129 = arith.constant 0 : index
    %259 = vector.load %arg8[%c12_127, %c0_128, %c0_129] : memref<16x16x32xbf16, #tpu.memory_space<vmem>>, vector<1x16x32xbf16>
    %260 = vector.shape_cast %259 : vector<1x16x32xbf16> to vector<16x32xbf16>
    %cst_130 = arith.constant dense<0.000000e+00> : vector<16x32xf32>
    %261 = tpu.matmul %258, %260, %cst_130 {dimension_numbers = #tpu.dot_dimension_numbers<[1], [0], [0], [1], [0, 0, 1, 1], [], []>} : vector<16x16xbf16>, vector<16x32xbf16>, vector<16x32xf32> -> vector<16x32xf32>
    %262 = arith.addf %255, %261 : vector<16x32xf32>
    %263 = vector.extract_strided_slice %172 {offsets = [0, 208, 0], sizes = [1, 16, 16], strides = [1, 1, 1]} : vector<1x256x16xf32> to vector<1x16x16xf32>
    %264 = vector.shape_cast %263 : vector<1x16x16xf32> to vector<16x16xf32>
    %265 = arith.truncf %264 : vector<16x16xf32> to vector<16x16xbf16>
    %c13_131 = arith.constant 13 : index
    %c0_132 = arith.constant 0 : index
    %c0_133 = arith.constant 0 : index
    %266 = vector.load %arg8[%c13_131, %c0_132, %c0_133] : memref<16x16x32xbf16, #tpu.memory_space<vmem>>, vector<1x16x32xbf16>
    %267 = vector.shape_cast %266 : vector<1x16x32xbf16> to vector<16x32xbf16>
    %cst_134 = arith.constant dense<0.000000e+00> : vector<16x32xf32>
    %268 = tpu.matmul %265, %267, %cst_134 {dimension_numbers = #tpu.dot_dimension_numbers<[1], [0], [0], [1], [0, 0, 1, 1], [], []>} : vector<16x16xbf16>, vector<16x32xbf16>, vector<16x32xf32> -> vector<16x32xf32>
    %269 = arith.addf %262, %268 : vector<16x32xf32>
    %270 = vector.extract_strided_slice %172 {offsets = [0, 224, 0], sizes = [1, 16, 16], strides = [1, 1, 1]} : vector<1x256x16xf32> to vector<1x16x16xf32>
    %271 = vector.shape_cast %270 : vector<1x16x16xf32> to vector<16x16xf32>
    %272 = arith.truncf %271 : vector<16x16xf32> to vector<16x16xbf16>
    %c14_135 = arith.constant 14 : index
    %c0_136 = arith.constant 0 : index
    %c0_137 = arith.constant 0 : index
    %273 = vector.load %arg8[%c14_135, %c0_136, %c0_137] : memref<16x16x32xbf16, #tpu.memory_space<vmem>>, vector<1x16x32xbf16>
    %274 = vector.shape_cast %273 : vector<1x16x32xbf16> to vector<16x32xbf16>
    %cst_138 = arith.constant dense<0.000000e+00> : vector<16x32xf32>
    %275 = tpu.matmul %272, %274, %cst_138 {dimension_numbers = #tpu.dot_dimension_numbers<[1], [0], [0], [1], [0, 0, 1, 1], [], []>} : vector<16x16xbf16>, vector<16x32xbf16>, vector<16x32xf32> -> vector<16x32xf32>
    %276 = arith.addf %269, %275 : vector<16x32xf32>
    %277 = vector.extract_strided_slice %172 {offsets = [0, 240, 0], sizes = [1, 16, 16], strides = [1, 1, 1]} : vector<1x256x16xf32> to vector<1x16x16xf32>
    %278 = vector.shape_cast %277 : vector<1x16x16xf32> to vector<16x16xf32>
    %279 = arith.truncf %278 : vector<16x16xf32> to vector<16x16xbf16>
    %c15_139 = arith.constant 15 : index
    %c0_140 = arith.constant 0 : index
    %c0_141 = arith.constant 0 : index
    %280 = vector.load %arg8[%c15_139, %c0_140, %c0_141] : memref<16x16x32xbf16, #tpu.memory_space<vmem>>, vector<1x16x32xbf16>
    %281 = vector.shape_cast %280 : vector<1x16x32xbf16> to vector<16x32xbf16>
    %cst_142 = arith.constant dense<0.000000e+00> : vector<16x32xf32>
    %282 = tpu.matmul %279, %281, %cst_142 {dimension_numbers = #tpu.dot_dimension_numbers<[1], [0], [0], [1], [0, 0, 1, 1], [], []>} : vector<16x16xbf16>, vector<16x32xbf16>, vector<16x32xf32> -> vector<16x32xf32>
    %283 = arith.addf %276, %282 : vector<16x32xf32>
    %284 = vector.shape_cast %283 : vector<16x32xf32> to vector<1x16x32xf32>
    %c0_143 = arith.constant 0 : index
    %c0_144 = arith.constant 0 : index
    %285 = vector.load %arg9[%c0_143, %c0_144] : memref<1x32xf32, #tpu.memory_space<vmem>>, vector<1x32xf32>
    %286 = vector.shape_cast %285 : vector<1x32xf32> to vector<1x1x32xf32>
    %287 = tpu.iota {dimensions = array<i32: 1>} : vector<1x16x1xi32>
    %c9_i32 = arith.constant 9 : i32
    %288 = vector.broadcast %c9_i32 : i32 to vector<1x16x1xi32>
    %289 = arith.cmpi slt, %287, %288 : vector<1x16x1xi32>
    %290 = arith.extui %289 : vector<1x16x1xi1> to vector<1x16x1xi32>
    %291 = arith.sitofp %290 : vector<1x16x1xi32> to vector<1x16x1xf32>
    %292 = vector.broadcast %286 : vector<1x1x32xf32> to vector<1x16x32xf32>
    %293 = vector.broadcast %291 : vector<1x16x1xf32> to vector<1x16x32xf32>
    %294 = arith.mulf %292, %293 : vector<1x16x32xf32>
    %295 = arith.addf %284, %294 : vector<1x16x32xf32>
    %cst_145 = arith.constant dense<0.000000e+00> : vector<1x32xf32>
    %296 = vector.multi_reduction <add>, %295, %cst_145 [1] : vector<1x16x32xf32> to vector<1x32xf32>
    %297 = vector.shape_cast %296 : vector<1x32xf32> to vector<1x1x32xf32>
    %cst_146 = arith.constant 0.111111112 : f32
    %298 = vector.broadcast %cst_146 : f32 to vector<1x1x32xf32>
    %299 = arith.mulf %297, %298 : vector<1x1x32xf32>
    %300 = vector.broadcast %299 : vector<1x1x32xf32> to vector<1x16x32xf32>
    %301 = arith.subf %295, %300 : vector<1x16x32xf32>
    %302 = vector.broadcast %291 : vector<1x16x1xf32> to vector<1x16x32xf32>
    %303 = arith.mulf %301, %302 : vector<1x16x32xf32>
    %304 = arith.mulf %303, %303 : vector<1x16x32xf32>
    %cst_147 = arith.constant dense<0.000000e+00> : vector<1x32xf32>
    %305 = vector.multi_reduction <add>, %304, %cst_147 [1] : vector<1x16x32xf32> to vector<1x32xf32>
    %306 = vector.shape_cast %305 : vector<1x32xf32> to vector<1x1x32xf32>
    %cst_148 = arith.constant 0.111111112 : f32
    %307 = vector.broadcast %cst_148 : f32 to vector<1x1x32xf32>
    %308 = arith.mulf %306, %307 : vector<1x1x32xf32>
    %cst_149 = arith.constant 9.99999974E-6 : f32
    %309 = vector.broadcast %cst_149 : f32 to vector<1x1x32xf32>
    %310 = arith.addf %308, %309 : vector<1x1x32xf32>
    %311 = math.rsqrt %310 : vector<1x1x32xf32>
    %312 = vector.broadcast %311 : vector<1x1x32xf32> to vector<1x16x32xf32>
    %313 = arith.mulf %303, %312 : vector<1x16x32xf32>
    %cst_150 = arith.constant 0.000000e+00 : f32
    %314 = vector.broadcast %cst_150 : f32 to vector<1x16x32xf32>
    %315 = arith.cmpf ogt, %313, %314 : vector<1x16x32xf32>
    %cst_151 = arith.constant 2.000000e-01 : f32
    %316 = vector.broadcast %cst_151 : f32 to vector<1x16x32xf32>
    %317 = arith.mulf %316, %313 : vector<1x16x32xf32>
    %318 = arith.select %315, %313, %317 : vector<1x16x32xi1>, vector<1x16x32xf32>
    %c0_152 = arith.constant 0 : index
    %c0_153 = arith.constant 0 : index
    %c0_154 = arith.constant 0 : index
    %319 = vector.load %arg10[%c0_152, %c0_153, %c0_154] : memref<1x128x16xbf16, #tpu.memory_space<vmem>>, vector<1x128x16xbf16>
    %320 = arith.truncf %318 : vector<1x16x32xf32> to vector<1x16x32xbf16>
    "tpu.trace_start"() <{level = 10 : i32, message = "btp,bpc->btc"}> : () -> ()
    %cst_155 = arith.constant dense<0.000000e+00> : vector<1x128x32xf32>
    %321 = tpu.matmul %319, %320, %cst_155 {dimension_numbers = #tpu.dot_dimension_numbers<[2], [1], [1], [2], [0, 0, 0, 1, 1, 2], [0], [0]>} : vector<1x128x16xbf16>, vector<1x16x32xbf16>, vector<1x128x32xf32> -> vector<1x128x32xf32>
    "tpu.trace_stop"() : () -> ()
    %322 = vector.extract_strided_slice %321 {offsets = [0, 0, 0], sizes = [1, 8, 32], strides = [1, 1, 1]} : vector<1x128x32xf32> to vector<1x8x32xf32>
    %323 = vector.shape_cast %322 : vector<1x8x32xf32> to vector<8x32xf32>
    %324 = arith.truncf %323 : vector<8x32xf32> to vector<8x32xbf16>
    %c0_156 = arith.constant 0 : index
    %c0_157 = arith.constant 0 : index
    %c0_158 = arith.constant 0 : index
    %325 = vector.load %arg11[%c0_156, %c0_157, %c0_158] : memref<16x32x128xbf16, #tpu.memory_space<vmem>>, vector<1x32x128xbf16>
    %326 = vector.shape_cast %325 : vector<1x32x128xbf16> to vector<32x128xbf16>
    %cst_159 = arith.constant dense<0.000000e+00> : vector<8x128xf32>
    %327 = tpu.matmul %324, %326, %cst_159 {dimension_numbers = #tpu.dot_dimension_numbers<[1], [0], [0], [1], [0, 0, 1, 1], [], []>} : vector<8x32xbf16>, vector<32x128xbf16>, vector<8x128xf32> -> vector<8x128xf32>
    %328 = vector.extract_strided_slice %321 {offsets = [0, 8, 0], sizes = [1, 8, 32], strides = [1, 1, 1]} : vector<1x128x32xf32> to vector<1x8x32xf32>
    %329 = vector.shape_cast %328 : vector<1x8x32xf32> to vector<8x32xf32>
    %330 = arith.truncf %329 : vector<8x32xf32> to vector<8x32xbf16>
    %c1_160 = arith.constant 1 : index
    %c0_161 = arith.constant 0 : index
    %c0_162 = arith.constant 0 : index
    %331 = vector.load %arg11[%c1_160, %c0_161, %c0_162] : memref<16x32x128xbf16, #tpu.memory_space<vmem>>, vector<1x32x128xbf16>
    %332 = vector.shape_cast %331 : vector<1x32x128xbf16> to vector<32x128xbf16>
    %cst_163 = arith.constant dense<0.000000e+00> : vector<8x128xf32>
    %333 = tpu.matmul %330, %332, %cst_163 {dimension_numbers = #tpu.dot_dimension_numbers<[1], [0], [0], [1], [0, 0, 1, 1], [], []>} : vector<8x32xbf16>, vector<32x128xbf16>, vector<8x128xf32> -> vector<8x128xf32>
    %334 = arith.addf %327, %333 : vector<8x128xf32>
    %335 = vector.extract_strided_slice %321 {offsets = [0, 16, 0], sizes = [1, 8, 32], strides = [1, 1, 1]} : vector<1x128x32xf32> to vector<1x8x32xf32>
    %336 = vector.shape_cast %335 : vector<1x8x32xf32> to vector<8x32xf32>
    %337 = arith.truncf %336 : vector<8x32xf32> to vector<8x32xbf16>
    %c2_164 = arith.constant 2 : index
    %c0_165 = arith.constant 0 : index
    %c0_166 = arith.constant 0 : index
    %338 = vector.load %arg11[%c2_164, %c0_165, %c0_166] : memref<16x32x128xbf16, #tpu.memory_space<vmem>>, vector<1x32x128xbf16>
    %339 = vector.shape_cast %338 : vector<1x32x128xbf16> to vector<32x128xbf16>
    %cst_167 = arith.constant dense<0.000000e+00> : vector<8x128xf32>
    %340 = tpu.matmul %337, %339, %cst_167 {dimension_numbers = #tpu.dot_dimension_numbers<[1], [0], [0], [1], [0, 0, 1, 1], [], []>} : vector<8x32xbf16>, vector<32x128xbf16>, vector<8x128xf32> -> vector<8x128xf32>
    %341 = arith.addf %334, %340 : vector<8x128xf32>
    %342 = vector.extract_strided_slice %321 {offsets = [0, 24, 0], sizes = [1, 8, 32], strides = [1, 1, 1]} : vector<1x128x32xf32> to vector<1x8x32xf32>
    %343 = vector.shape_cast %342 : vector<1x8x32xf32> to vector<8x32xf32>
    %344 = arith.truncf %343 : vector<8x32xf32> to vector<8x32xbf16>
    %c3_168 = arith.constant 3 : index
    %c0_169 = arith.constant 0 : index
    %c0_170 = arith.constant 0 : index
    %345 = vector.load %arg11[%c3_168, %c0_169, %c0_170] : memref<16x32x128xbf16, #tpu.memory_space<vmem>>, vector<1x32x128xbf16>
    %346 = vector.shape_cast %345 : vector<1x32x128xbf16> to vector<32x128xbf16>
    %cst_171 = arith.constant dense<0.000000e+00> : vector<8x128xf32>
    %347 = tpu.matmul %344, %346, %cst_171 {dimension_numbers = #tpu.dot_dimension_numbers<[1], [0], [0], [1], [0, 0, 1, 1], [], []>} : vector<8x32xbf16>, vector<32x128xbf16>, vector<8x128xf32> -> vector<8x128xf32>
    %348 = arith.addf %341, %347 : vector<8x128xf32>
    %349 = vector.extract_strided_slice %321 {offsets = [0, 32, 0], sizes = [1, 8, 32], strides = [1, 1, 1]} : vector<1x128x32xf32> to vector<1x8x32xf32>
    %350 = vector.shape_cast %349 : vector<1x8x32xf32> to vector<8x32xf32>
    %351 = arith.truncf %350 : vector<8x32xf32> to vector<8x32xbf16>
    %c4_172 = arith.constant 4 : index
    %c0_173 = arith.constant 0 : index
    %c0_174 = arith.constant 0 : index
    %352 = vector.load %arg11[%c4_172, %c0_173, %c0_174] : memref<16x32x128xbf16, #tpu.memory_space<vmem>>, vector<1x32x128xbf16>
    %353 = vector.shape_cast %352 : vector<1x32x128xbf16> to vector<32x128xbf16>
    %cst_175 = arith.constant dense<0.000000e+00> : vector<8x128xf32>
    %354 = tpu.matmul %351, %353, %cst_175 {dimension_numbers = #tpu.dot_dimension_numbers<[1], [0], [0], [1], [0, 0, 1, 1], [], []>} : vector<8x32xbf16>, vector<32x128xbf16>, vector<8x128xf32> -> vector<8x128xf32>
    %355 = arith.addf %348, %354 : vector<8x128xf32>
    %356 = vector.extract_strided_slice %321 {offsets = [0, 40, 0], sizes = [1, 8, 32], strides = [1, 1, 1]} : vector<1x128x32xf32> to vector<1x8x32xf32>
    %357 = vector.shape_cast %356 : vector<1x8x32xf32> to vector<8x32xf32>
    %358 = arith.truncf %357 : vector<8x32xf32> to vector<8x32xbf16>
    %c5_176 = arith.constant 5 : index
    %c0_177 = arith.constant 0 : index
    %c0_178 = arith.constant 0 : index
    %359 = vector.load %arg11[%c5_176, %c0_177, %c0_178] : memref<16x32x128xbf16, #tpu.memory_space<vmem>>, vector<1x32x128xbf16>
    %360 = vector.shape_cast %359 : vector<1x32x128xbf16> to vector<32x128xbf16>
    %cst_179 = arith.constant dense<0.000000e+00> : vector<8x128xf32>
    %361 = tpu.matmul %358, %360, %cst_179 {dimension_numbers = #tpu.dot_dimension_numbers<[1], [0], [0], [1], [0, 0, 1, 1], [], []>} : vector<8x32xbf16>, vector<32x128xbf16>, vector<8x128xf32> -> vector<8x128xf32>
    %362 = arith.addf %355, %361 : vector<8x128xf32>
    %363 = vector.extract_strided_slice %321 {offsets = [0, 48, 0], sizes = [1, 8, 32], strides = [1, 1, 1]} : vector<1x128x32xf32> to vector<1x8x32xf32>
    %364 = vector.shape_cast %363 : vector<1x8x32xf32> to vector<8x32xf32>
    %365 = arith.truncf %364 : vector<8x32xf32> to vector<8x32xbf16>
    %c6_180 = arith.constant 6 : index
    %c0_181 = arith.constant 0 : index
    %c0_182 = arith.constant 0 : index
    %366 = vector.load %arg11[%c6_180, %c0_181, %c0_182] : memref<16x32x128xbf16, #tpu.memory_space<vmem>>, vector<1x32x128xbf16>
    %367 = vector.shape_cast %366 : vector<1x32x128xbf16> to vector<32x128xbf16>
    %cst_183 = arith.constant dense<0.000000e+00> : vector<8x128xf32>
    %368 = tpu.matmul %365, %367, %cst_183 {dimension_numbers = #tpu.dot_dimension_numbers<[1], [0], [0], [1], [0, 0, 1, 1], [], []>} : vector<8x32xbf16>, vector<32x128xbf16>, vector<8x128xf32> -> vector<8x128xf32>
    %369 = arith.addf %362, %368 : vector<8x128xf32>
    %370 = vector.extract_strided_slice %321 {offsets = [0, 56, 0], sizes = [1, 8, 32], strides = [1, 1, 1]} : vector<1x128x32xf32> to vector<1x8x32xf32>
    %371 = vector.shape_cast %370 : vector<1x8x32xf32> to vector<8x32xf32>
    %372 = arith.truncf %371 : vector<8x32xf32> to vector<8x32xbf16>
    %c7_184 = arith.constant 7 : index
    %c0_185 = arith.constant 0 : index
    %c0_186 = arith.constant 0 : index
    %373 = vector.load %arg11[%c7_184, %c0_185, %c0_186] : memref<16x32x128xbf16, #tpu.memory_space<vmem>>, vector<1x32x128xbf16>
    %374 = vector.shape_cast %373 : vector<1x32x128xbf16> to vector<32x128xbf16>
    %cst_187 = arith.constant dense<0.000000e+00> : vector<8x128xf32>
    %375 = tpu.matmul %372, %374, %cst_187 {dimension_numbers = #tpu.dot_dimension_numbers<[1], [0], [0], [1], [0, 0, 1, 1], [], []>} : vector<8x32xbf16>, vector<32x128xbf16>, vector<8x128xf32> -> vector<8x128xf32>
    %376 = arith.addf %369, %375 : vector<8x128xf32>
    %377 = vector.extract_strided_slice %321 {offsets = [0, 64, 0], sizes = [1, 8, 32], strides = [1, 1, 1]} : vector<1x128x32xf32> to vector<1x8x32xf32>
    %378 = vector.shape_cast %377 : vector<1x8x32xf32> to vector<8x32xf32>
    %379 = arith.truncf %378 : vector<8x32xf32> to vector<8x32xbf16>
    %c8_188 = arith.constant 8 : index
    %c0_189 = arith.constant 0 : index
    %c0_190 = arith.constant 0 : index
    %380 = vector.load %arg11[%c8_188, %c0_189, %c0_190] : memref<16x32x128xbf16, #tpu.memory_space<vmem>>, vector<1x32x128xbf16>
    %381 = vector.shape_cast %380 : vector<1x32x128xbf16> to vector<32x128xbf16>
    %cst_191 = arith.constant dense<0.000000e+00> : vector<8x128xf32>
    %382 = tpu.matmul %379, %381, %cst_191 {dimension_numbers = #tpu.dot_dimension_numbers<[1], [0], [0], [1], [0, 0, 1, 1], [], []>} : vector<8x32xbf16>, vector<32x128xbf16>, vector<8x128xf32> -> vector<8x128xf32>
    %383 = arith.addf %376, %382 : vector<8x128xf32>
    %384 = vector.extract_strided_slice %321 {offsets = [0, 72, 0], sizes = [1, 8, 32], strides = [1, 1, 1]} : vector<1x128x32xf32> to vector<1x8x32xf32>
    %385 = vector.shape_cast %384 : vector<1x8x32xf32> to vector<8x32xf32>
    %386 = arith.truncf %385 : vector<8x32xf32> to vector<8x32xbf16>
    %c9_192 = arith.constant 9 : index
    %c0_193 = arith.constant 0 : index
    %c0_194 = arith.constant 0 : index
    %387 = vector.load %arg11[%c9_192, %c0_193, %c0_194] : memref<16x32x128xbf16, #tpu.memory_space<vmem>>, vector<1x32x128xbf16>
    %388 = vector.shape_cast %387 : vector<1x32x128xbf16> to vector<32x128xbf16>
    %cst_195 = arith.constant dense<0.000000e+00> : vector<8x128xf32>
    %389 = tpu.matmul %386, %388, %cst_195 {dimension_numbers = #tpu.dot_dimension_numbers<[1], [0], [0], [1], [0, 0, 1, 1], [], []>} : vector<8x32xbf16>, vector<32x128xbf16>, vector<8x128xf32> -> vector<8x128xf32>
    %390 = arith.addf %383, %389 : vector<8x128xf32>
    %391 = vector.extract_strided_slice %321 {offsets = [0, 80, 0], sizes = [1, 8, 32], strides = [1, 1, 1]} : vector<1x128x32xf32> to vector<1x8x32xf32>
    %392 = vector.shape_cast %391 : vector<1x8x32xf32> to vector<8x32xf32>
    %393 = arith.truncf %392 : vector<8x32xf32> to vector<8x32xbf16>
    %c10_196 = arith.constant 10 : index
    %c0_197 = arith.constant 0 : index
    %c0_198 = arith.constant 0 : index
    %394 = vector.load %arg11[%c10_196, %c0_197, %c0_198] : memref<16x32x128xbf16, #tpu.memory_space<vmem>>, vector<1x32x128xbf16>
    %395 = vector.shape_cast %394 : vector<1x32x128xbf16> to vector<32x128xbf16>
    %cst_199 = arith.constant dense<0.000000e+00> : vector<8x128xf32>
    %396 = tpu.matmul %393, %395, %cst_199 {dimension_numbers = #tpu.dot_dimension_numbers<[1], [0], [0], [1], [0, 0, 1, 1], [], []>} : vector<8x32xbf16>, vector<32x128xbf16>, vector<8x128xf32> -> vector<8x128xf32>
    %397 = arith.addf %390, %396 : vector<8x128xf32>
    %398 = vector.extract_strided_slice %321 {offsets = [0, 88, 0], sizes = [1, 8, 32], strides = [1, 1, 1]} : vector<1x128x32xf32> to vector<1x8x32xf32>
    %399 = vector.shape_cast %398 : vector<1x8x32xf32> to vector<8x32xf32>
    %400 = arith.truncf %399 : vector<8x32xf32> to vector<8x32xbf16>
    %c11_200 = arith.constant 11 : index
    %c0_201 = arith.constant 0 : index
    %c0_202 = arith.constant 0 : index
    %401 = vector.load %arg11[%c11_200, %c0_201, %c0_202] : memref<16x32x128xbf16, #tpu.memory_space<vmem>>, vector<1x32x128xbf16>
    %402 = vector.shape_cast %401 : vector<1x32x128xbf16> to vector<32x128xbf16>
    %cst_203 = arith.constant dense<0.000000e+00> : vector<8x128xf32>
    %403 = tpu.matmul %400, %402, %cst_203 {dimension_numbers = #tpu.dot_dimension_numbers<[1], [0], [0], [1], [0, 0, 1, 1], [], []>} : vector<8x32xbf16>, vector<32x128xbf16>, vector<8x128xf32> -> vector<8x128xf32>
    %404 = arith.addf %397, %403 : vector<8x128xf32>
    %405 = vector.extract_strided_slice %321 {offsets = [0, 96, 0], sizes = [1, 8, 32], strides = [1, 1, 1]} : vector<1x128x32xf32> to vector<1x8x32xf32>
    %406 = vector.shape_cast %405 : vector<1x8x32xf32> to vector<8x32xf32>
    %407 = arith.truncf %406 : vector<8x32xf32> to vector<8x32xbf16>
    %c12_204 = arith.constant 12 : index
    %c0_205 = arith.constant 0 : index
    %c0_206 = arith.constant 0 : index
    %408 = vector.load %arg11[%c12_204, %c0_205, %c0_206] : memref<16x32x128xbf16, #tpu.memory_space<vmem>>, vector<1x32x128xbf16>
    %409 = vector.shape_cast %408 : vector<1x32x128xbf16> to vector<32x128xbf16>
    %cst_207 = arith.constant dense<0.000000e+00> : vector<8x128xf32>
    %410 = tpu.matmul %407, %409, %cst_207 {dimension_numbers = #tpu.dot_dimension_numbers<[1], [0], [0], [1], [0, 0, 1, 1], [], []>} : vector<8x32xbf16>, vector<32x128xbf16>, vector<8x128xf32> -> vector<8x128xf32>
    %411 = arith.addf %404, %410 : vector<8x128xf32>
    %412 = vector.extract_strided_slice %321 {offsets = [0, 104, 0], sizes = [1, 8, 32], strides = [1, 1, 1]} : vector<1x128x32xf32> to vector<1x8x32xf32>
    %413 = vector.shape_cast %412 : vector<1x8x32xf32> to vector<8x32xf32>
    %414 = arith.truncf %413 : vector<8x32xf32> to vector<8x32xbf16>
    %c13_208 = arith.constant 13 : index
    %c0_209 = arith.constant 0 : index
    %c0_210 = arith.constant 0 : index
    %415 = vector.load %arg11[%c13_208, %c0_209, %c0_210] : memref<16x32x128xbf16, #tpu.memory_space<vmem>>, vector<1x32x128xbf16>
    %416 = vector.shape_cast %415 : vector<1x32x128xbf16> to vector<32x128xbf16>
    %cst_211 = arith.constant dense<0.000000e+00> : vector<8x128xf32>
    %417 = tpu.matmul %414, %416, %cst_211 {dimension_numbers = #tpu.dot_dimension_numbers<[1], [0], [0], [1], [0, 0, 1, 1], [], []>} : vector<8x32xbf16>, vector<32x128xbf16>, vector<8x128xf32> -> vector<8x128xf32>
    %418 = arith.addf %411, %417 : vector<8x128xf32>
    %419 = vector.extract_strided_slice %321 {offsets = [0, 112, 0], sizes = [1, 8, 32], strides = [1, 1, 1]} : vector<1x128x32xf32> to vector<1x8x32xf32>
    %420 = vector.shape_cast %419 : vector<1x8x32xf32> to vector<8x32xf32>
    %421 = arith.truncf %420 : vector<8x32xf32> to vector<8x32xbf16>
    %c14_212 = arith.constant 14 : index
    %c0_213 = arith.constant 0 : index
    %c0_214 = arith.constant 0 : index
    %422 = vector.load %arg11[%c14_212, %c0_213, %c0_214] : memref<16x32x128xbf16, #tpu.memory_space<vmem>>, vector<1x32x128xbf16>
    %423 = vector.shape_cast %422 : vector<1x32x128xbf16> to vector<32x128xbf16>
    %cst_215 = arith.constant dense<0.000000e+00> : vector<8x128xf32>
    %424 = tpu.matmul %421, %423, %cst_215 {dimension_numbers = #tpu.dot_dimension_numbers<[1], [0], [0], [1], [0, 0, 1, 1], [], []>} : vector<8x32xbf16>, vector<32x128xbf16>, vector<8x128xf32> -> vector<8x128xf32>
    %425 = arith.addf %418, %424 : vector<8x128xf32>
    %426 = vector.extract_strided_slice %321 {offsets = [0, 120, 0], sizes = [1, 8, 32], strides = [1, 1, 1]} : vector<1x128x32xf32> to vector<1x8x32xf32>
    %427 = vector.shape_cast %426 : vector<1x8x32xf32> to vector<8x32xf32>
    %428 = arith.truncf %427 : vector<8x32xf32> to vector<8x32xbf16>
    %c15_216 = arith.constant 15 : index
    %c0_217 = arith.constant 0 : index
    %c0_218 = arith.constant 0 : index
    %429 = vector.load %arg11[%c15_216, %c0_217, %c0_218] : memref<16x32x128xbf16, #tpu.memory_space<vmem>>, vector<1x32x128xbf16>
    %430 = vector.shape_cast %429 : vector<1x32x128xbf16> to vector<32x128xbf16>
    %cst_219 = arith.constant dense<0.000000e+00> : vector<8x128xf32>
    %431 = tpu.matmul %428, %430, %cst_219 {dimension_numbers = #tpu.dot_dimension_numbers<[1], [0], [0], [1], [0, 0, 1, 1], [], []>} : vector<8x32xbf16>, vector<32x128xbf16>, vector<8x128xf32> -> vector<8x128xf32>
    %432 = arith.addf %425, %431 : vector<8x128xf32>
    %433 = vector.shape_cast %432 : vector<8x128xf32> to vector<1x8x128xf32>
    %c0_220 = arith.constant 0 : index
    %c0_221 = arith.constant 0 : index
    %434 = vector.load %arg12[%c0_220, %c0_221] : memref<1x128xf32, #tpu.memory_space<vmem>>, vector<1x128xf32>
    %435 = vector.shape_cast %434 : vector<1x128xf32> to vector<1x1x128xf32>
    %436 = tpu.iota {dimensions = array<i32: 1>} : vector<1x8x1xi32>
    %c4_i32 = arith.constant 4 : i32
    %437 = vector.broadcast %c4_i32 : i32 to vector<1x8x1xi32>
    %438 = arith.cmpi slt, %436, %437 : vector<1x8x1xi32>
    %439 = arith.extui %438 : vector<1x8x1xi1> to vector<1x8x1xi32>
    %440 = arith.sitofp %439 : vector<1x8x1xi32> to vector<1x8x1xf32>
    %441 = vector.broadcast %435 : vector<1x1x128xf32> to vector<1x8x128xf32>
    %442 = vector.broadcast %440 : vector<1x8x1xf32> to vector<1x8x128xf32>
    %443 = arith.mulf %441, %442 : vector<1x8x128xf32>
    %444 = arith.addf %433, %443 : vector<1x8x128xf32>
    %cst_222 = arith.constant dense<0.000000e+00> : vector<1x128xf32>
    %445 = vector.multi_reduction <add>, %444, %cst_222 [1] : vector<1x8x128xf32> to vector<1x128xf32>
    %446 = vector.shape_cast %445 : vector<1x128xf32> to vector<1x1x128xf32>
    %cst_223 = arith.constant 2.500000e-01 : f32
    %447 = vector.broadcast %cst_223 : f32 to vector<1x1x128xf32>
    %448 = arith.mulf %446, %447 : vector<1x1x128xf32>
    %c0_224 = arith.constant 0 : index
    %c0_225 = arith.constant 0 : index
    %c0_226 = arith.constant 0 : index
    %449 = vector.load %arg13[%c0_224, %c0_225, %c0_226] : memref<1x1x128xf32, #tpu.memory_space<vmem>>, vector<1x1x128xf32>
    tpu.vector_store %arg13[%c0_224, %c0_225, %c0_226], %448 {strides = array<i32>} : memref<1x1x128xf32, #tpu.memory_space<vmem>>, vector<1x1x128xf32>,
    return
  }
  func.func @transform_0(%arg0: i32) -> (i32, i32, i32) {
    %c0_i32 = arith.constant 0 : i32
    %c0_i32_0 = arith.constant 0 : i32
    %c0_i32_1 = arith.constant 0 : i32
    return %arg0, %c0_i32, %c0_i32_0 : i32, i32, i32
  }
  func.func @transform_1(%arg0: i32) -> (i32, i32) {
    %c0_i32 = arith.constant 0 : i32
    %c0_i32_0 = arith.constant 0 : i32
    %c0_i32_1 = arith.constant 0 : i32
    return %c0_i32, %c0_i32_0 : i32, i32
  }
  func.func @transform_2(%arg0: i32) -> (i32, i32) {
    %c0_i32 = arith.constant 0 : i32
    %c0_i32_0 = arith.constant 0 : i32
    %c0_i32_1 = arith.constant 0 : i32
    return %c0_i32, %c0_i32_0 : i32, i32
  }
  func.func @transform_3(%arg0: i32) -> (i32, i32, i32) {
    %c0_i32 = arith.constant 0 : i32
    %c0_i32_0 = arith.constant 0 : i32
    %c0_i32_1 = arith.constant 0 : i32
    %c0_i32_2 = arith.constant 0 : i32
    return %c0_i32, %c0_i32_0, %c0_i32_1 : i32, i32, i32
  }
  func.func @transform_4(%arg0: i32) -> (i32, i32, i32) {
    %c0_i32 = arith.constant 0 : i32
    %c0_i32_0 = arith.constant 0 : i32
    %c0_i32_1 = arith.constant 0 : i32
    %c0_i32_2 = arith.constant 0 : i32
    return %c0_i32, %c0_i32_0, %c0_i32_1 : i32, i32, i32
  }
  func.func @transform_5(%arg0: i32) -> (i32, i32) {
    %c0_i32 = arith.constant 0 : i32
    %c0_i32_0 = arith.constant 0 : i32
    %c0_i32_1 = arith.constant 0 : i32
    return %c0_i32, %c0_i32_0 : i32, i32
  }
  func.func @transform_6(%arg0: i32) -> (i32, i32, i32) {
    %c0_i32 = arith.constant 0 : i32
    %c0_i32_0 = arith.constant 0 : i32
    %c0_i32_1 = arith.constant 0 : i32
    %c0_i32_2 = arith.constant 0 : i32
    return %c0_i32, %c0_i32_0, %c0_i32_1 : i32, i32, i32
  }
  func.func @transform_7(%arg0: i32) -> (i32, i32, i32) {
    %c0_i32 = arith.constant 0 : i32
    %c0_i32_0 = arith.constant 0 : i32
    %c0_i32_1 = arith.constant 0 : i32
    %c0_i32_2 = arith.constant 0 : i32
    return %c0_i32, %c0_i32_0, %c0_i32_1 : i32, i32, i32
  }
  func.func @transform_8(%arg0: i32) -> (i32, i32) {
    %c0_i32 = arith.constant 0 : i32
    %c0_i32_0 = arith.constant 0 : i32
    %c0_i32_1 = arith.constant 0 : i32
    return %c0_i32, %c0_i32_0 : i32, i32
  }
  func.func @transform_9(%arg0: i32) -> (i32, i32, i32) {
    %c0_i32 = arith.constant 0 : i32
    %c0_i32_0 = arith.constant 0 : i32
    %c0_i32_1 = arith.constant 0 : i32
    %c0_i32_2 = arith.constant 0 : i32
    return %c0_i32, %c0_i32_0, %c0_i32_1 : i32, i32, i32
  }
  func.func @transform_10(%arg0: i32) -> (i32, i32, i32) {
    %c0_i32 = arith.constant 0 : i32
    %c0_i32_0 = arith.constant 0 : i32
    %c0_i32_1 = arith.constant 0 : i32
    %c0_i32_2 = arith.constant 0 : i32
    return %c0_i32, %c0_i32_0, %c0_i32_1 : i32, i32, i32
  }
  func.func @transform_11(%arg0: i32) -> (i32, i32) {
    %c0_i32 = arith.constant 0 : i32
    %c0_i32_0 = arith.constant 0 : i32
    %c0_i32_1 = arith.constant 0 : i32
    return %c0_i32, %c0_i32_0 : i32, i32
  }
  func.func @transform_12(%arg0: i32) -> (i32, i32, i32) {
    %c0_i32 = arith.constant 0 : i32
    %c0_i32_0 = arith.constant 0 : i32
    %c0_i32_1 = arith.constant 0 : i32
    return %arg0, %c0_i32, %c0_i32_0 : i32, i32, i32
  }
}

</mosaic_0001>

<llo_original>
// kernel: discriminator_forward.1
$region0: #{discriminator_forward.1}
  #allocation0 [shape = 'u32[]', space=smem, size = 0x4, offset = 0x4, fixed_abs, tag = 'smem constant byte address 0x4 - core index']
  #allocation1 [shape = 'u32[144,128]{1,0:T(1,128)}', space=vmem, size = 0x12000, scoped, tag = 'internal scratch']
  %s0 = inlined_call_operand.vmem [shape: bf16[2,64,64], index: 0, kind: input, shape index: {}]
  %s1 = inlined_call_operand.vmem [shape: bf16[64,8], index: 1, kind: input, shape index: {}]
  %s2 = inlined_call_operand.vmem [shape: f32[1,8], index: 2, kind: input, shape index: {}]
  %s3 = inlined_call_operand.vmem [shape: bf16[1,256,64], index: 3, kind: input, shape index: {}]
  %s4 = inlined_call_operand.vmem [shape: bf16[16,8,16], index: 4, kind: input, shape index: {}]
  %s5 = inlined_call_operand.vmem [shape: f32[1,16], index: 5, kind: input, shape index: {}]
  %s6 = inlined_call_operand.vmem [shape: bf16[1,256,16], index: 6, kind: input, shape index: {}]
  %s7 = inlined_call_operand.vmem [shape: bf16[16,16,32], index: 7, kind: input, shape index: {}]
  %s8 = inlined_call_operand.vmem [shape: f32[1,32], index: 8, kind: input, shape index: {}]
  %s9 = inlined_call_operand.vmem [shape: bf16[1,128,16], index: 9, kind: input, shape index: {}]
  %s10 = inlined_call_operand.vmem [shape: bf16[16,32,128], index: 10, kind: input, shape index: {}]
  %s11 = inlined_call_operand.vmem [shape: f32[1,128], index: 11, kind: input, shape index: {}]
  %s12 = inlined_call_operand.hbm [shape: f32[2,1,128], index: 12, kind: output, shape index: {}]
  %s13 = sld [smem:[#allocation0]]
  $region81: #{discriminator_forward.1} parent=0
    _
  %s15 = ssub.s32 1, %s13
  %s16 = scalar_select 0, %s15, %s13
  $region1: #{discriminator_forward.1} parent=0
    #allocation2 [shape = 'u8[1024]{0}', space=vmem, size = 0x400, scoped, tag = 'output window, operand 0']
    #allocation3 [shape = 's32[2]{0}', space=sflag, size = 0x8, scoped, tag = 'scoped memory for discriminator_forward.1']
    %17 = vsyncpa [#allocation3], 0
    %s18 = scalar_lea.sflag [#allocation3], 1
    %19 = vsyncpa %s18, 0
    loop: start=0, step=1, limit=4
    $region2: #{discriminator_forward.1} parent=1 // loop_pre_header
      _
    $region3: #{discriminator_forward.1} parent=1 // loop_header
      %s21 = sphi 0, %s25
      %p22 = scmp.ge.s32.totalorder %s21, 4
      %s31 = sphi 0, %s33
      %s34 = sphi 0, %s31
      %s35 = sphi 0, %s34
      %s51 = sphi 0, %s35
      %s55 = sphi 0, %s55
      %s57 = sphi 0, %s55
      %s58 = sphi 0, %s57
      %s72 = sphi 0, %s58
      %s76 = sphi 0, %s76
      %s78 = sphi 0, %s76
      %s79 = sphi 0, %s78
      %s93 = sphi 0, %s79
      %s97 = sphi 0, %s97
      %s99 = sphi 0, %s97
      %s100 = sphi 0, %s99
      %s114 = sphi 0, %s100
      %s118 = sphi 0, %s118
      %s120 = sphi 0, %s118
      %s121 = sphi 0, %s120
      %s135 = sphi 0, %s121
      %s139 = sphi 0, %s139
      %s141 = sphi 0, %s139
      %s142 = sphi 0, %s141
      %s156 = sphi 0, %s142
      %s160 = sphi 0, %s160
      %s162 = sphi 0, %s160
      %s163 = sphi 0, %s162
      %s177 = sphi 0, %s163
      %s181 = sphi 0, %s181
      %s183 = sphi 0, %s181
      %s184 = sphi 0, %s183
      %s198 = sphi 0, %s184
      %s202 = sphi 0, %s202
      %s204 = sphi 0, %s202
      %s205 = sphi 0, %s204
      %s219 = sphi 0, %s205
      %s223 = sphi 0, %s223
      %s225 = sphi 0, %s223
      %s226 = sphi 0, %s225
      %s240 = sphi 0, %s226
      %s244 = sphi 0, %s244
      %s246 = sphi 0, %s244
      %s247 = sphi 0, %s246
      %s261 = sphi 0, %s247
      %s265 = sphi 0, %s265
      %s267 = sphi 0, %s265
      %s268 = sphi 0, %s267
      %s282 = sphi 0, %s268
      %s288 = sphi 0, %s290
      %s291 = sphi 0, %s288
      %s292 = sphi 0, %s291
      %s308 = sphi 0, %s292
    $region4: #{discriminator_forward.1} parent=1 // loop_header_branch
      %24 = sbr.rel (%p22) target = $region8
    $region5: #{discriminator_forward.1} parent=1 // loop_body
      %s26 = ssub.s32 %s21, 1
      %s27 = ssub.s32 %s21, 2
      %s28 = sadd.s32 %s21, 1
      %s29 = ssub.s32 %s21, %s28
      %p30 = scmp.eq.s32.totalorder %s29, 0
      %s32 = sadd.s32 %s31, 1
      %s33 = scalar_select %p30, %s31, %s32
      %p36 = pneg %p30
      %p37 = scmp.eq.s32.totalorder %s21, 1
      %p38 = por %p36, %p37
      %p39 = scmp.ne.s32.totalorder %s31, %s34
      %p40 = scmp.eq.s32.totalorder %s21, 0
      %p41 = por %p39, %p40
      %p42 = scmp.ne.s32.totalorder %s31, %s34
      %p43 = scmp.eq.s32.totalorder %s26, 1
      %p44 = por %p42, %p43
      %p45 = scmp.ne.s32.totalorder %s34, %s35
      %p46 = scmp.eq.s32.totalorder %s26, 0
      %p47 = por %p45, %p46
      %p48 = scmp.ne.s32.totalorder %s34, %s35
      %p49 = scmp.eq.s32.totalorder %s27, 1
      %p50 = por %p48, %p49
      %p52 = scmp.ne.s32.totalorder %s35, %s51
      %p53 = scmp.eq.s32.totalorder %s27, 0
      %p54 = por %p52, %p53
      %s56 = sadd.s32 %s55, 1
      %p59 = scmp.eq.s32.totalorder %s21, 1
      %p60 = scmp.ne.s32.totalorder %s55, %s57
      %p61 = scmp.eq.s32.totalorder %s21, 0
      %p62 = por %p60, %p61
      %p63 = scmp.ne.s32.totalorder %s55, %s57
      %p64 = scmp.eq.s32.totalorder %s26, 1
      %p65 = por %p63, %p64
      %p66 = scmp.ne.s32.totalorder %s57, %s58
      %p67 = scmp.eq.s32.totalorder %s26, 0
      %p68 = por %p66, %p67
      %p69 = scmp.ne.s32.totalorder %s57, %s58
      %p70 = scmp.eq.s32.totalorder %s27, 1
      %p71 = por %p69, %p70
      %p73 = scmp.ne.s32.totalorder %s58, %s72
      %p74 = scmp.eq.s32.totalorder %s27, 0
      %p75 = por %p73, %p74
      %s77 = sadd.s32 %s76, 1
      %p80 = scmp.eq.s32.totalorder %s21, 1
      %p81 = scmp.ne.s32.totalorder %s76, %s78
      %p82 = scmp.eq.s32.totalorder %s21, 0
      %p83 = por %p81, %p82
      %p84 = scmp.ne.s32.totalorder %s76, %s78
      %p85 = scmp.eq.s32.totalorder %s26, 1
      %p86 = por %p84, %p85
      %p87 = scmp.ne.s32.totalorder %s78, %s79
      %p88 = scmp.eq.s32.totalorder %s26, 0
      %p89 = por %p87, %p88
      %p90 = scmp.ne.s32.totalorder %s78, %s79
      %p91 = scmp.eq.s32.totalorder %s27, 1
      %p92 = por %p90, %p91
      %p94 = scmp.ne.s32.totalorder %s79, %s93
      %p95 = scmp.eq.s32.totalorder %s27, 0
      %p96 = por %p94, %p95
      %s98 = sadd.s32 %s97, 1
      %p101 = scmp.eq.s32.totalorder %s21, 1
      %p102 = scmp.ne.s32.totalorder %s97, %s99
      %p103 = scmp.eq.s32.totalorder %s21, 0
      %p104 = por %p102, %p103
      %p105 = scmp.ne.s32.totalorder %s97, %s99
      %p106 = scmp.eq.s32.totalorder %s26, 1
      %p107 = por %p105, %p106
      %p108 = scmp.ne.s32.totalorder %s99, %s100
      %p109 = scmp.eq.s32.totalorder %s26, 0
      %p110 = por %p108, %p109
      %p111 = scmp.ne.s32.totalorder %s99, %s100
      %p112 = scmp.eq.s32.totalorder %s27, 1
      %p113 = por %p111, %p112
      %p115 = scmp.ne.s32.totalorder %s100, %s114
      %p116 = scmp.eq.s32.totalorder %s27, 0
      %p117 = por %p115, %p116
      %s119 = sadd.s32 %s118, 1
      %p122 = scmp.eq.s32.totalorder %s21, 1
      %p123 = scmp.ne.s32.totalorder %s118, %s120
      %p124 = scmp.eq.s32.totalorder %s21, 0
      %p125 = por %p123, %p124
      %p126 = scmp.ne.s32.totalorder %s118, %s120
      %p127 = scmp.eq.s32.totalorder %s26, 1
      %p128 = por %p126, %p127
      %p129 = scmp.ne.s32.totalorder %s120, %s121
      %p130 = scmp.eq.s32.totalorder %s26, 0
      %p131 = por %p129, %p130
      %p132 = scmp.ne.s32.totalorder %s120, %s121
      %p133 = scmp.eq.s32.totalorder %s27, 1
      %p134 = por %p132, %p133
      %p136 = scmp.ne.s32.totalorder %s121, %s135
      %p137 = scmp.eq.s32.totalorder %s27, 0
      %p138 = por %p136, %p137
      %s140 = sadd.s32 %s139, 1
      %p143 = scmp.eq.s32.totalorder %s21, 1
      %p144 = scmp.ne.s32.totalorder %s139, %s141
      %p145 = scmp.eq.s32.totalorder %s21, 0
      %p146 = por %p144, %p145
      %p147 = scmp.ne.s32.totalorder %s139, %s141
      %p148 = scmp.eq.s32.totalorder %s26, 1
      %p149 = por %p147, %p148
      %p150 = scmp.ne.s32.totalorder %s141, %s142
      %p151 = scmp.eq.s32.totalorder %s26, 0
      %p152 = por %p150, %p151
      %p153 = scmp.ne.s32.totalorder %s141, %s142
      %p154 = scmp.eq.s32.totalorder %s27, 1
      %p155 = por %p153, %p154
      %p157 = scmp.ne.s32.totalorder %s142, %s156
      %p158 = scmp.eq.s32.totalorder %s27, 0
      %p159 = por %p157, %p158
      %s161 = sadd.s32 %s160, 1
      %p164 = scmp.eq.s32.totalorder %s21, 1
      %p165 = scmp.ne.s32.totalorder %s160, %s162
      %p166 = scmp.eq.s32.totalorder %s21, 0
      %p167 = por %p165, %p166
      %p168 = scmp.ne.s32.totalorder %s160, %s162
      %p169 = scmp.eq.s32.totalorder %s26, 1
      %p170 = por %p168, %p169
      %p171 = scmp.ne.s32.totalorder %s162, %s163
      %p172 = scmp.eq.s32.totalorder %s26, 0
      %p173 = por %p171, %p172
      %p174 = scmp.ne.s32.totalorder %s162, %s163
      %p175 = scmp.eq.s32.totalorder %s27, 1
      %p176 = por %p174, %p175
      %p178 = scmp.ne.s32.totalorder %s163, %s177
      %p179 = scmp.eq.s32.totalorder %s27, 0
      %p180 = por %p178, %p179
      %s182 = sadd.s32 %s181, 1
      %p185 = scmp.eq.s32.totalorder %s21, 1
      %p186 = scmp.ne.s32.totalorder %s181, %s183
      %p187 = scmp.eq.s32.totalorder %s21, 0
      %p188 = por %p186, %p187
      %p189 = scmp.ne.s32.totalorder %s181, %s183
      %p190 = scmp.eq.s32.totalorder %s26, 1
      %p191 = por %p189, %p190
      %p192 = scmp.ne.s32.totalorder %s183, %s184
      %p193 = scmp.eq.s32.totalorder %s26, 0
      %p194 = por %p192, %p193
      %p195 = scmp.ne.s32.totalorder %s183, %s184
      %p196 = scmp.eq.s32.totalorder %s27, 1
      %p197 = por %p195, %p196
      %p199 = scmp.ne.s32.totalorder %s184, %s198
      %p200 = scmp.eq.s32.totalorder %s27, 0
      %p201 = por %p199, %p200
      %s203 = sadd.s32 %s202, 1
      %p206 = scmp.eq.s32.totalorder %s21, 1
      %p207 = scmp.ne.s32.totalorder %s202, %s204
      %p208 = scmp.eq.s32.totalorder %s21, 0
      %p209 = por %p207, %p208
      %p210 = scmp.ne.s32.totalorder %s202, %s204
      %p211 = scmp.eq.s32.totalorder %s26, 1
      %p212 = por %p210, %p211
      %p213 = scmp.ne.s32.totalorder %s204, %s205
      %p214 = scmp.eq.s32.totalorder %s26, 0
      %p215 = por %p213, %p214
      %p216 = scmp.ne.s32.totalorder %s204, %s205
      %p217 = scmp.eq.s32.totalorder %s27, 1
      %p218 = por %p216, %p217
      %p220 = scmp.ne.s32.totalorder %s205, %s219
      %p221 = scmp.eq.s32.totalorder %s27, 0
      %p222 = por %p220, %p221
      %s224 = sadd.s32 %s223, 1
      %p227 = scmp.eq.s32.totalorder %s21, 1
      %p228 = scmp.ne.s32.totalorder %s223, %s225
      %p229 = scmp.eq.s32.totalorder %s21, 0
      %p230 = por %p228, %p229
      %p231 = scmp.ne.s32.totalorder %s223, %s225
      %p232 = scmp.eq.s32.totalorder %s26, 1
      %p233 = por %p231, %p232
      %p234 = scmp.ne.s32.totalorder %s225, %s226
      %p235 = scmp.eq.s32.totalorder %s26, 0
      %p236 = por %p234, %p235
      %p237 = scmp.ne.s32.totalorder %s225, %s226
      %p238 = scmp.eq.s32.totalorder %s27, 1
      %p239 = por %p237, %p238
      %p241 = scmp.ne.s32.totalorder %s226, %s240
      %p242 = scmp.eq.s32.totalorder %s27, 0
      %p243 = por %p241, %p242
      %s245 = sadd.s32 %s244, 1
      %p248 = scmp.eq.s32.totalorder %s21, 1
      %p249 = scmp.ne.s32.totalorder %s244, %s246
      %p250 = scmp.eq.s32.totalorder %s21, 0
      %p251 = por %p249, %p250
      %p252 = scmp.ne.s32.totalorder %s244, %s246
      %p253 = scmp.eq.s32.totalorder %s26, 1
      %p254 = por %p252, %p253
      %p255 = scmp.ne.s32.totalorder %s246, %s247
      %p256 = scmp.eq.s32.totalorder %s26, 0
      %p257 = por %p255, %p256
      %p258 = scmp.ne.s32.totalorder %s246, %s247
      %p259 = scmp.eq.s32.totalorder %s27, 1
      %p260 = por %p258, %p259
      %p262 = scmp.ne.s32.totalorder %s247, %s261
      %p263 = scmp.eq.s32.totalorder %s27, 0
      %p264 = por %p262, %p263
      %s266 = sadd.s32 %s265, 1
      %p269 = scmp.eq.s32.totalorder %s21, 1
      %p270 = scmp.ne.s32.totalorder %s265, %s267
      %p271 = scmp.eq.s32.totalorder %s21, 0
      %p272 = por %p270, %p271
      %p273 = scmp.ne.s32.totalorder %s265, %s267
      %p274 = scmp.eq.s32.totalorder %s26, 1
      %p275 = por %p273, %p274
      %p276 = scmp.ne.s32.totalorder %s267, %s268
      %p277 = scmp.eq.s32.totalorder %s26, 0
      %p278 = por %p276, %p277
      %p279 = scmp.ne.s32.totalorder %s267, %s268
      %p280 = scmp.eq.s32.totalorder %s27, 1
      %p281 = por %p279, %p280
      %p283 = scmp.ne.s32.totalorder %s268, %s282
      %p284 = scmp.eq.s32.totalorder %s27, 0
      %p285 = por %p283, %p284
      %s286 = ssub.s32 %s21, %s28
      %p287 = scmp.eq.s32.totalorder %s286, 0
      %s289 = sadd.s32 %s288, 1
      %s290 = scalar_select %p287, %s288, %s289
      %p293 = pneg %p287
      %p294 = scmp.eq.s32.totalorder %s21, 1
      %p295 = por %p293, %p294
      %p296 = scmp.ne.s32.totalorder %s288, %s291
      %p297 = scmp.eq.s32.totalorder %s21, 0
      %p298 = por %p296, %p297
      %p299 = scmp.ne.s32.totalorder %s288, %s291
      %p300 = scmp.eq.s32.totalorder %s26, 1
      %p301 = por %p299, %p300
      %p302 = scmp.ne.s32.totalorder %s291, %s292
      %p303 = scmp.eq.s32.totalorder %s26, 0
      %p304 = por %p302, %p303
      %p305 = scmp.ne.s32.totalorder %s291, %s292
      %p306 = scmp.eq.s32.totalorder %s27, 1
      %p307 = por %p305, %p306
      %p309 = scmp.ne.s32.totalorder %s292, %s308
      %p310 = scmp.eq.s32.totalorder %s27, 0
      %p311 = por %p309, %p310
      %p312 = scmp.le.s32.totalorder 1, %s21
      %p313 = scmp.lt.s32.totalorder %s21, 3
      %p314 = pnand %p312, %p313
      %p315 = pneg %p314
      // Predicated region
      $region9: #{discriminator_forward.1} parent=5 // pred_check
        _
      $region10: #{discriminator_forward.1} parent=5 // pred_check_branch
        %317 = sbr.rel (%p314) target = $region12
      $region11: #{discriminator_forward.1} parent=5 // pred_region
        %s318 = ssub.s32 %s21, 1
        // Predicated region
        $region13: #{discriminator_forward.1} parent=11 // pred_check
          %p319 = pneg %p68
        $region14: #{discriminator_forward.1} parent=11 // pred_check_branch
          %321 = sbr.rel (%p319) target = $region16
        $region15: #{discriminator_forward.1} parent=11 // pred_region
          _
        $region16: #{discriminator_forward.1} parent=11 // pred_fallthru
          _
        // Predicated region
        $region17: #{discriminator_forward.1} parent=11 // pred_check
          %p322 = pneg %p89
        $region18: #{discriminator_forward.1} parent=11 // pred_check_branch
          %324 = sbr.rel (%p322) target = $region20
        $region19: #{discriminator_forward.1} parent=11 // pred_region
          _
        $region20: #{discriminator_forward.1} parent=11 // pred_fallthru
          _
        // Predicated region
        $region21: #{discriminator_forward.1} parent=11 // pred_check
          %p325 = pneg %p110
        $region22: #{discriminator_forward.1} parent=11 // pred_check_branch
          %327 = sbr.rel (%p325) target = $region24
        $region23: #{discriminator_forward.1} parent=11 // pred_region
          _
        $region24: #{discriminator_forward.1} parent=11 // pred_fallthru
          _
        // Predicated region
        $region25: #{discriminator_forward.1} parent=11 // pred_check
          %p328 = pneg %p131
        $region26: #{discriminator_forward.1} parent=11 // pred_check_branch
          %330 = sbr.rel (%p328) target = $region28
        $region27: #{discriminator_forward.1} parent=11 // pred_region
          _
        $region28: #{discriminator_forward.1} parent=11 // pred_fallthru
          _
        // Predicated region
        $region29: #{discriminator_forward.1} parent=11 // pred_check
          %p331 = pneg %p152
        $region30: #{discriminator_forward.1} parent=11 // pred_check_branch
          %333 = sbr.rel (%p331) target = $region32
        $region31: #{discriminator_forward.1} parent=11 // pred_region
          _
        $region32: #{discriminator_forward.1} parent=11 // pred_fallthru
          _
        // Predicated region
        $region33: #{discriminator_forward.1} parent=11 // pred_check
          %p334 = pneg %p173
        $region34: #{discriminator_forward.1} parent=11 // pred_check_branch
          %336 = sbr.rel (%p334) target = $region36
        $region35: #{discriminator_forward.1} parent=11 // pred_region
          _
        $region36: #{discriminator_forward.1} parent=11 // pred_fallthru
          _
        // Predicated region
        $region37: #{discriminator_forward.1} parent=11 // pred_check
          %p337 = pneg %p194
        $region38: #{discriminator_forward.1} parent=11 // pred_check_branch
          %339 = sbr.rel (%p337) target = $region40
        $region39: #{discriminator_forward.1} parent=11 // pred_region
          _
        $region40: #{discriminator_forward.1} parent=11 // pred_fallthru
          _
        // Predicated region
        $region41: #{discriminator_forward.1} parent=11 // pred_check
          %p340 = pneg %p215
        $region42: #{discriminator_forward.1} parent=11 // pred_check_branch
          %342 = sbr.rel (%p340) target = $region44
        $region43: #{discriminator_forward.1} parent=11 // pred_region
          _
        $region44: #{discriminator_forward.1} parent=11 // pred_fallthru
          _
        // Predicated region
        $region45: #{discriminator_forward.1} parent=11 // pred_check
          %p343 = pneg %p236
        $region46: #{discriminator_forward.1} parent=11 // pred_check_branch
          %345 = sbr.rel (%p343) target = $region48
        $region47: #{discriminator_forward.1} parent=11 // pred_region
          _
        $region48: #{discriminator_forward.1} parent=11 // pred_fallthru
          _
        // Predicated region
        $region49: #{discriminator_forward.1} parent=11 // pred_check
          %p346 = pneg %p257
        $region50: #{discriminator_forward.1} parent=11 // pred_check_branch
          %348 = sbr.rel (%p346) target = $region52
        $region51: #{discriminator_forward.1} parent=11 // pred_region
          _
        $region52: #{discriminator_forward.1} parent=11 // pred_fallthru
          _
        // Predicated region
        $region53: #{discriminator_forward.1} parent=11 // pred_check
          %p349 = pneg %p278
        $region54: #{discriminator_forward.1} parent=11 // pred_check_branch
          %351 = sbr.rel (%p349) target = $region56
        $region55: #{discriminator_forward.1} parent=11 // pred_region
          _
        $region56: #{discriminator_forward.1} parent=11 // pred_fallthru
          _
      $region12: #{discriminator_forward.1} parent=5 // pred_fallthru
        _
      %p352 = scmp.lt.s32.totalorder %s21, 2
      // Predicated region
      $region57: #{discriminator_forward.1} parent=5 // pred_check
        %p353 = pneg %p352
      $region58: #{discriminator_forward.1} parent=5 // pred_check_branch
        %355 = sbr.rel (%p353) target = $region60
      $region59: #{discriminator_forward.1} parent=5 // pred_region
        // Predicated region
        $region61: #{discriminator_forward.1} parent=59 // pred_check
          %p356 = pneg %p41
        $region62: #{discriminator_forward.1} parent=59 // pred_check_branch
          %358 = sbr.rel (%p356) target = $region64
        $region63: #{discriminator_forward.1} parent=59 // pred_region
          %p359 = scmp.lt.s32.totalorder %s21, 1
          %s360 = scalar_select %p359, %s21, 1
          %s361 = smul.addr %s360, 8
          %s362 = smul.addr %s361, 4
          %s363 = scalar_lea.vmem %s0, %s362
        $region64: #{discriminator_forward.1} parent=59 // pred_fallthru
          _
      $region60: #{discriminator_forward.1} parent=5 // pred_fallthru
        _
      %p364 = scmp.le.s32.totalorder 1, %s21
      %p365 = scmp.lt.s32.totalorder %s21, 3
      %p366 = pnand %p364, %p365
      %p367 = pneg %p366
      // Predicated region
      $region65: #{discriminator_forward.1} parent=5 // pred_check
        _
      $region66: #{discriminator_forward.1} parent=5 // pred_check_branch
        %369 = sbr.rel (%p366) target = $region68
      $region67: #{discriminator_forward.1} parent=5 // pred_region
        %s370 = ssub.s32 %s21, 1
        %p371 = scmp.lt.s32.totalorder %s26, 1
        %s372 = scalar_select %p371, %s26, 1
        %s373 = smul.addr %s372, 8
        %s374 = smul.addr %s373, 4
        %s375 = scalar_lea.vmem %s0, %s374
        %p376 = pneg %p47
        %p377 = pneg %p44
        %p378 = pneg %p68
        %p379 = pneg %p65
        %p380 = pneg %p89
        %p381 = pneg %p86
        %p382 = pneg %p110
        %p383 = pneg %p107
        %p384 = pneg %p131
        %p385 = pneg %p128
        %p386 = pneg %p152
        %p387 = pneg %p149
        %p388 = pneg %p173
        %p389 = pneg %p170
        %p390 = pneg %p194
        %p391 = pneg %p191
        %p392 = pneg %p215
        %p393 = pneg %p212
        %p394 = pneg %p236
        %p395 = pneg %p233
        %p396 = pneg %p257
        %p397 = pneg %p254
        %p398 = pneg %p278
        %p399 = pneg %p275
        %p400 = pneg %p304
        %p401 = pneg %p301
        %s402 = sand.u32 %s291, 1
        %s403 = scalar_lea.sflag [#allocation3], %s402
        %s404 = sand.u32 %s291, 1
        %s405 = scalar_lea.vmem [#allocation2], %s404
        %p406 = scmp.lt.s32.totalorder %s26, 1
        %s407 = scalar_select %p406, %s26, 1
        %s408 = smul.addr %s407, 8
        %s409 = smul.addr %s408, 4
        %s410 = scalar_lea.vmem %s0, %s409
        %v412 = vld [vmem:[%s410] sm:$0xf]
        %v413 = vld [vmem:[%s410 + $0x4] sm:$0xf]
        %v414 = vld [vmem:[%s410 + $0x8] sm:$0xf]
        %v415 = vld [vmem:[%s410 + $0xc] sm:$0xf]
        %v416 = vld [vmem:[%s410 + $0x10] sm:$0xf]
        %v417 = vld [vmem:[%s410 + $0x14] sm:$0xf]
        %v418 = vld [vmem:[%s410 + $0x18] sm:$0xf]
        %v419 = vld [vmem:[%s410 + $0x1c] sm:$0xf]
        %v420 = vld [vmem:[%s1] sm:$0xf]
        %v421 = vld [vmem:[%s1 + $0x4] sm:$0xf]
        %v422 = vld [vmem:[%s1 + $0x8] sm:$0xf]
        %v423 = vld [vmem:[%s1 + $0xc] sm:$0xf]
        %v424 = vld [vmem:[%s1 + $0x10] sm:$0xf]
        %v425 = vld [vmem:[%s1 + $0x14] sm:$0xf]
        %v426 = vld [vmem:[%s1 + $0x18] sm:$0xf]
        %v427 = vld [vmem:[%s1 + $0x1c] sm:$0xf]
        %v436 = vunpack.c.l.b16 %v412
        %v437 = vunpack.c.l.b16 %v413
        %v438 = vunpack.c.l.b16 %v414
        %v439 = vunpack.c.l.b16 %v415
        %v440 = vunpack.c.l.b16 %v416
        %v441 = vunpack.c.l.b16 %v417
        %v442 = vunpack.c.l.b16 %v418
        %v443 = vunpack.c.l.b16 %v419
        %v444 = vpack.c.b16 %v437, %v436
        %v445 = vpack.c.b16 %v439, %v438
        %v446 = vpack.c.b16 %v441, %v440
        %v447 = vpack.c.b16 %v443, %v442
        %v456 = vunpack.c.l.b16 %v420
        %v457 = vunpack.c.l.b16 %v421
        %v458 = vunpack.c.l.b16 %v422
        %v459 = vunpack.c.l.b16 %v423
        %v460 = vunpack.c.l.b16 %v424
        %v461 = vunpack.c.l.b16 %v425
        %v462 = vunpack.c.l.b16 %v426
        %v463 = vunpack.c.l.b16 %v427
        %v464 = vpack.c.b16 %v457, %v456
        %v465 = vpack.c.b16 %v459, %v458
        %v466 = vpack.c.b16 %v461, %v460
        %v467 = vpack.c.b16 %v463, %v462
        %vm472 = vcmask 523264
        %v474 = vsel %vm472, %v444, 0
        %v477 = vsel %vm472, %v445, 0
        %v480 = vsel %vm472, %v446, 0
        %v483 = vsel %vm472, %v447, 0
        %485 = vmatprep.subr.bf16.mxu0 0
        %486 = vmatpush1.bf16.msra.mxu0 0
        %487 = vmatprep.subr.bf16.mxu0 0
        %488 = vmatpush1.bf16.msra.mxu0 0
        %489 = vmatprep.subr.bf16.mxu0 0
        %490 = vmatpush1.bf16.msra.mxu0 0
        %491 = vmatprep.subr.bf16.mxu0 0
        %492 = vmatpush1.bf16.msra.mxu0 0
        %493 = vmatprep.subr.bf16.mxu0 0
        %494 = vmatpush1.bf16.msra.mxu0 %v467
        %495 = vmatprep.subr.bf16.mxu0 0
        %496 = vmatpush1.bf16.msra.mxu0 %v466
        %497 = vmatprep.subr.bf16.mxu0 0
        %498 = vmatpush1.bf16.msra.mxu0 %v465
        %499 = vmatprep.subr.bf16.mxu0 0
        %500 = vmatpush1.bf16.msra.mxu0 %v464
        %501 = vmatprep.subr.bf16.mxu0 0
        %502 = vmatpush2.bf16.msra.mxu0 0
        %503 = vmatprep.subr.bf16.mxu0 0
        %504 = vmatpush2.bf16.msra.mxu0 0
        %505 = vmatprep.subr.bf16.mxu0 0
        %506 = vmatpush2.bf16.msra.mxu0 0
        %507 = vmatprep.subr.bf16.mxu0 0
        %508 = vmatpush2.bf16.msra.mxu0 0
        %509 = vmatprep.subr.bf16.mxu0 0
        %510 = vmatpush2.bf16.msra.mxu0 0
        %511 = vmatprep.subr.bf16.mxu0 0
        %512 = vmatpush2.bf16.msra.mxu0 0
        %513 = vmatprep.subr.bf16.mxu0 0
        %514 = vmatpush2.bf16.msra.mxu0 0
        %515 = vmatprep.subr.bf16.mxu0 0
        %516 = vmatpush2.bf16.msra.mxu0 0
        %517 = vmatprep.mubr.bf16.mxu0 0
        %518 = vmatmul.mubr.bf16.gmra.mxu0 %v474
        %v519 = vpop.f32.mrf.mxu0
        %v520 = vadd.f32 0.0, %v519
        %v521 = vpop.f32.mrf.mxu0
        %v522 = vpop.f32.mrf.mxu0
        %v523 = vadd.f32 0.0, %v522
        %v524 = vpop.f32.mrf.mxu0
        %525 = vmatprep.mubr.bf16.mxu0 0
        %526 = vmatmul.mubr.bf16.gmra.mxu0 %v477
        %v527 = vpop.f32.mrf.mxu0
        %v528 = vadd.f32 0.0, %v527
        %v529 = vpop.f32.mrf.mxu0
        %v530 = vpop.f32.mrf.mxu0
        %v531 = vadd.f32 0.0, %v530
        %v532 = vpop.f32.mrf.mxu0
        %533 = vmatprep.mubr.bf16.mxu0 0
        %534 = vmatmul.mubr.bf16.gmra.mxu0 %v480
        %v535 = vpop.f32.mrf.mxu0
        %v536 = vadd.f32 0.0, %v535
        %v537 = vpop.f32.mrf.mxu0
        %v538 = vpop.f32.mrf.mxu0
        %v539 = vadd.f32 0.0, %v538
        %v540 = vpop.f32.mrf.mxu0
        %541 = vmatprep.mubr.bf16.mxu0 0
        %542 = vmatmul.mubr.bf16.gmra.mxu0 %v483
        %v543 = vpop.f32.mrf.mxu0
        %v544 = vadd.f32 0.0, %v543
        %v545 = vpop.f32.mrf.mxu0
        %v546 = vpop.f32.mrf.mxu0
        %v547 = vadd.f32 0.0, %v546
        %v548 = vpop.f32.mrf.mxu0
        %549 = vdwg.mxu0
        %v550 = vld [vmem:[%s2] sm:$0x1]
        %v552 = vlaneseq
        %v553 = vshrl.u32 %v552, 7
        %v554 = vsub.s32 0, %v553
        %v555 = vrot.slane %v550, %v554
        %v557 = vadd.f32 %v520, %v555
        %v558 = vadd.f32 %v523, %v555
        %v559 = vadd.f32 %v528, %v555
        %v560 = vadd.f32 %v531, %v555
        %v561 = vadd.f32 %v536, %v555
        %v562 = vadd.f32 %v539, %v555
        %v563 = vadd.f32 %v544, %v555
        %v564 = vadd.f32 %v547, %v555
        %vm565 = vcmask 64512
        %v566 = vsel %vm565, %v557, 0.0
        %v567 = vsel %vm565, %v558, 0.0
        %v568 = vadd.f32 %v566, %v567
        %v569 = vsel %vm565, %v559, 0.0
        %v570 = vadd.f32 %v568, %v569
        %v571 = vsel %vm565, %v560, 0.0
        %v572 = vadd.f32 %v570, %v571
        %v573 = vsel %vm565, %v561, 0.0
        %v574 = vadd.f32 %v572, %v573
        %v575 = vsel %vm565, %v562, 0.0
        %v576 = vadd.f32 %v574, %v575
        %v577 = vsel %vm565, %v563, 0.0
        %v578 = vadd.f32 %v576, %v577
        %v579 = vsel %vm565, %v564, 0.0
        %v580 = vadd.f32 %v578, %v579
        %v581 = vrot.slane %v580, 4
        %v582 = vadd.f32 %v580, %v581
        %v583 = vrot.slane %v582, 2
        %v584 = vadd.f32 %v582, %v583
        %v585 = vrot.slane %v584, 1
        %v586 = vadd.f32 %v584, %v585
        %v587 = vmul.f32 %v586, 0.015625
        %v588 = vsub.f32 %v557, %v587
        %v589 = vsub.f32 %v558, %v587
        %v590 = vsub.f32 %v559, %v587
        %v591 = vsub.f32 %v560, %v587
        %v592 = vsub.f32 %v561, %v587
        %v593 = vsub.f32 %v562, %v587
        %v594 = vsub.f32 %v563, %v587
        %v595 = vsub.f32 %v564, %v587
        %v596 = vmul.f32 %v588, %v588
        %v597 = vmul.f32 %v589, %v589
        %v598 = vmul.f32 %v590, %v590
        %v599 = vmul.f32 %v591, %v591
        %v600 = vmul.f32 %v592, %v592
        %v601 = vmul.f32 %v593, %v593
        %v602 = vmul.f32 %v594, %v594
        %v603 = vmul.f32 %v595, %v595
        %v604 = vsel %vm565, %v596, 0.0
        %v605 = vsel %vm565, %v597, 0.0
        %v606 = vadd.f32 %v604, %v605
        %v607 = vsel %vm565, %v598, 0.0
        %v608 = vadd.f32 %v606, %v607
        %v609 = vsel %vm565, %v599, 0.0
        %v610 = vadd.f32 %v608, %v609
        %v611 = vsel %vm565, %v600, 0.0
        %v612 = vadd.f32 %v610, %v611
        %v613 = vsel %vm565, %v601, 0.0
        %v614 = vadd.f32 %v612, %v613
        %v615 = vsel %vm565, %v602, 0.0
        %v616 = vadd.f32 %v614, %v615
        %v617 = vsel %vm565, %v603, 0.0
        %v618 = vadd.f32 %v616, %v617
        %v619 = vrot.slane %v618, 4
        %v620 = vadd.f32 %v618, %v619
        %v621 = vrot.slane %v620, 2
        %v622 = vadd.f32 %v620, %v621
        %v623 = vrot.slane %v622, 1
        %v624 = vadd.f32 %v622, %v623
        %v625 = vmul.f32 %v624, 0.015625
        %v626 = vadd.f32 %v625, 1e-05
        %v627 = vrsqrt.pop %v626
        %v628 = vmul.f32 %v588, %v627
        %v629 = vmul.f32 %v589, %v627
        %v630 = vmul.f32 %v590, %v627
        %v631 = vmul.f32 %v591, %v627
        %v632 = vmul.f32 %v592, %v627
        %v633 = vmul.f32 %v593, %v627
        %v634 = vmul.f32 %v594, %v627
        %v635 = vmul.f32 %v595, %v627
        %vm636 = vcmp.gt.f32.partialorder %v628, 0.0
        %vm637 = vcmp.gt.f32.partialorder %v629, 0.0
        %vm638 = vcmp.gt.f32.partialorder %v630, 0.0
        %vm639 = vcmp.gt.f32.partialorder %v631, 0.0
        %vm640 = vcmp.gt.f32.partialorder %v632, 0.0
        %vm641 = vcmp.gt.f32.partialorder %v633, 0.0
        %vm642 = vcmp.gt.f32.partialorder %v634, 0.0
        %vm643 = vcmp.gt.f32.partialorder %v635, 0.0
        %v644 = vmul.f32 %v628, 0.2
        %v645 = vmul.f32 %v629, 0.2
        %v646 = vmul.f32 %v630, 0.2
        %v647 = vmul.f32 %v631, 0.2
        %v648 = vmul.f32 %v632, 0.2
        %v649 = vmul.f32 %v633, 0.2
        %v650 = vmul.f32 %v634, 0.2
        %v651 = vmul.f32 %v635, 0.2
        %v652 = vsel %vm636, %v628, %v644
        %v653 = vsel %vm637, %v629, %v645
        %v654 = vsel %vm638, %v630, %v646
        %v655 = vsel %vm639, %v631, %v647
        %v656 = vsel %vm640, %v632, %v648
        %v657 = vsel %vm641, %v633, %v649
        %v658 = vsel %vm642, %v634, %v650
        %v659 = vsel %vm643, %v635, %v651
        %v660 = vld [vmem:[%s3] sm:$0xf]
        %v661 = vld [vmem:[%s3 + $0x4] sm:$0xf]
        %v662 = vld [vmem:[%s3 + $0x8] sm:$0xf]
        %v663 = vld [vmem:[%s3 + $0xc] sm:$0xf]
        %v664 = vld [vmem:[%s3 + $0x10] sm:$0xf]
        %v665 = vld [vmem:[%s3 + $0x14] sm:$0xf]
        %v666 = vld [vmem:[%s3 + $0x18] sm:$0xf]
        %v667 = vld [vmem:[%s3 + $0x1c] sm:$0xf]
        %v668 = vld [vmem:[%s3 + $0x20] sm:$0xf]
        %v669 = vld [vmem:[%s3 + $0x24] sm:$0xf]
        %v670 = vld [vmem:[%s3 + $0x28] sm:$0xf]
        %v671 = vld [vmem:[%s3 + $0x2c] sm:$0xf]
        %v672 = vld [vmem:[%s3 + $0x30] sm:$0xf]
        %v673 = vld [vmem:[%s3 + $0x34] sm:$0xf]
        %v674 = vld [vmem:[%s3 + $0x38] sm:$0xf]
        %v675 = vld [vmem:[%s3 + $0x3c] sm:$0xf]
        %v676 = vld [vmem:[%s3 + $0x40] sm:$0xf]
        %v677 = vld [vmem:[%s3 + $0x44] sm:$0xf]
        %v678 = vld [vmem:[%s3 + $0x48] sm:$0xf]
        %v679 = vld [vmem:[%s3 + $0x4c] sm:$0xf]
        %v680 = vld [vmem:[%s3 + $0x50] sm:$0xf]
        %v681 = vld [vmem:[%s3 + $0x54] sm:$0xf]
        %v682 = vld [vmem:[%s3 + $0x58] sm:$0xf]
        %v683 = vld [vmem:[%s3 + $0x5c] sm:$0xf]
        %v684 = vld [vmem:[%s3 + $0x60] sm:$0xf]
        %v685 = vld [vmem:[%s3 + $0x64] sm:$0xf]
        %v686 = vld [vmem:[%s3 + $0x68] sm:$0xf]
        %v687 = vld [vmem:[%s3 + $0x6c] sm:$0xf]
        %v688 = vld [vmem:[%s3 + $0x70] sm:$0xf]
        %v689 = vld [vmem:[%s3 + $0x74] sm:$0xf]
        %v690 = vld [vmem:[%s3 + $0x78] sm:$0xf]
        %v691 = vld [vmem:[%s3 + $0x7c] sm:$0xf]
        %v692 = vpack.c.bf16 %v653, %v652
        %v693 = vpack.c.bf16 %v655, %v654
        %v694 = vpack.c.bf16 %v657, %v656
        %v695 = vpack.c.bf16 %v659, %v658
        %v728 = vunpack.c.l.b16 %v660
        %v729 = vunpack.c.l.b16 %v661
        %v730 = vunpack.c.l.b16 %v662
        %v731 = vunpack.c.l.b16 %v663
        %v732 = vunpack.c.l.b16 %v664
        %v733 = vunpack.c.l.b16 %v665
        %v734 = vunpack.c.l.b16 %v666
        %v735 = vunpack.c.l.b16 %v667
        %v736 = vunpack.c.l.b16 %v668
        %v737 = vunpack.c.l.b16 %v669
        %v738 = vunpack.c.l.b16 %v670
        %v739 = vunpack.c.l.b16 %v671
        %v740 = vunpack.c.l.b16 %v672
        %v741 = vunpack.c.l.b16 %v673
        %v742 = vunpack.c.l.b16 %v674
        %v743 = vunpack.c.l.b16 %v675
        %v744 = vunpack.c.l.b16 %v676
        %v745 = vunpack.c.l.b16 %v677
        %v746 = vunpack.c.l.b16 %v678
        %v747 = vunpack.c.l.b16 %v679
        %v748 = vunpack.c.l.b16 %v680
        %v749 = vunpack.c.l.b16 %v681
        %v750 = vunpack.c.l.b16 %v682
        %v751 = vunpack.c.l.b16 %v683
        %v752 = vunpack.c.l.b16 %v684
        %v753 = vunpack.c.l.b16 %v685
        %v754 = vunpack.c.l.b16 %v686
        %v755 = vunpack.c.l.b16 %v687
        %v756 = vunpack.c.l.b16 %v688
        %v757 = vunpack.c.l.b16 %v689
        %v758 = vunpack.c.l.b16 %v690
        %v759 = vunpack.c.l.b16 %v691
        %v760 = vpack.c.b16 %v729, %v728
        %v761 = vpack.c.b16 %v731, %v730
        %v762 = vpack.c.b16 %v733, %v732
        %v763 = vpack.c.b16 %v735, %v734
        %v764 = vpack.c.b16 %v737, %v736
        %v765 = vpack.c.b16 %v739, %v738
        %v766 = vpack.c.b16 %v741, %v740
        %v767 = vpack.c.b16 %v743, %v742
        %v768 = vpack.c.b16 %v745, %v744
        %v769 = vpack.c.b16 %v747, %v746
        %v770 = vpack.c.b16 %v749, %v748
        %v771 = vpack.c.b16 %v751, %v750
        %v772 = vpack.c.b16 %v753, %v752
        %v773 = vpack.c.b16 %v755, %v754
        %v774 = vpack.c.b16 %v757, %v756
        %v775 = vpack.c.b16 %v759, %v758
        %v777 = vsel %vm472, %v760, 0
        %v780 = vsel %vm472, %v761, 0
        %v783 = vsel %vm472, %v762, 0
        %v786 = vsel %vm472, %v763, 0
        %v789 = vsel %vm472, %v764, 0
        %v792 = vsel %vm472, %v765, 0
        %v795 = vsel %vm472, %v766, 0
        %v798 = vsel %vm472, %v767, 0
        %v801 = vsel %vm472, %v768, 0
        %v804 = vsel %vm472, %v769, 0
        %v807 = vsel %vm472, %v770, 0
        %v810 = vsel %vm472, %v771, 0
        %v813 = vsel %vm472, %v772, 0
        %v816 = vsel %vm472, %v773, 0
        %v819 = vsel %vm472, %v774, 0
        %v822 = vsel %vm472, %v775, 0
        %824 = vmatprep.subr.bf16.mxu0 0
        %825 = vmatpush1.bf16.msra.mxu0 0
        %826 = vmatprep.subr.bf16.mxu0 0
        %827 = vmatpush1.bf16.msra.mxu0 0
        %828 = vmatprep.subr.bf16.mxu0 0
        %829 = vmatpush1.bf16.msra.mxu0 0
        %830 = vmatprep.subr.bf16.mxu0 0
        %831 = vmatpush1.bf16.msra.mxu0 0
        %832 = vmatprep.subr.bf16.mxu0 0
        %833 = vmatpush1.bf16.msra.mxu0 %v695
        %834 = vmatprep.subr.bf16.mxu0 0
        %835 = vmatpush1.bf16.msra.mxu0 %v694
        %836 = vmatprep.subr.bf16.mxu0 0
        %837 = vmatpush1.bf16.msra.mxu0 %v693
        %838 = vmatprep.subr.bf16.mxu0 0
        %839 = vmatpush1.bf16.msra.mxu0 %v692
        %840 = vmatprep.subr.bf16.mxu0 0
        %841 = vmatpush2.bf16.msra.mxu0 0
        %842 = vmatprep.subr.bf16.mxu0 0
        %843 = vmatpush2.bf16.msra.mxu0 0
        %844 = vmatprep.subr.bf16.mxu0 0
        %845 = vmatpush2.bf16.msra.mxu0 0
        %846 = vmatprep.subr.bf16.mxu0 0
        %847 = vmatpush2.bf16.msra.mxu0 0
        %848 = vmatprep.subr.bf16.mxu0 0
        %849 = vmatpush2.bf16.msra.mxu0 0
        %850 = vmatprep.subr.bf16.mxu0 0
        %851 = vmatpush2.bf16.msra.mxu0 0
        %852 = vmatprep.subr.bf16.mxu0 0
        %853 = vmatpush2.bf16.msra.mxu0 0
        %854 = vmatprep.subr.bf16.mxu0 0
        %855 = vmatpush2.bf16.msra.mxu0 0
        %856 = vmatprep.mubr.bf16.mxu0 0
        %857 = vmatmul.mubr.bf16.gmra.mxu0 %v777
        %v858 = vpop.f32.mrf.mxu0
        %v859 = vadd.f32 0.0, %v858
        %v860 = vpop.f32.mrf.mxu0
        %v861 = vpop.f32.mrf.mxu0
        %v862 = vadd.f32 0.0, %v861
        %v863 = vpop.f32.mrf.mxu0
        %864 = vmatprep.mubr.bf16.mxu0 0
        %865 = vmatmul.mubr.bf16.gmra.mxu0 %v780
        %v866 = vpop.f32.mrf.mxu0
        %v867 = vadd.f32 0.0, %v866
        %v868 = vpop.f32.mrf.mxu0
        %v869 = vpop.f32.mrf.mxu0
        %v870 = vadd.f32 0.0, %v869
        %v871 = vpop.f32.mrf.mxu0
        %872 = vmatprep.mubr.bf16.mxu0 0
        %873 = vmatmul.mubr.bf16.gmra.mxu0 %v783
        %v874 = vpop.f32.mrf.mxu0
        %v875 = vadd.f32 0.0, %v874
        %v876 = vpop.f32.mrf.mxu0
        %v877 = vpop.f32.mrf.mxu0
        %v878 = vadd.f32 0.0, %v877
        %v879 = vpop.f32.mrf.mxu0
        %880 = vmatprep.mubr.bf16.mxu0 0
        %881 = vmatmul.mubr.bf16.gmra.mxu0 %v786
        %v882 = vpop.f32.mrf.mxu0
        %v883 = vadd.f32 0.0, %v882
        %v884 = vpop.f32.mrf.mxu0
        %v885 = vpop.f32.mrf.mxu0
        %v886 = vadd.f32 0.0, %v885
        %v887 = vpop.f32.mrf.mxu0
        %888 = vmatprep.mubr.bf16.mxu0 0
        %889 = vmatmul.mubr.bf16.gmra.mxu0 %v789
        %v890 = vpop.f32.mrf.mxu0
        %v891 = vadd.f32 0.0, %v890
        %v892 = vpop.f32.mrf.mxu0
        %v893 = vpop.f32.mrf.mxu0
        %v894 = vadd.f32 0.0, %v893
        %v895 = vpop.f32.mrf.mxu0
        %896 = vmatprep.mubr.bf16.mxu0 0
        %897 = vmatmul.mubr.bf16.gmra.mxu0 %v792
        %v898 = vpop.f32.mrf.mxu0
        %v899 = vadd.f32 0.0, %v898
        %v900 = vpop.f32.mrf.mxu0
        %v901 = vpop.f32.mrf.mxu0
        %v902 = vadd.f32 0.0, %v901
        %v903 = vpop.f32.mrf.mxu0
        %904 = vmatprep.mubr.bf16.mxu0 0
        %905 = vmatmul.mubr.bf16.gmra.mxu0 %v795
        %v906 = vpop.f32.mrf.mxu0
        %v907 = vadd.f32 0.0, %v906
        %v908 = vpop.f32.mrf.mxu0
        %v909 = vpop.f32.mrf.mxu0
        %v910 = vadd.f32 0.0, %v909
        %v911 = vpop.f32.mrf.mxu0
        %912 = vmatprep.mubr.bf16.mxu0 0
        %913 = vmatmul.mubr.bf16.gmra.mxu0 %v798
        %v914 = vpop.f32.mrf.mxu0
        %v915 = vadd.f32 0.0, %v914
        %v916 = vpop.f32.mrf.mxu0
        %v917 = vpop.f32.mrf.mxu0
        %v918 = vadd.f32 0.0, %v917
        %v919 = vpop.f32.mrf.mxu0
        %920 = vmatprep.mubr.bf16.mxu0 0
        %921 = vmatmul.mubr.bf16.gmra.mxu0 %v801
        %v922 = vpop.f32.mrf.mxu0
        %v923 = vadd.f32 0.0, %v922
        %v924 = vpop.f32.mrf.mxu0
        %v925 = vpop.f32.mrf.mxu0
        %v926 = vadd.f32 0.0, %v925
        %v927 = vpop.f32.mrf.mxu0
        %928 = vmatprep.mubr.bf16.mxu0 0
        %929 = vmatmul.mubr.bf16.gmra.mxu0 %v804
        %v930 = vpop.f32.mrf.mxu0
        %v931 = vadd.f32 0.0, %v930
        %v932 = vpop.f32.mrf.mxu0
        %v933 = vpop.f32.mrf.mxu0
        %v934 = vadd.f32 0.0, %v933
        %v935 = vpop.f32.mrf.mxu0
        %936 = vmatprep.mubr.bf16.mxu0 0
        %937 = vmatmul.mubr.bf16.gmra.mxu0 %v807
        %v938 = vpop.f32.mrf.mxu0
        %v939 = vadd.f32 0.0, %v938
        %v940 = vpop.f32.mrf.mxu0
        %v941 = vpop.f32.mrf.mxu0
        %v942 = vadd.f32 0.0, %v941
        %v943 = vpop.f32.mrf.mxu0
        %944 = vmatprep.mubr.bf16.mxu0 0
        %945 = vmatmul.mubr.bf16.gmra.mxu0 %v810
        %v946 = vpop.f32.mrf.mxu0
        %v947 = vadd.f32 0.0, %v946
        %v948 = vpop.f32.mrf.mxu0
        %v949 = vpop.f32.mrf.mxu0
        %v950 = vadd.f32 0.0, %v949
        %v951 = vpop.f32.mrf.mxu0
        %952 = vmatprep.mubr.bf16.mxu0 0
        %953 = vmatmul.mubr.bf16.gmra.mxu0 %v813
        %v954 = vpop.f32.mrf.mxu0
        %v955 = vadd.f32 0.0, %v954
        %v956 = vpop.f32.mrf.mxu0
        %v957 = vpop.f32.mrf.mxu0
        %v958 = vadd.f32 0.0, %v957
        %v959 = vpop.f32.mrf.mxu0
        %960 = vmatprep.mubr.bf16.mxu0 0
        %961 = vmatmul.mubr.bf16.gmra.mxu0 %v816
        %v962 = vpop.f32.mrf.mxu0
        %v963 = vadd.f32 0.0, %v962
        %v964 = vpop.f32.mrf.mxu0
        %v965 = vpop.f32.mrf.mxu0
        %v966 = vadd.f32 0.0, %v965
        %v967 = vpop.f32.mrf.mxu0
        %968 = vmatprep.mubr.bf16.mxu0 0
        %969 = vmatmul.mubr.bf16.gmra.mxu0 %v819
        %v970 = vpop.f32.mrf.mxu0
        %v971 = vadd.f32 0.0, %v970
        %v972 = vpop.f32.mrf.mxu0
        %v973 = vpop.f32.mrf.mxu0
        %v974 = vadd.f32 0.0, %v973
        %v975 = vpop.f32.mrf.mxu0
        %976 = vmatprep.mubr.bf16.mxu0 0
        %977 = vmatmul.mubr.bf16.gmra.mxu0 %v822
        %v978 = vpop.f32.mrf.mxu0
        %v979 = vadd.f32 0.0, %v978
        %v980 = vpop.f32.mrf.mxu0
        %v981 = vpop.f32.mrf.mxu0
        %v982 = vadd.f32 0.0, %v981
        %v983 = vpop.f32.mrf.mxu0
        %984 = vdwg.mxu0
        %v985 = vpack.c.bf16 %v862, %v859
        %v986 = vld [vmem:[%s4] sm:$0xf]
        %v987 = vpack.c.bf16 %v870, %v867
        %s988 = scalar_lea.vmem %s4, 4
        %v989 = vld [vmem:[%s988] sm:$0xf]
        %v991 = vsel %vm565, %v987, 0
        %vm993 = vcmask 1043456
        %v995 = vsel %vm993, %v989, 0
        %997 = vmatprep.subr.bf16.mxu0 0
        %998 = vmatpush1.bf16.msra.mxu0 0
        %999 = vmatprep.subr.bf16.mxu0 0
        %1000 = vmatpush1.bf16.msra.mxu0 0
        %1001 = vmatprep.subr.bf16.mxu0 0
        %1002 = vmatpush1.bf16.msra.mxu0 0
        %1003 = vmatprep.subr.bf16.mxu0 0
        %1004 = vmatpush1.bf16.msra.mxu0 0
        %1005 = vmatprep.subr.bf16.mxu0 0
        %1006 = vmatpush1.bf16.msra.mxu0 0
        %1007 = vmatprep.subr.bf16.mxu0 0
        %1008 = vmatpush1.bf16.msra.mxu0 0
        %1009 = vmatprep.subr.bf16.mxu0 0
        %1010 = vmatpush1.bf16.msra.mxu0 0
        %1011 = vmatprep.subr.bf16.mxu0 0
        %1012 = vmatpush1.bf16.msra.mxu0 %v995
        %1013 = vmatprep.subr.bf16.mxu0 0
        %1014 = vmatpush2.bf16.msra.mxu0 0
        %1015 = vmatprep.subr.bf16.mxu0 0
        %1016 = vmatpush2.bf16.msra.mxu0 0
        %1017 = vmatprep.subr.bf16.mxu0 0
        %1018 = vmatpush2.bf16.msra.mxu0 0
        %1019 = vmatprep.subr.bf16.mxu0 0
        %1020 = vmatpush2.bf16.msra.mxu0 0
        %1021 = vmatprep.subr.bf16.mxu0 0
        %1022 = vmatpush2.bf16.msra.mxu0 0
        %1023 = vmatprep.subr.bf16.mxu0 0
        %1024 = vmatpush2.bf16.msra.mxu0 0
        %1025 = vmatprep.subr.bf16.mxu0 0
        %1026 = vmatpush2.bf16.msra.mxu0 0
        %1027 = vmatprep.subr.bf16.mxu0 0
        %1028 = vmatpush2.bf16.msra.mxu0 0
        %1029 = vmatprep.mubr.bf16.mxu0 0
        %1030 = vmatmul.mubr.bf16.gmra.mxu0 %v991
        %v1031 = vpop.f32.mrf.mxu0
        %v1032 = vadd.f32 0.0, %v1031
        %v1033 = vpop.f32.mrf.mxu0
        %v1034 = vpop.f32.mrf.mxu0
        %v1035 = vadd.f32 0.0, %v1034
        %v1036 = vpop.f32.mrf.mxu0
        %1037 = vdwg.mxu0
        %v1039 = vsel %vm565, %v985, 0
        %v1042 = vsel %vm993, %v986, 0
        %1044 = vmatprep.subr.bf16.mxu0 0
        %1045 = vmatpush1.bf16.msra.mxu0 0
        %1046 = vmatprep.subr.bf16.mxu0 0
        %1047 = vmatpush1.bf16.msra.mxu0 0
        %1048 = vmatprep.subr.bf16.mxu0 0
        %1049 = vmatpush1.bf16.msra.mxu0 0
        %1050 = vmatprep.subr.bf16.mxu0 0
        %1051 = vmatpush1.bf16.msra.mxu0 0
        %1052 = vmatprep.subr.bf16.mxu0 0
        %1053 = vmatpush1.bf16.msra.mxu0 0
        %1054 = vmatprep.subr.bf16.mxu0 0
        %1055 = vmatpush1.bf16.msra.mxu0 0
        %1056 = vmatprep.subr.bf16.mxu0 0
        %1057 = vmatpush1.bf16.msra.mxu0 0
        %1058 = vmatprep.subr.bf16.mxu0 0
        %1059 = vmatpush1.bf16.msra.mxu0 %v1042
        %1060 = vmatprep.subr.bf16.mxu0 0
        %1061 = vmatpush2.bf16.msra.mxu0 0
        %1062 = vmatprep.subr.bf16.mxu0 0
        %1063 = vmatpush2.bf16.msra.mxu0 0
        %1064 = vmatprep.subr.bf16.mxu0 0
        %1065 = vmatpush2.bf16.msra.mxu0 0
        %1066 = vmatprep.subr.bf16.mxu0 0
        %1067 = vmatpush2.bf16.msra.mxu0 0
        %1068 = vmatprep.subr.bf16.mxu0 0
        %1069 = vmatpush2.bf16.msra.mxu0 0
        %1070 = vmatprep.subr.bf16.mxu0 0
        %1071 = vmatpush2.bf16.msra.mxu0 0
        %1072 = vmatprep.subr.bf16.mxu0 0
        %1073 = vmatpush2.bf16.msra.mxu0 0
        %1074 = vmatprep.subr.bf16.mxu0 0
        %1075 = vmatpush2.bf16.msra.mxu0 0
        %1076 = vmatprep.mubr.bf16.mxu0 0
        %1077 = vmatmul.mubr.bf16.gmra.mxu0 %v1039
        %v1078 = vpop.f32.mrf.mxu0
        %v1079 = vadd.f32 %v1032, %v1078
        %v1080 = vpop.f32.mrf.mxu0
        %v1081 = vpop.f32.mrf.mxu0
        %v1082 = vadd.f32 %v1035, %v1081
        %v1083 = vpop.f32.mrf.mxu0
        %1084 = vdwg.mxu0
        %v1085 = vpack.c.bf16 %v878, %v875
        %s1086 = scalar_lea.vmem %s4, 8
        %v1087 = vld [vmem:[%s1086] sm:$0xf]
        %v1089 = vsel %vm565, %v1085, 0
        %v1092 = vsel %vm993, %v1087, 0
        %1094 = vmatprep.subr.bf16.mxu0 0
        %1095 = vmatpush1.bf16.msra.mxu0 0
        %1096 = vmatprep.subr.bf16.mxu0 0
        %1097 = vmatpush1.bf16.msra.mxu0 0
        %1098 = vmatprep.subr.bf16.mxu0 0
        %1099 = vmatpush1.bf16.msra.mxu0 0
        %1100 = vmatprep.subr.bf16.mxu0 0
        %1101 = vmatpush1.bf16.msra.mxu0 0
        %1102 = vmatprep.subr.bf16.mxu0 0
        %1103 = vmatpush1.bf16.msra.mxu0 0
        %1104 = vmatprep.subr.bf16.mxu0 0
        %1105 = vmatpush1.bf16.msra.mxu0 0
        %1106 = vmatprep.subr.bf16.mxu0 0
        %1107 = vmatpush1.bf16.msra.mxu0 0
        %1108 = vmatprep.subr.bf16.mxu0 0
        %1109 = vmatpush1.bf16.msra.mxu0 %v1092
        %1110 = vmatprep.subr.bf16.mxu0 0
        %1111 = vmatpush2.bf16.msra.mxu0 0
        %1112 = vmatprep.subr.bf16.mxu0 0
        %1113 = vmatpush2.bf16.msra.mxu0 0
        %1114 = vmatprep.subr.bf16.mxu0 0
        %1115 = vmatpush2.bf16.msra.mxu0 0
        %1116 = vmatprep.subr.bf16.mxu0 0
        %1117 = vmatpush2.bf16.msra.mxu0 0
        %1118 = vmatprep.subr.bf16.mxu0 0
        %1119 = vmatpush2.bf16.msra.mxu0 0
        %1120 = vmatprep.subr.bf16.mxu0 0
        %1121 = vmatpush2.bf16.msra.mxu0 0
        %1122 = vmatprep.subr.bf16.mxu0 0
        %1123 = vmatpush2.bf16.msra.mxu0 0
        %1124 = vmatprep.subr.bf16.mxu0 0
        %1125 = vmatpush2.bf16.msra.mxu0 0
        %1126 = vmatprep.mubr.bf16.mxu0 0
        %1127 = vmatmul.mubr.bf16.gmra.mxu0 %v1089
        %v1128 = vpop.f32.mrf.mxu0
        %v1129 = vadd.f32 0.0, %v1128
        %v1130 = vpop.f32.mrf.mxu0
        %v1131 = vpop.f32.mrf.mxu0
        %v1132 = vadd.f32 0.0, %v1131
        %v1133 = vpop.f32.mrf.mxu0
        %1134 = vdwg.mxu0
        %v1135 = vadd.f32 %v1079, %v1129
        %v1136 = vadd.f32 %v1082, %v1132
        %v1137 = vpack.c.bf16 %v886, %v883
        %s1138 = scalar_lea.vmem %s4, 12
        %v1139 = vld [vmem:[%s1138] sm:$0xf]
        %v1141 = vsel %vm565, %v1137, 0
        %v1144 = vsel %vm993, %v1139, 0
        %1146 = vmatprep.subr.bf16.mxu0 0
        %1147 = vmatpush1.bf16.msra.mxu0 0
        %1148 = vmatprep.subr.bf16.mxu0 0
        %1149 = vmatpush1.bf16.msra.mxu0 0
        %1150 = vmatprep.subr.bf16.mxu0 0
        %1151 = vmatpush1.bf16.msra.mxu0 0
        %1152 = vmatprep.subr.bf16.mxu0 0
        %1153 = vmatpush1.bf16.msra.mxu0 0
        %1154 = vmatprep.subr.bf16.mxu0 0
        %1155 = vmatpush1.bf16.msra.mxu0 0
        %1156 = vmatprep.subr.bf16.mxu0 0
        %1157 = vmatpush1.bf16.msra.mxu0 0
        %1158 = vmatprep.subr.bf16.mxu0 0
        %1159 = vmatpush1.bf16.msra.mxu0 0
        %1160 = vmatprep.subr.bf16.mxu0 0
        %1161 = vmatpush1.bf16.msra.mxu0 %v1144
        %1162 = vmatprep.subr.bf16.mxu0 0
        %1163 = vmatpush2.bf16.msra.mxu0 0
        %1164 = vmatprep.subr.bf16.mxu0 0
        %1165 = vmatpush2.bf16.msra.mxu0 0
        %1166 = vmatprep.subr.bf16.mxu0 0
        %1167 = vmatpush2.bf16.msra.mxu0 0
        %1168 = vmatprep.subr.bf16.mxu0 0
        %1169 = vmatpush2.bf16.msra.mxu0 0
        %1170 = vmatprep.subr.bf16.mxu0 0
        %1171 = vmatpush2.bf16.msra.mxu0 0
        %1172 = vmatprep.subr.bf16.mxu0 0
        %1173 = vmatpush2.bf16.msra.mxu0 0
        %1174 = vmatprep.subr.bf16.mxu0 0
        %1175 = vmatpush2.bf16.msra.mxu0 0
        %1176 = vmatprep.subr.bf16.mxu0 0
        %1177 = vmatpush2.bf16.msra.mxu0 0
        %1178 = vmatprep.mubr.bf16.mxu0 0
        %1179 = vmatmul.mubr.bf16.gmra.mxu0 %v1141
        %v1180 = vpop.f32.mrf.mxu0
        %v1181 = vadd.f32 0.0, %v1180
        %v1182 = vpop.f32.mrf.mxu0
        %v1183 = vpop.f32.mrf.mxu0
        %v1184 = vadd.f32 0.0, %v1183
        %v1185 = vpop.f32.mrf.mxu0
        %1186 = vdwg.mxu0
        %v1187 = vadd.f32 %v1135, %v1181
        %v1188 = vadd.f32 %v1136, %v1184
        %v1189 = vpack.c.bf16 %v894, %v891
        %s1190 = scalar_lea.vmem %s4, 16
        %v1191 = vld [vmem:[%s1190] sm:$0xf]
        %v1193 = vsel %vm565, %v1189, 0
        %v1196 = vsel %vm993, %v1191, 0
        %1198 = vmatprep.subr.bf16.mxu0 0
        %1199 = vmatpush1.bf16.msra.mxu0 0
        %1200 = vmatprep.subr.bf16.mxu0 0
        %1201 = vmatpush1.bf16.msra.mxu0 0
        %1202 = vmatprep.subr.bf16.mxu0 0
        %1203 = vmatpush1.bf16.msra.mxu0 0
        %1204 = vmatprep.subr.bf16.mxu0 0
        %1205 = vmatpush1.bf16.msra.mxu0 0
        %1206 = vmatprep.subr.bf16.mxu0 0
        %1207 = vmatpush1.bf16.msra.mxu0 0
        %1208 = vmatprep.subr.bf16.mxu0 0
        %1209 = vmatpush1.bf16.msra.mxu0 0
        %1210 = vmatprep.subr.bf16.mxu0 0
        %1211 = vmatpush1.bf16.msra.mxu0 0
        %1212 = vmatprep.subr.bf16.mxu0 0
        %1213 = vmatpush1.bf16.msra.mxu0 %v1196
        %1214 = vmatprep.subr.bf16.mxu0 0
        %1215 = vmatpush2.bf16.msra.mxu0 0
        %1216 = vmatprep.subr.bf16.mxu0 0
        %1217 = vmatpush2.bf16.msra.mxu0 0
        %1218 = vmatprep.subr.bf16.mxu0 0
        %1219 = vmatpush2.bf16.msra.mxu0 0
        %1220 = vmatprep.subr.bf16.mxu0 0
        %1221 = vmatpush2.bf16.msra.mxu0 0
        %1222 = vmatprep.subr.bf16.mxu0 0
        %1223 = vmatpush2.bf16.msra.mxu0 0
        %1224 = vmatprep.subr.bf16.mxu0 0
        %1225 = vmatpush2.bf16.msra.mxu0 0
        %1226 = vmatprep.subr.bf16.mxu0 0
        %1227 = vmatpush2.bf16.msra.mxu0 0
        %1228 = vmatprep.subr.bf16.mxu0 0
        %1229 = vmatpush2.bf16.msra.mxu0 0
        %1230 = vmatprep.mubr.bf16.mxu0 0
        %1231 = vmatmul.mubr.bf16.gmra.mxu0 %v1193
        %v1232 = vpop.f32.mrf.mxu0
        %v1233 = vadd.f32 0.0, %v1232
        %v1234 = vpop.f32.mrf.mxu0
        %v1235 = vpop.f32.mrf.mxu0
        %v1236 = vadd.f32 0.0, %v1235
        %v1237 = vpop.f32.mrf.mxu0
        %1238 = vdwg.mxu0
        %v1239 = vadd.f32 %v1187, %v1233
        %v1240 = vadd.f32 %v1188, %v1236
        %v1241 = vpack.c.bf16 %v902, %v899
        %s1242 = scalar_lea.vmem %s4, 20
        %v1243 = vld [vmem:[%s1242] sm:$0xf]
        %v1245 = vsel %vm565, %v1241, 0
        %v1248 = vsel %vm993, %v1243, 0
        %1250 = vmatprep.subr.bf16.mxu0 0
        %1251 = vmatpush1.bf16.msra.mxu0 0
        %1252 = vmatprep.subr.bf16.mxu0 0
        %1253 = vmatpush1.bf16.msra.mxu0 0
        %1254 = vmatprep.subr.bf16.mxu0 0
        %1255 = vmatpush1.bf16.msra.mxu0 0
        %1256 = vmatprep.subr.bf16.mxu0 0
        %1257 = vmatpush1.bf16.msra.mxu0 0
        %1258 = vmatprep.subr.bf16.mxu0 0
        %1259 = vmatpush1.bf16.msra.mxu0 0
        %1260 = vmatprep.subr.bf16.mxu0 0
        %1261 = vmatpush1.bf16.msra.mxu0 0
        %1262 = vmatprep.subr.bf16.mxu0 0
        %1263 = vmatpush1.bf16.msra.mxu0 0
        %1264 = vmatprep.subr.bf16.mxu0 0
        %1265 = vmatpush1.bf16.msra.mxu0 %v1248
        %1266 = vmatprep.subr.bf16.mxu0 0
        %1267 = vmatpush2.bf16.msra.mxu0 0
        %1268 = vmatprep.subr.bf16.mxu0 0
        %1269 = vmatpush2.bf16.msra.mxu0 0
        %1270 = vmatprep.subr.bf16.mxu0 0
        %1271 = vmatpush2.bf16.msra.mxu0 0
        %1272 = vmatprep.subr.bf16.mxu0 0
        %1273 = vmatpush2.bf16.msra.mxu0 0
        %1274 = vmatprep.subr.bf16.mxu0 0
        %1275 = vmatpush2.bf16.msra.mxu0 0
        %1276 = vmatprep.subr.bf16.mxu0 0
        %1277 = vmatpush2.bf16.msra.mxu0 0
        %1278 = vmatprep.subr.bf16.mxu0 0
        %1279 = vmatpush2.bf16.msra.mxu0 0
        %1280 = vmatprep.subr.bf16.mxu0 0
        %1281 = vmatpush2.bf16.msra.mxu0 0
        %1282 = vmatprep.mubr.bf16.mxu0 0
        %1283 = vmatmul.mubr.bf16.gmra.mxu0 %v1245
        %v1284 = vpop.f32.mrf.mxu0
        %v1285 = vadd.f32 0.0, %v1284
        %v1286 = vpop.f32.mrf.mxu0
        %v1287 = vpop.f32.mrf.mxu0
        %v1288 = vadd.f32 0.0, %v1287
        %v1289 = vpop.f32.mrf.mxu0
        %1290 = vdwg.mxu0
        %v1291 = vadd.f32 %v1239, %v1285
        %v1292 = vadd.f32 %v1240, %v1288
        %v1293 = vpack.c.bf16 %v910, %v907
        %s1294 = scalar_lea.vmem %s4, 24
        %v1295 = vld [vmem:[%s1294] sm:$0xf]
        %v1297 = vsel %vm565, %v1293, 0
        %v1300 = vsel %vm993, %v1295, 0
        %1302 = vmatprep.subr.bf16.mxu0 0
        %1303 = vmatpush1.bf16.msra.mxu0 0
        %1304 = vmatprep.subr.bf16.mxu0 0
        %1305 = vmatpush1.bf16.msra.mxu0 0
        %1306 = vmatprep.subr.bf16.mxu0 0
        %1307 = vmatpush1.bf16.msra.mxu0 0
        %1308 = vmatprep.subr.bf16.mxu0 0
        %1309 = vmatpush1.bf16.msra.mxu0 0
        %1310 = vmatprep.subr.bf16.mxu0 0
        %1311 = vmatpush1.bf16.msra.mxu0 0
        %1312 = vmatprep.subr.bf16.mxu0 0
        %1313 = vmatpush1.bf16.msra.mxu0 0
        %1314 = vmatprep.subr.bf16.mxu0 0
        %1315 = vmatpush1.bf16.msra.mxu0 0
        %1316 = vmatprep.subr.bf16.mxu0 0
        %1317 = vmatpush1.bf16.msra.mxu0 %v1300
        %1318 = vmatprep.subr.bf16.mxu0 0
        %1319 = vmatpush2.bf16.msra.mxu0 0
        %1320 = vmatprep.subr.bf16.mxu0 0
        %1321 = vmatpush2.bf16.msra.mxu0 0
        %1322 = vmatprep.subr.bf16.mxu0 0
        %1323 = vmatpush2.bf16.msra.mxu0 0
        %1324 = vmatprep.subr.bf16.mxu0 0
        %1325 = vmatpush2.bf16.msra.mxu0 0
        %1326 = vmatprep.subr.bf16.mxu0 0
        %1327 = vmatpush2.bf16.msra.mxu0 0
        %1328 = vmatprep.subr.bf16.mxu0 0
        %1329 = vmatpush2.bf16.msra.mxu0 0
        %1330 = vmatprep.subr.bf16.mxu0 0
        %1331 = vmatpush2.bf16.msra.mxu0 0
        %1332 = vmatprep.subr.bf16.mxu0 0
        %1333 = vmatpush2.bf16.msra.mxu0 0
        %1334 = vmatprep.mubr.bf16.mxu0 0
        %1335 = vmatmul.mubr.bf16.gmra.mxu0 %v1297
        %v1336 = vpop.f32.mrf.mxu0
        %v1337 = vadd.f32 0.0, %v1336
        %v1338 = vpop.f32.mrf.mxu0
        %v1339 = vpop.f32.mrf.mxu0
        %v1340 = vadd.f32 0.0, %v1339
        %v1341 = vpop.f32.mrf.mxu0
        %1342 = vdwg.mxu0
        %v1343 = vadd.f32 %v1291, %v1337
        %v1344 = vadd.f32 %v1292, %v1340
        %v1345 = vpack.c.bf16 %v918, %v915
        %s1346 = scalar_lea.vmem %s4, 28
        %v1347 = vld [vmem:[%s1346] sm:$0xf]
        %v1349 = vsel %vm565, %v1345, 0
        %v1352 = vsel %vm993, %v1347, 0
        %1354 = vmatprep.subr.bf16.mxu0 0
        %1355 = vmatpush1.bf16.msra.mxu0 0
        %1356 = vmatprep.subr.bf16.mxu0 0
        %1357 = vmatpush1.bf16.msra.mxu0 0
        %1358 = vmatprep.subr.bf16.mxu0 0
        %1359 = vmatpush1.bf16.msra.mxu0 0
        %1360 = vmatprep.subr.bf16.mxu0 0
        %1361 = vmatpush1.bf16.msra.mxu0 0
        %1362 = vmatprep.subr.bf16.mxu0 0
        %1363 = vmatpush1.bf16.msra.mxu0 0
        %1364 = vmatprep.subr.bf16.mxu0 0
        %1365 = vmatpush1.bf16.msra.mxu0 0
        %1366 = vmatprep.subr.bf16.mxu0 0
        %1367 = vmatpush1.bf16.msra.mxu0 0
        %1368 = vmatprep.subr.bf16.mxu0 0
        %1369 = vmatpush1.bf16.msra.mxu0 %v1352
        %1370 = vmatprep.subr.bf16.mxu0 0
        %1371 = vmatpush2.bf16.msra.mxu0 0
        %1372 = vmatprep.subr.bf16.mxu0 0
        %1373 = vmatpush2.bf16.msra.mxu0 0
        %1374 = vmatprep.subr.bf16.mxu0 0
        %1375 = vmatpush2.bf16.msra.mxu0 0
        %1376 = vmatprep.subr.bf16.mxu0 0
        %1377 = vmatpush2.bf16.msra.mxu0 0
        %1378 = vmatprep.subr.bf16.mxu0 0
        %1379 = vmatpush2.bf16.msra.mxu0 0
        %1380 = vmatprep.subr.bf16.mxu0 0
        %1381 = vmatpush2.bf16.msra.mxu0 0
        %1382 = vmatprep.subr.bf16.mxu0 0
        %1383 = vmatpush2.bf16.msra.mxu0 0
        %1384 = vmatprep.subr.bf16.mxu0 0
        %1385 = vmatpush2.bf16.msra.mxu0 0
        %1386 = vmatprep.mubr.bf16.mxu0 0
        %1387 = vmatmul.mubr.bf16.gmra.mxu0 %v1349
        %v1388 = vpop.f32.mrf.mxu0
        %v1389 = vadd.f32 0.0, %v1388
        %v1390 = vpop.f32.mrf.mxu0
        %v1391 = vpop.f32.mrf.mxu0
        %v1392 = vadd.f32 0.0, %v1391
        %v1393 = vpop.f32.mrf.mxu0
        %1394 = vdwg.mxu0
        %v1395 = vadd.f32 %v1343, %v1389
        %v1396 = vadd.f32 %v1344, %v1392
        %v1397 = vpack.c.bf16 %v926, %v923
        %s1398 = scalar_lea.vmem %s4, 32
        %v1399 = vld [vmem:[%s1398] sm:$0xf]
        %v1401 = vsel %vm565, %v1397, 0
        %v1404 = vsel %vm993, %v1399, 0
        %1406 = vmatprep.subr.bf16.mxu0 0
        %1407 = vmatpush1.bf16.msra.mxu0 0
        %1408 = vmatprep.subr.bf16.mxu0 0
        %1409 = vmatpush1.bf16.msra.mxu0 0
        %1410 = vmatprep.subr.bf16.mxu0 0
        %1411 = vmatpush1.bf16.msra.mxu0 0
        %1412 = vmatprep.subr.bf16.mxu0 0
        %1413 = vmatpush1.bf16.msra.mxu0 0
        %1414 = vmatprep.subr.bf16.mxu0 0
        %1415 = vmatpush1.bf16.msra.mxu0 0
        %1416 = vmatprep.subr.bf16.mxu0 0
        %1417 = vmatpush1.bf16.msra.mxu0 0
        %1418 = vmatprep.subr.bf16.mxu0 0
        %1419 = vmatpush1.bf16.msra.mxu0 0
        %1420 = vmatprep.subr.bf16.mxu0 0
        %1421 = vmatpush1.bf16.msra.mxu0 %v1404
        %1422 = vmatprep.subr.bf16.mxu0 0
        %1423 = vmatpush2.bf16.msra.mxu0 0
        %1424 = vmatprep.subr.bf16.mxu0 0
        %1425 = vmatpush2.bf16.msra.mxu0 0
        %1426 = vmatprep.subr.bf16.mxu0 0
        %1427 = vmatpush2.bf16.msra.mxu0 0
        %1428 = vmatprep.subr.bf16.mxu0 0
        %1429 = vmatpush2.bf16.msra.mxu0 0
        %1430 = vmatprep.subr.bf16.mxu0 0
        %1431 = vmatpush2.bf16.msra.mxu0 0
        %1432 = vmatprep.subr.bf16.mxu0 0
        %1433 = vmatpush2.bf16.msra.mxu0 0
        %1434 = vmatprep.subr.bf16.mxu0 0
        %1435 = vmatpush2.bf16.msra.mxu0 0
        %1436 = vmatprep.subr.bf16.mxu0 0
        %1437 = vmatpush2.bf16.msra.mxu0 0
        %1438 = vmatprep.mubr.bf16.mxu0 0
        %1439 = vmatmul.mubr.bf16.gmra.mxu0 %v1401
        %v1440 = vpop.f32.mrf.mxu0
        %v1441 = vadd.f32 0.0, %v1440
        %v1442 = vpop.f32.mrf.mxu0
        %v1443 = vpop.f32.mrf.mxu0
        %v1444 = vadd.f32 0.0, %v1443
        %v1445 = vpop.f32.mrf.mxu0
        %1446 = vdwg.mxu0
        %v1447 = vadd.f32 %v1395, %v1441
        %v1448 = vadd.f32 %v1396, %v1444
        %v1449 = vpack.c.bf16 %v934, %v931
        %s1450 = scalar_lea.vmem %s4, 36
        %v1451 = vld [vmem:[%s1450] sm:$0xf]
        %v1453 = vsel %vm565, %v1449, 0
        %v1456 = vsel %vm993, %v1451, 0
        %1458 = vmatprep.subr.bf16.mxu0 0
        %1459 = vmatpush1.bf16.msra.mxu0 0
        %1460 = vmatprep.subr.bf16.mxu0 0
        %1461 = vmatpush1.bf16.msra.mxu0 0
        %1462 = vmatprep.subr.bf16.mxu0 0
        %1463 = vmatpush1.bf16.msra.mxu0 0
        %1464 = vmatprep.subr.bf16.mxu0 0
        %1465 = vmatpush1.bf16.msra.mxu0 0
        %1466 = vmatprep.subr.bf16.mxu0 0
        %1467 = vmatpush1.bf16.msra.mxu0 0
        %1468 = vmatprep.subr.bf16.mxu0 0
        %1469 = vmatpush1.bf16.msra.mxu0 0
        %1470 = vmatprep.subr.bf16.mxu0 0
        %1471 = vmatpush1.bf16.msra.mxu0 0
        %1472 = vmatprep.subr.bf16.mxu0 0
        %1473 = vmatpush1.bf16.msra.mxu0 %v1456
        %1474 = vmatprep.subr.bf16.mxu0 0
        %1475 = vmatpush2.bf16.msra.mxu0 0
        %1476 = vmatprep.subr.bf16.mxu0 0
        %1477 = vmatpush2.bf16.msra.mxu0 0
        %1478 = vmatprep.subr.bf16.mxu0 0
        %1479 = vmatpush2.bf16.msra.mxu0 0
        %1480 = vmatprep.subr.bf16.mxu0 0
        %1481 = vmatpush2.bf16.msra.mxu0 0
        %1482 = vmatprep.subr.bf16.mxu0 0
        %1483 = vmatpush2.bf16.msra.mxu0 0
        %1484 = vmatprep.subr.bf16.mxu0 0
        %1485 = vmatpush2.bf16.msra.mxu0 0
        %1486 = vmatprep.subr.bf16.mxu0 0
        %1487 = vmatpush2.bf16.msra.mxu0 0
        %1488 = vmatprep.subr.bf16.mxu0 0
        %1489 = vmatpush2.bf16.msra.mxu0 0
        %1490 = vmatprep.mubr.bf16.mxu0 0
        %1491 = vmatmul.mubr.bf16.gmra.mxu0 %v1453
        %v1492 = vpop.f32.mrf.mxu0
        %v1493 = vadd.f32 0.0, %v1492
        %v1494 = vpop.f32.mrf.mxu0
        %v1495 = vpop.f32.mrf.mxu0
        %v1496 = vadd.f32 0.0, %v1495
        %v1497 = vpop.f32.mrf.mxu0
        %1498 = vdwg.mxu0
        %v1499 = vadd.f32 %v1447, %v1493
        %v1500 = vadd.f32 %v1448, %v1496
        %v1501 = vpack.c.bf16 %v942, %v939
        %s1502 = scalar_lea.vmem %s4, 40
        %v1503 = vld [vmem:[%s1502] sm:$0xf]
        %v1505 = vsel %vm565, %v1501, 0
        %v1508 = vsel %vm993, %v1503, 0
        %1510 = vmatprep.subr.bf16.mxu0 0
        %1511 = vmatpush1.bf16.msra.mxu0 0
        %1512 = vmatprep.subr.bf16.mxu0 0
        %1513 = vmatpush1.bf16.msra.mxu0 0
        %1514 = vmatprep.subr.bf16.mxu0 0
        %1515 = vmatpush1.bf16.msra.mxu0 0
        %1516 = vmatprep.subr.bf16.mxu0 0
        %1517 = vmatpush1.bf16.msra.mxu0 0
        %1518 = vmatprep.subr.bf16.mxu0 0
        %1519 = vmatpush1.bf16.msra.mxu0 0
        %1520 = vmatprep.subr.bf16.mxu0 0
        %1521 = vmatpush1.bf16.msra.mxu0 0
        %1522 = vmatprep.subr.bf16.mxu0 0
        %1523 = vmatpush1.bf16.msra.mxu0 0
        %1524 = vmatprep.subr.bf16.mxu0 0
        %1525 = vmatpush1.bf16.msra.mxu0 %v1508
        %1526 = vmatprep.subr.bf16.mxu0 0
        %1527 = vmatpush2.bf16.msra.mxu0 0
        %1528 = vmatprep.subr.bf16.mxu0 0
        %1529 = vmatpush2.bf16.msra.mxu0 0
        %1530 = vmatprep.subr.bf16.mxu0 0
        %1531 = vmatpush2.bf16.msra.mxu0 0
        %1532 = vmatprep.subr.bf16.mxu0 0
        %1533 = vmatpush2.bf16.msra.mxu0 0
        %1534 = vmatprep.subr.bf16.mxu0 0
        %1535 = vmatpush2.bf16.msra.mxu0 0
        %1536 = vmatprep.subr.bf16.mxu0 0
        %1537 = vmatpush2.bf16.msra.mxu0 0
        %1538 = vmatprep.subr.bf16.mxu0 0
        %1539 = vmatpush2.bf16.msra.mxu0 0
        %1540 = vmatprep.subr.bf16.mxu0 0
        %1541 = vmatpush2.bf16.msra.mxu0 0
        %1542 = vmatprep.mubr.bf16.mxu0 0
        %1543 = vmatmul.mubr.bf16.gmra.mxu0 %v1505
        %v1544 = vpop.f32.mrf.mxu0
        %v1545 = vadd.f32 0.0, %v1544
        %v1546 = vpop.f32.mrf.mxu0
        %v1547 = vpop.f32.mrf.mxu0
        %v1548 = vadd.f32 0.0, %v1547
        %v1549 = vpop.f32.mrf.mxu0
        %1550 = vdwg.mxu0
        %v1551 = vadd.f32 %v1499, %v1545
        %v1552 = vadd.f32 %v1500, %v1548
        %v1553 = vpack.c.bf16 %v950, %v947
        %s1554 = scalar_lea.vmem %s4, 44
        %v1555 = vld [vmem:[%s1554] sm:$0xf]
        %v1557 = vsel %vm565, %v1553, 0
        %v1560 = vsel %vm993, %v1555, 0
        %1562 = vmatprep.subr.bf16.mxu0 0
        %1563 = vmatpush1.bf16.msra.mxu0 0
        %1564 = vmatprep.subr.bf16.mxu0 0
        %1565 = vmatpush1.bf16.msra.mxu0 0
        %1566 = vmatprep.subr.bf16.mxu0 0
        %1567 = vmatpush1.bf16.msra.mxu0 0
        %1568 = vmatprep.subr.bf16.mxu0 0
        %1569 = vmatpush1.bf16.msra.mxu0 0
        %1570 = vmatprep.subr.bf16.mxu0 0
        %1571 = vmatpush1.bf16.msra.mxu0 0
        %1572 = vmatprep.subr.bf16.mxu0 0
        %1573 = vmatpush1.bf16.msra.mxu0 0
        %1574 = vmatprep.subr.bf16.mxu0 0
        %1575 = vmatpush1.bf16.msra.mxu0 0
        %1576 = vmatprep.subr.bf16.mxu0 0
        %1577 = vmatpush1.bf16.msra.mxu0 %v1560
        %1578 = vmatprep.subr.bf16.mxu0 0
        %1579 = vmatpush2.bf16.msra.mxu0 0
        %1580 = vmatprep.subr.bf16.mxu0 0
        %1581 = vmatpush2.bf16.msra.mxu0 0
        %1582 = vmatprep.subr.bf16.mxu0 0
        %1583 = vmatpush2.bf16.msra.mxu0 0
        %1584 = vmatprep.subr.bf16.mxu0 0
        %1585 = vmatpush2.bf16.msra.mxu0 0
        %1586 = vmatprep.subr.bf16.mxu0 0
        %1587 = vmatpush2.bf16.msra.mxu0 0
        %1588 = vmatprep.subr.bf16.mxu0 0
        %1589 = vmatpush2.bf16.msra.mxu0 0
        %1590 = vmatprep.subr.bf16.mxu0 0
        %1591 = vmatpush2.bf16.msra.mxu0 0
        %1592 = vmatprep.subr.bf16.mxu0 0
        %1593 = vmatpush2.bf16.msra.mxu0 0
        %1594 = vmatprep.mubr.bf16.mxu0 0
        %1595 = vmatmul.mubr.bf16.gmra.mxu0 %v1557
        %v1596 = vpop.f32.mrf.mxu0
        %v1597 = vadd.f32 0.0, %v1596
        %v1598 = vpop.f32.mrf.mxu0
        %v1599 = vpop.f32.mrf.mxu0
        %v1600 = vadd.f32 0.0, %v1599
        %v1601 = vpop.f32.mrf.mxu0
        %1602 = vdwg.mxu0
        %v1603 = vadd.f32 %v1551, %v1597
        %v1604 = vadd.f32 %v1552, %v1600
        %v1605 = vpack.c.bf16 %v958, %v955
        %s1606 = scalar_lea.vmem %s4, 48
        %v1607 = vld [vmem:[%s1606] sm:$0xf]
        %v1609 = vsel %vm565, %v1605, 0
        %v1612 = vsel %vm993, %v1607, 0
        %1614 = vmatprep.subr.bf16.mxu0 0
        %1615 = vmatpush1.bf16.msra.mxu0 0
        %1616 = vmatprep.subr.bf16.mxu0 0
        %1617 = vmatpush1.bf16.msra.mxu0 0
        %1618 = vmatprep.subr.bf16.mxu0 0
        %1619 = vmatpush1.bf16.msra.mxu0 0
        %1620 = vmatprep.subr.bf16.mxu0 0
        %1621 = vmatpush1.bf16.msra.mxu0 0
        %1622 = vmatprep.subr.bf16.mxu0 0
        %1623 = vmatpush1.bf16.msra.mxu0 0
        %1624 = vmatprep.subr.bf16.mxu0 0
        %1625 = vmatpush1.bf16.msra.mxu0 0
        %1626 = vmatprep.subr.bf16.mxu0 0
        %1627 = vmatpush1.bf16.msra.mxu0 0
        %1628 = vmatprep.subr.bf16.mxu0 0
        %1629 = vmatpush1.bf16.msra.mxu0 %v1612
        %1630 = vmatprep.subr.bf16.mxu0 0
        %1631 = vmatpush2.bf16.msra.mxu0 0
        %1632 = vmatprep.subr.bf16.mxu0 0
        %1633 = vmatpush2.bf16.msra.mxu0 0
        %1634 = vmatprep.subr.bf16.mxu0 0
        %1635 = vmatpush2.bf16.msra.mxu0 0
        %1636 = vmatprep.subr.bf16.mxu0 0
        %1637 = vmatpush2.bf16.msra.mxu0 0
        %1638 = vmatprep.subr.bf16.mxu0 0
        %1639 = vmatpush2.bf16.msra.mxu0 0
        %1640 = vmatprep.subr.bf16.mxu0 0
        %1641 = vmatpush2.bf16.msra.mxu0 0
        %1642 = vmatprep.subr.bf16.mxu0 0
        %1643 = vmatpush2.bf16.msra.mxu0 0
        %1644 = vmatprep.subr.bf16.mxu0 0
        %1645 = vmatpush2.bf16.msra.mxu0 0
        %1646 = vmatprep.mubr.bf16.mxu0 0
        %1647 = vmatmul.mubr.bf16.gmra.mxu0 %v1609
        %v1648 = vpop.f32.mrf.mxu0
        %v1649 = vadd.f32 0.0, %v1648
        %v1650 = vpop.f32.mrf.mxu0
        %v1651 = vpop.f32.mrf.mxu0
        %v1652 = vadd.f32 0.0, %v1651
        %v1653 = vpop.f32.mrf.mxu0
        %1654 = vdwg.mxu0
        %v1655 = vadd.f32 %v1603, %v1649
        %v1656 = vadd.f32 %v1604, %v1652
        %v1657 = vpack.c.bf16 %v966, %v963
        %s1658 = scalar_lea.vmem %s4, 52
        %v1659 = vld [vmem:[%s1658] sm:$0xf]
        %v1661 = vsel %vm565, %v1657, 0
        %v1664 = vsel %vm993, %v1659, 0
        %1666 = vmatprep.subr.bf16.mxu0 0
        %1667 = vmatpush1.bf16.msra.mxu0 0
        %1668 = vmatprep.subr.bf16.mxu0 0
        %1669 = vmatpush1.bf16.msra.mxu0 0
        %1670 = vmatprep.subr.bf16.mxu0 0
        %1671 = vmatpush1.bf16.msra.mxu0 0
        %1672 = vmatprep.subr.bf16.mxu0 0
        %1673 = vmatpush1.bf16.msra.mxu0 0
        %1674 = vmatprep.subr.bf16.mxu0 0
        %1675 = vmatpush1.bf16.msra.mxu0 0
        %1676 = vmatprep.subr.bf16.mxu0 0
        %1677 = vmatpush1.bf16.msra.mxu0 0
        %1678 = vmatprep.subr.bf16.mxu0 0
        %1679 = vmatpush1.bf16.msra.mxu0 0
        %1680 = vmatprep.subr.bf16.mxu0 0
        %1681 = vmatpush1.bf16.msra.mxu0 %v1664
        %1682 = vmatprep.subr.bf16.mxu0 0
        %1683 = vmatpush2.bf16.msra.mxu0 0
        %1684 = vmatprep.subr.bf16.mxu0 0
        %1685 = vmatpush2.bf16.msra.mxu0 0
        %1686 = vmatprep.subr.bf16.mxu0 0
        %1687 = vmatpush2.bf16.msra.mxu0 0
        %1688 = vmatprep.subr.bf16.mxu0 0
        %1689 = vmatpush2.bf16.msra.mxu0 0
        %1690 = vmatprep.subr.bf16.mxu0 0
        %1691 = vmatpush2.bf16.msra.mxu0 0
        %1692 = vmatprep.subr.bf16.mxu0 0
        %1693 = vmatpush2.bf16.msra.mxu0 0
        %1694 = vmatprep.subr.bf16.mxu0 0
        %1695 = vmatpush2.bf16.msra.mxu0 0
        %1696 = vmatprep.subr.bf16.mxu0 0
        %1697 = vmatpush2.bf16.msra.mxu0 0
        %1698 = vmatprep.mubr.bf16.mxu0 0
        %1699 = vmatmul.mubr.bf16.gmra.mxu0 %v1661
        %v1700 = vpop.f32.mrf.mxu0
        %v1701 = vadd.f32 0.0, %v1700
        %v1702 = vpop.f32.mrf.mxu0
        %v1703 = vpop.f32.mrf.mxu0
        %v1704 = vadd.f32 0.0, %v1703
        %v1705 = vpop.f32.mrf.mxu0
        %1706 = vdwg.mxu0
        %v1707 = vadd.f32 %v1655, %v1701
        %v1708 = vadd.f32 %v1656, %v1704
        %v1709 = vpack.c.bf16 %v974, %v971
        %s1710 = scalar_lea.vmem %s4, 56
        %v1711 = vld [vmem:[%s1710] sm:$0xf]
        %v1713 = vsel %vm565, %v1709, 0
        %v1716 = vsel %vm993, %v1711, 0
        %1718 = vmatprep.subr.bf16.mxu0 0
        %1719 = vmatpush1.bf16.msra.mxu0 0
        %1720 = vmatprep.subr.bf16.mxu0 0
        %1721 = vmatpush1.bf16.msra.mxu0 0
        %1722 = vmatprep.subr.bf16.mxu0 0
        %1723 = vmatpush1.bf16.msra.mxu0 0
        %1724 = vmatprep.subr.bf16.mxu0 0
        %1725 = vmatpush1.bf16.msra.mxu0 0
        %1726 = vmatprep.subr.bf16.mxu0 0
        %1727 = vmatpush1.bf16.msra.mxu0 0
        %1728 = vmatprep.subr.bf16.mxu0 0
        %1729 = vmatpush1.bf16.msra.mxu0 0
        %1730 = vmatprep.subr.bf16.mxu0 0
        %1731 = vmatpush1.bf16.msra.mxu0 0
        %1732 = vmatprep.subr.bf16.mxu0 0
        %1733 = vmatpush1.bf16.msra.mxu0 %v1716
        %1734 = vmatprep.subr.bf16.mxu0 0
        %1735 = vmatpush2.bf16.msra.mxu0 0
        %1736 = vmatprep.subr.bf16.mxu0 0
        %1737 = vmatpush2.bf16.msra.mxu0 0
        %1738 = vmatprep.subr.bf16.mxu0 0
        %1739 = vmatpush2.bf16.msra.mxu0 0
        %1740 = vmatprep.subr.bf16.mxu0 0
        %1741 = vmatpush2.bf16.msra.mxu0 0
        %1742 = vmatprep.subr.bf16.mxu0 0
        %1743 = vmatpush2.bf16.msra.mxu0 0
        %1744 = vmatprep.subr.bf16.mxu0 0
        %1745 = vmatpush2.bf16.msra.mxu0 0
        %1746 = vmatprep.subr.bf16.mxu0 0
        %1747 = vmatpush2.bf16.msra.mxu0 0
        %1748 = vmatprep.subr.bf16.mxu0 0
        %1749 = vmatpush2.bf16.msra.mxu0 0
        %1750 = vmatprep.mubr.bf16.mxu0 0
        %1751 = vmatmul.mubr.bf16.gmra.mxu0 %v1713
        %v1752 = vpop.f32.mrf.mxu0
        %v1753 = vadd.f32 0.0, %v1752
        %v1754 = vpop.f32.mrf.mxu0
        %v1755 = vpop.f32.mrf.mxu0
        %v1756 = vadd.f32 0.0, %v1755
        %v1757 = vpop.f32.mrf.mxu0
        %1758 = vdwg.mxu0
        %v1759 = vadd.f32 %v1707, %v1753
        %v1760 = vadd.f32 %v1708, %v1756
        %v1761 = vpack.c.bf16 %v982, %v979
        %s1762 = scalar_lea.vmem %s4, 60
        %v1763 = vld [vmem:[%s1762] sm:$0xf]
        %v1765 = vsel %vm565, %v1761, 0
        %v1768 = vsel %vm993, %v1763, 0
        %1770 = vmatprep.subr.bf16.mxu0 0
        %1771 = vmatpush1.bf16.msra.mxu0 0
        %1772 = vmatprep.subr.bf16.mxu0 0
        %1773 = vmatpush1.bf16.msra.mxu0 0
        %1774 = vmatprep.subr.bf16.mxu0 0
        %1775 = vmatpush1.bf16.msra.mxu0 0
        %1776 = vmatprep.subr.bf16.mxu0 0
        %1777 = vmatpush1.bf16.msra.mxu0 0
        %1778 = vmatprep.subr.bf16.mxu0 0
        %1779 = vmatpush1.bf16.msra.mxu0 0
        %1780 = vmatprep.subr.bf16.mxu0 0
        %1781 = vmatpush1.bf16.msra.mxu0 0
        %1782 = vmatprep.subr.bf16.mxu0 0
        %1783 = vmatpush1.bf16.msra.mxu0 0
        %1784 = vmatprep.subr.bf16.mxu0 0
        %1785 = vmatpush1.bf16.msra.mxu0 %v1768
        %1786 = vmatprep.subr.bf16.mxu0 0
        %1787 = vmatpush2.bf16.msra.mxu0 0
        %1788 = vmatprep.subr.bf16.mxu0 0
        %1789 = vmatpush2.bf16.msra.mxu0 0
        %1790 = vmatprep.subr.bf16.mxu0 0
        %1791 = vmatpush2.bf16.msra.mxu0 0
        %1792 = vmatprep.subr.bf16.mxu0 0
        %1793 = vmatpush2.bf16.msra.mxu0 0
        %1794 = vmatprep.subr.bf16.mxu0 0
        %1795 = vmatpush2.bf16.msra.mxu0 0
        %1796 = vmatprep.subr.bf16.mxu0 0
        %1797 = vmatpush2.bf16.msra.mxu0 0
        %1798 = vmatprep.subr.bf16.mxu0 0
        %1799 = vmatpush2.bf16.msra.mxu0 0
        %1800 = vmatprep.subr.bf16.mxu0 0
        %1801 = vmatpush2.bf16.msra.mxu0 0
        %1802 = vmatprep.mubr.bf16.mxu0 0
        %1803 = vmatmul.mubr.bf16.gmra.mxu0 %v1765
        %v1804 = vpop.f32.mrf.mxu0
        %v1805 = vadd.f32 0.0, %v1804
        %v1806 = vpop.f32.mrf.mxu0
        %v1807 = vpop.f32.mrf.mxu0
        %v1808 = vadd.f32 0.0, %v1807
        %v1809 = vpop.f32.mrf.mxu0
        %1810 = vdwg.mxu0
        %v1811 = vadd.f32 %v1759, %v1805
        %v1812 = vadd.f32 %v1760, %v1808
        %v1813 = vld [vmem:[%s5] sm:$0x1]
        %v1815 = vlaneseq
        %v1816 = vshrl.u32 %v1815, 7
        %v1817 = vsub.s32 0, %v1816
        %v1818 = vrot.slane %v1813, %v1817
        %v1820 = vadd.f32 %v1811, %v1818
        %v1821 = vadd.f32 %v1812, %v1818
        %vm1822 = vcmask 130048
        %v1823 = vsel %vm1822, %v1820, 0.0
        %v1824 = vsel %vm1822, %v1821, 0.0
        %v1825 = vadd.f32 %v1823, %v1824
        %v1826 = vrot.slane %v1825, 4
        %v1827 = vadd.f32 %v1825, %v1826
        %v1828 = vrot.slane %v1827, 2
        %v1829 = vadd.f32 %v1827, %v1828
        %v1830 = vrot.slane %v1829, 1
        %v1831 = vadd.f32 %v1829, %v1830
        %v1832 = vmul.f32 %v1831, 0.0625
        %v1833 = vsub.f32 %v1820, %v1832
        %v1834 = vsub.f32 %v1821, %v1832
        %v1835 = vmul.f32 %v1833, %v1833
        %v1836 = vmul.f32 %v1834, %v1834
        %v1837 = vsel %vm1822, %v1835, 0.0
        %v1838 = vsel %vm1822, %v1836, 0.0
        %v1839 = vadd.f32 %v1837, %v1838
        %v1840 = vrot.slane %v1839, 4
        %v1841 = vadd.f32 %v1839, %v1840
        %v1842 = vrot.slane %v1841, 2
        %v1843 = vadd.f32 %v1841, %v1842
        %v1844 = vrot.slane %v1843, 1
        %v1845 = vadd.f32 %v1843, %v1844
        %v1846 = vmul.f32 %v1845, 0.0625
        %v1847 = vadd.f32 %v1846, 1e-05
        %v1848 = vrsqrt.pop %v1847
        %v1849 = vmul.f32 %v1833, %v1848
        %v1850 = vmul.f32 %v1834, %v1848
        %vm1851 = vcmp.gt.f32.partialorder %v1849, 0.0
        %vm1852 = vcmp.gt.f32.partialorder %v1850, 0.0
        %v1853 = vmul.f32 %v1849, 0.2
        %v1854 = vmul.f32 %v1850, 0.2
        %v1855 = vsel %vm1851, %v1849, %v1853
        %v1856 = vsel %vm1852, %v1850, %v1854
        %v1857 = vld [vmem:[%s6] sm:$0xf]
        %v1858 = vld [vmem:[%s6 + $0x4] sm:$0xf]
        %v1859 = vld [vmem:[%s6 + $0x8] sm:$0xf]
        %v1860 = vld [vmem:[%s6 + $0xc] sm:$0xf]
        %v1861 = vld [vmem:[%s6 + $0x10] sm:$0xf]
        %v1862 = vld [vmem:[%s6 + $0x14] sm:$0xf]
        %v1863 = vld [vmem:[%s6 + $0x18] sm:$0xf]
        %v1864 = vld [vmem:[%s6 + $0x1c] sm:$0xf]
        %v1865 = vld [vmem:[%s6 + $0x20] sm:$0xf]
        %v1866 = vld [vmem:[%s6 + $0x24] sm:$0xf]
        %v1867 = vld [vmem:[%s6 + $0x28] sm:$0xf]
        %v1868 = vld [vmem:[%s6 + $0x2c] sm:$0xf]
        %v1869 = vld [vmem:[%s6 + $0x30] sm:$0xf]
        %v1870 = vld [vmem:[%s6 + $0x34] sm:$0xf]
        %v1871 = vld [vmem:[%s6 + $0x38] sm:$0xf]
        %v1872 = vld [vmem:[%s6 + $0x3c] sm:$0xf]
        %v1873 = vld [vmem:[%s6 + $0x40] sm:$0xf]
        %v1874 = vld [vmem:[%s6 + $0x44] sm:$0xf]
        %v1875 = vld [vmem:[%s6 + $0x48] sm:$0xf]
        %v1876 = vld [vmem:[%s6 + $0x4c] sm:$0xf]
        %v1877 = vld [vmem:[%s6 + $0x50] sm:$0xf]
        %v1878 = vld [vmem:[%s6 + $0x54] sm:$0xf]
        %v1879 = vld [vmem:[%s6 + $0x58] sm:$0xf]
        %v1880 = vld [vmem:[%s6 + $0x5c] sm:$0xf]
        %v1881 = vld [vmem:[%s6 + $0x60] sm:$0xf]
        %v1882 = vld [vmem:[%s6 + $0x64] sm:$0xf]
        %v1883 = vld [vmem:[%s6 + $0x68] sm:$0xf]
        %v1884 = vld [vmem:[%s6 + $0x6c] sm:$0xf]
        %v1885 = vld [vmem:[%s6 + $0x70] sm:$0xf]
        %v1886 = vld [vmem:[%s6 + $0x74] sm:$0xf]
        %v1887 = vld [vmem:[%s6 + $0x78] sm:$0xf]
        %v1888 = vld [vmem:[%s6 + $0x7c] sm:$0xf]
        %v1889 = vpack.c.bf16 %v1856, %v1855
        %v1922 = vunpack.c.l.b16 %v1857
        %v1923 = vunpack.c.l.b16 %v1858
        %v1924 = vunpack.c.l.b16 %v1859
        %v1925 = vunpack.c.l.b16 %v1860
        %v1926 = vunpack.c.l.b16 %v1861
        %v1927 = vunpack.c.l.b16 %v1862
        %v1928 = vunpack.c.l.b16 %v1863
        %v1929 = vunpack.c.l.b16 %v1864
        %v1930 = vunpack.c.l.b16 %v1865
        %v1931 = vunpack.c.l.b16 %v1866
        %v1932 = vunpack.c.l.b16 %v1867
        %v1933 = vunpack.c.l.b16 %v1868
        %v1934 = vunpack.c.l.b16 %v1869
        %v1935 = vunpack.c.l.b16 %v1870
        %v1936 = vunpack.c.l.b16 %v1871
        %v1937 = vunpack.c.l.b16 %v1872
        %v1938 = vunpack.c.l.b16 %v1873
        %v1939 = vunpack.c.l.b16 %v1874
        %v1940 = vunpack.c.l.b16 %v1875
        %v1941 = vunpack.c.l.b16 %v1876
        %v1942 = vunpack.c.l.b16 %v1877
        %v1943 = vunpack.c.l.b16 %v1878
        %v1944 = vunpack.c.l.b16 %v1879
        %v1945 = vunpack.c.l.b16 %v1880
        %v1946 = vunpack.c.l.b16 %v1881
        %v1947 = vunpack.c.l.b16 %v1882
        %v1948 = vunpack.c.l.b16 %v1883
        %v1949 = vunpack.c.l.b16 %v1884
        %v1950 = vunpack.c.l.b16 %v1885
        %v1951 = vunpack.c.l.b16 %v1886
        %v1952 = vunpack.c.l.b16 %v1887
        %v1953 = vunpack.c.l.b16 %v1888
        %v1954 = vpack.c.b16 %v1923, %v1922
        %v1955 = vpack.c.b16 %v1925, %v1924
        %v1956 = vpack.c.b16 %v1927, %v1926
        %v1957 = vpack.c.b16 %v1929, %v1928
        %v1958 = vpack.c.b16 %v1931, %v1930
        %v1959 = vpack.c.b16 %v1933, %v1932
        %v1960 = vpack.c.b16 %v1935, %v1934
        %v1961 = vpack.c.b16 %v1937, %v1936
        %v1962 = vpack.c.b16 %v1939, %v1938
        %v1963 = vpack.c.b16 %v1941, %v1940
        %v1964 = vpack.c.b16 %v1943, %v1942
        %v1965 = vpack.c.b16 %v1945, %v1944
        %v1966 = vpack.c.b16 %v1947, %v1946
        %v1967 = vpack.c.b16 %v1949, %v1948
        %v1968 = vpack.c.b16 %v1951, %v1950
        %v1969 = vpack.c.b16 %v1953, %v1952
        %v1971 = vsel %vm1822, %v1954, 0
        %v1974 = vsel %vm1822, %v1955, 0
        %v1977 = vsel %vm1822, %v1956, 0
        %v1980 = vsel %vm1822, %v1957, 0
        %v1983 = vsel %vm1822, %v1958, 0
        %v1986 = vsel %vm1822, %v1959, 0
        %v1989 = vsel %vm1822, %v1960, 0
        %v1992 = vsel %vm1822, %v1961, 0
        %v1995 = vsel %vm1822, %v1962, 0
        %v1998 = vsel %vm1822, %v1963, 0
        %v2001 = vsel %vm1822, %v1964, 0
        %v2004 = vsel %vm1822, %v1965, 0
        %v2007 = vsel %vm1822, %v1966, 0
        %v2010 = vsel %vm1822, %v1967, 0
        %v2013 = vsel %vm1822, %v1968, 0
        %v2016 = vsel %vm1822, %v1969, 0
        %2018 = vmatprep.subr.bf16.mxu0 0
        %2019 = vmatpush1.bf16.msra.mxu0 0
        %2020 = vmatprep.subr.bf16.mxu0 0
        %2021 = vmatpush1.bf16.msra.mxu0 0
        %2022 = vmatprep.subr.bf16.mxu0 0
        %2023 = vmatpush1.bf16.msra.mxu0 0
        %2024 = vmatprep.subr.bf16.mxu0 0
        %2025 = vmatpush1.bf16.msra.mxu0 0
        %2026 = vmatprep.subr.bf16.mxu0 0
        %2027 = vmatpush1.bf16.msra.mxu0 0
        %2028 = vmatprep.subr.bf16.mxu0 0
        %2029 = vmatpush1.bf16.msra.mxu0 0
        %2030 = vmatprep.subr.bf16.mxu0 0
        %2031 = vmatpush1.bf16.msra.mxu0 0
        %2032 = vmatprep.subr.bf16.mxu0 0
        %2033 = vmatpush1.bf16.msra.mxu0 %v1889
        %2034 = vmatprep.subr.bf16.mxu0 0
        %2035 = vmatpush2.bf16.msra.mxu0 0
        %2036 = vmatprep.subr.bf16.mxu0 0
        %2037 = vmatpush2.bf16.msra.mxu0 0
        %2038 = vmatprep.subr.bf16.mxu0 0
        %2039 = vmatpush2.bf16.msra.mxu0 0
        %2040 = vmatprep.subr.bf16.mxu0 0
        %2041 = vmatpush2.bf16.msra.mxu0 0
        %2042 = vmatprep.subr.bf16.mxu0 0
        %2043 = vmatpush2.bf16.msra.mxu0 0
        %2044 = vmatprep.subr.bf16.mxu0 0
        %2045 = vmatpush2.bf16.msra.mxu0 0
        %2046 = vmatprep.subr.bf16.mxu0 0
        %2047 = vmatpush2.bf16.msra.mxu0 0
        %2048 = vmatprep.subr.bf16.mxu0 0
        %2049 = vmatpush2.bf16.msra.mxu0 0
        %2050 = vmatprep.mubr.bf16.mxu0 0
        %2051 = vmatmul.mubr.bf16.gmra.mxu0 %v1971
        %v2052 = vpop.f32.mrf.mxu0
        %v2053 = vadd.f32 0.0, %v2052
        %v2054 = vpop.f32.mrf.mxu0
        %v2055 = vpop.f32.mrf.mxu0
        %v2056 = vadd.f32 0.0, %v2055
        %v2057 = vpop.f32.mrf.mxu0
        %2058 = vmatprep.mubr.bf16.mxu0 0
        %2059 = vmatmul.mubr.bf16.gmra.mxu0 %v1974
        %v2060 = vpop.f32.mrf.mxu0
        %v2061 = vadd.f32 0.0, %v2060
        %v2062 = vpop.f32.mrf.mxu0
        %v2063 = vpop.f32.mrf.mxu0
        %v2064 = vadd.f32 0.0, %v2063
        %v2065 = vpop.f32.mrf.mxu0
        %2066 = vmatprep.mubr.bf16.mxu0 0
        %2067 = vmatmul.mubr.bf16.gmra.mxu0 %v1977
        %v2068 = vpop.f32.mrf.mxu0
        %v2069 = vadd.f32 0.0, %v2068
        %v2070 = vpop.f32.mrf.mxu0
        %v2071 = vpop.f32.mrf.mxu0
        %v2072 = vadd.f32 0.0, %v2071
        %v2073 = vpop.f32.mrf.mxu0
        %2074 = vmatprep.mubr.bf16.mxu0 0
        %2075 = vmatmul.mubr.bf16.gmra.mxu0 %v1980
        %v2076 = vpop.f32.mrf.mxu0
        %v2077 = vadd.f32 0.0, %v2076
        %v2078 = vpop.f32.mrf.mxu0
        %v2079 = vpop.f32.mrf.mxu0
        %v2080 = vadd.f32 0.0, %v2079
        %v2081 = vpop.f32.mrf.mxu0
        %2082 = vmatprep.mubr.bf16.mxu0 0
        %2083 = vmatmul.mubr.bf16.gmra.mxu0 %v1983
        %v2084 = vpop.f32.mrf.mxu0
        %v2085 = vadd.f32 0.0, %v2084
        %v2086 = vpop.f32.mrf.mxu0
        %v2087 = vpop.f32.mrf.mxu0
        %v2088 = vadd.f32 0.0, %v2087
        %v2089 = vpop.f32.mrf.mxu0
        %2090 = vmatprep.mubr.bf16.mxu0 0
        %2091 = vmatmul.mubr.bf16.gmra.mxu0 %v1986
        %v2092 = vpop.f32.mrf.mxu0
        %v2093 = vadd.f32 0.0, %v2092
        %v2094 = vpop.f32.mrf.mxu0
        %v2095 = vpop.f32.mrf.mxu0
        %v2096 = vadd.f32 0.0, %v2095
        %v2097 = vpop.f32.mrf.mxu0
        %2098 = vmatprep.mubr.bf16.mxu0 0
        %2099 = vmatmul.mubr.bf16.gmra.mxu0 %v1989
        %v2100 = vpop.f32.mrf.mxu0
        %v2101 = vadd.f32 0.0, %v2100
        %v2102 = vpop.f32.mrf.mxu0
        %v2103 = vpop.f32.mrf.mxu0
        %v2104 = vadd.f32 0.0, %v2103
        %v2105 = vpop.f32.mrf.mxu0
        %2106 = vmatprep.mubr.bf16.mxu0 0
        %2107 = vmatmul.mubr.bf16.gmra.mxu0 %v1992
        %v2108 = vpop.f32.mrf.mxu0
        %v2109 = vadd.f32 0.0, %v2108
        %v2110 = vpop.f32.mrf.mxu0
        %v2111 = vpop.f32.mrf.mxu0
        %v2112 = vadd.f32 0.0, %v2111
        %v2113 = vpop.f32.mrf.mxu0
        %2114 = vmatprep.mubr.bf16.mxu0 0
        %2115 = vmatmul.mubr.bf16.gmra.mxu0 %v1995
        %v2116 = vpop.f32.mrf.mxu0
        %v2117 = vadd.f32 0.0, %v2116
        %v2118 = vpop.f32.mrf.mxu0
        %v2119 = vpop.f32.mrf.mxu0
        %v2120 = vadd.f32 0.0, %v2119
        %v2121 = vpop.f32.mrf.mxu0
        %2122 = vmatprep.mubr.bf16.mxu0 0
        %2123 = vmatmul.mubr.bf16.gmra.mxu0 %v1998
        %v2124 = vpop.f32.mrf.mxu0
        %v2125 = vadd.f32 0.0, %v2124
        %v2126 = vpop.f32.mrf.mxu0
        %v2127 = vpop.f32.mrf.mxu0
        %v2128 = vadd.f32 0.0, %v2127
        %v2129 = vpop.f32.mrf.mxu0
        %2130 = vmatprep.mubr.bf16.mxu0 0
        %2131 = vmatmul.mubr.bf16.gmra.mxu0 %v2001
        %v2132 = vpop.f32.mrf.mxu0
        %v2133 = vadd.f32 0.0, %v2132
        %v2134 = vpop.f32.mrf.mxu0
        %v2135 = vpop.f32.mrf.mxu0
        %v2136 = vadd.f32 0.0, %v2135
        %v2137 = vpop.f32.mrf.mxu0
        %2138 = vmatprep.mubr.bf16.mxu0 0
        %2139 = vmatmul.mubr.bf16.gmra.mxu0 %v2004
        %v2140 = vpop.f32.mrf.mxu0
        %v2141 = vadd.f32 0.0, %v2140
        %v2142 = vpop.f32.mrf.mxu0
        %v2143 = vpop.f32.mrf.mxu0
        %v2144 = vadd.f32 0.0, %v2143
        %v2145 = vpop.f32.mrf.mxu0
        %2146 = vmatprep.mubr.bf16.mxu0 0
        %2147 = vmatmul.mubr.bf16.gmra.mxu0 %v2007
        %v2148 = vpop.f32.mrf.mxu0
        %v2149 = vadd.f32 0.0, %v2148
        %v2150 = vpop.f32.mrf.mxu0
        %v2151 = vpop.f32.mrf.mxu0
        %v2152 = vadd.f32 0.0, %v2151
        %v2153 = vpop.f32.mrf.mxu0
        %2154 = vmatprep.mubr.bf16.mxu0 0
        %2155 = vmatmul.mubr.bf16.gmra.mxu0 %v2010
        %v2156 = vpop.f32.mrf.mxu0
        %v2157 = vadd.f32 0.0, %v2156
        %v2158 = vpop.f32.mrf.mxu0
        %v2159 = vpop.f32.mrf.mxu0
        %v2160 = vadd.f32 0.0, %v2159
        %v2161 = vpop.f32.mrf.mxu0
        %2162 = vmatprep.mubr.bf16.mxu0 0
        %2163 = vmatmul.mubr.bf16.gmra.mxu0 %v2013
        %v2164 = vpop.f32.mrf.mxu0
        %v2165 = vadd.f32 0.0, %v2164
        %v2166 = vpop.f32.mrf.mxu0
        %v2167 = vpop.f32.mrf.mxu0
        %v2168 = vadd.f32 0.0, %v2167
        %v2169 = vpop.f32.mrf.mxu0
        %2170 = vmatprep.mubr.bf16.mxu0 0
        %2171 = vmatmul.mubr.bf16.gmra.mxu0 %v2016
        %v2172 = vpop.f32.mrf.mxu0
        %v2173 = vadd.f32 0.0, %v2172
        %v2174 = vpop.f32.mrf.mxu0
        %v2175 = vpop.f32.mrf.mxu0
        %v2176 = vadd.f32 0.0, %v2175
        %v2177 = vpop.f32.mrf.mxu0
        %2178 = vdwg.mxu0
        %v2179 = vpack.c.bf16 %v2056, %v2053
        %v2180 = vld [vmem:[%s7] sm:$0xf]
        %v2181 = vld [vmem:[%s7 + $0x4] sm:$0xf]
        %v2182 = vpack.c.bf16 %v2064, %v2061
        %s2183 = scalar_lea.vmem %s7, 8
        %v2184 = vld [vmem:[%s2183] sm:$0xf]
        %v2185 = vld [vmem:[%s2183 + $0x4] sm:$0xf]
        %v2188 = vunpack.c.l.b16 %v2184
        %v2189 = vunpack.c.l.b16 %v2185
        %v2190 = vpack.c.b16 %v2189, %v2188
        %v2193 = vsel %vm1822, %v2182, 0
        %2195 = vmatprep.subr.bf16.mxu0 0
        %2196 = vmatpush1.bf16.msra.mxu0 0
        %2197 = vmatprep.subr.bf16.mxu0 0
        %2198 = vmatpush1.bf16.msra.mxu0 0
        %2199 = vmatprep.subr.bf16.mxu0 0
        %2200 = vmatpush1.bf16.msra.mxu0 0
        %2201 = vmatprep.subr.bf16.mxu0 0
        %2202 = vmatpush1.bf16.msra.mxu0 0
        %2203 = vmatprep.subr.bf16.mxu0 0
        %2204 = vmatpush1.bf16.msra.mxu0 0
        %2205 = vmatprep.subr.bf16.mxu0 0
        %2206 = vmatpush1.bf16.msra.mxu0 0
        %2207 = vmatprep.subr.bf16.mxu0 0
        %2208 = vmatpush1.bf16.msra.mxu0 0
        %2209 = vmatprep.subr.bf16.mxu0 0
        %2210 = vmatpush1.bf16.msra.mxu0 %v2190
        %2211 = vmatprep.subr.bf16.mxu0 0
        %2212 = vmatpush2.bf16.msra.mxu0 0
        %2213 = vmatprep.subr.bf16.mxu0 0
        %2214 = vmatpush2.bf16.msra.mxu0 0
        %2215 = vmatprep.subr.bf16.mxu0 0
        %2216 = vmatpush2.bf16.msra.mxu0 0
        %2217 = vmatprep.subr.bf16.mxu0 0
        %2218 = vmatpush2.bf16.msra.mxu0 0
        %2219 = vmatprep.subr.bf16.mxu0 0
        %2220 = vmatpush2.bf16.msra.mxu0 0
        %2221 = vmatprep.subr.bf16.mxu0 0
        %2222 = vmatpush2.bf16.msra.mxu0 0
        %2223 = vmatprep.subr.bf16.mxu0 0
        %2224 = vmatpush2.bf16.msra.mxu0 0
        %2225 = vmatprep.subr.bf16.mxu0 0
        %2226 = vmatpush2.bf16.msra.mxu0 0
        %2227 = vmatprep.mubr.bf16.mxu0 0
        %2228 = vmatmul.mubr.bf16.gmra.mxu0 %v2193
        %v2229 = vpop.f32.mrf.mxu0
        %v2230 = vadd.f32 0.0, %v2229
        %v2231 = vpop.f32.mrf.mxu0
        %v2232 = vpop.f32.mrf.mxu0
        %v2233 = vadd.f32 0.0, %v2232
        %v2234 = vpop.f32.mrf.mxu0
        %2235 = vdwg.mxu0
        %v2238 = vunpack.c.l.b16 %v2180
        %v2239 = vunpack.c.l.b16 %v2181
        %v2240 = vpack.c.b16 %v2239, %v2238
        %v2243 = vsel %vm1822, %v2179, 0
        %2245 = vmatprep.subr.bf16.mxu0 0
        %2246 = vmatpush1.bf16.msra.mxu0 0
        %2247 = vmatprep.subr.bf16.mxu0 0
        %2248 = vmatpush1.bf16.msra.mxu0 0
        %2249 = vmatprep.subr.bf16.mxu0 0
        %2250 = vmatpush1.bf16.msra.mxu0 0
        %2251 = vmatprep.subr.bf16.mxu0 0
        %2252 = vmatpush1.bf16.msra.mxu0 0
        %2253 = vmatprep.subr.bf16.mxu0 0
        %2254 = vmatpush1.bf16.msra.mxu0 0
        %2255 = vmatprep.subr.bf16.mxu0 0
        %2256 = vmatpush1.bf16.msra.mxu0 0
        %2257 = vmatprep.subr.bf16.mxu0 0
        %2258 = vmatpush1.bf16.msra.mxu0 0
        %2259 = vmatprep.subr.bf16.mxu0 0
        %2260 = vmatpush1.bf16.msra.mxu0 %v2240
        %2261 = vmatprep.subr.bf16.mxu0 0
        %2262 = vmatpush2.bf16.msra.mxu0 0
        %2263 = vmatprep.subr.bf16.mxu0 0
        %2264 = vmatpush2.bf16.msra.mxu0 0
        %2265 = vmatprep.subr.bf16.mxu0 0
        %2266 = vmatpush2.bf16.msra.mxu0 0
        %2267 = vmatprep.subr.bf16.mxu0 0
        %2268 = vmatpush2.bf16.msra.mxu0 0
        %2269 = vmatprep.subr.bf16.mxu0 0
        %2270 = vmatpush2.bf16.msra.mxu0 0
        %2271 = vmatprep.subr.bf16.mxu0 0
        %2272 = vmatpush2.bf16.msra.mxu0 0
        %2273 = vmatprep.subr.bf16.mxu0 0
        %2274 = vmatpush2.bf16.msra.mxu0 0
        %2275 = vmatprep.subr.bf16.mxu0 0
        %2276 = vmatpush2.bf16.msra.mxu0 0
        %2277 = vmatprep.mubr.bf16.mxu0 0
        %2278 = vmatmul.mubr.bf16.gmra.mxu0 %v2243
        %v2279 = vpop.f32.mrf.mxu0
        %v2280 = vadd.f32 %v2230, %v2279
        %v2281 = vpop.f32.mrf.mxu0
        %v2282 = vpop.f32.mrf.mxu0
        %v2283 = vadd.f32 %v2233, %v2282
        %v2284 = vpop.f32.mrf.mxu0
        %2285 = vdwg.mxu0
        %v2286 = vpack.c.bf16 %v2072, %v2069
        %s2287 = scalar_lea.vmem %s7, 16
        %v2288 = vld [vmem:[%s2287] sm:$0xf]
        %v2289 = vld [vmem:[%s2287 + $0x4] sm:$0xf]
        %v2292 = vunpack.c.l.b16 %v2288
        %v2293 = vunpack.c.l.b16 %v2289
        %v2294 = vpack.c.b16 %v2293, %v2292
        %v2297 = vsel %vm1822, %v2286, 0
        %2299 = vmatprep.subr.bf16.mxu0 0
        %2300 = vmatpush1.bf16.msra.mxu0 0
        %2301 = vmatprep.subr.bf16.mxu0 0
        %2302 = vmatpush1.bf16.msra.mxu0 0
        %2303 = vmatprep.subr.bf16.mxu0 0
        %2304 = vmatpush1.bf16.msra.mxu0 0
        %2305 = vmatprep.subr.bf16.mxu0 0
        %2306 = vmatpush1.bf16.msra.mxu0 0
        %2307 = vmatprep.subr.bf16.mxu0 0
        %2308 = vmatpush1.bf16.msra.mxu0 0
        %2309 = vmatprep.subr.bf16.mxu0 0
        %2310 = vmatpush1.bf16.msra.mxu0 0
        %2311 = vmatprep.subr.bf16.mxu0 0
        %2312 = vmatpush1.bf16.msra.mxu0 0
        %2313 = vmatprep.subr.bf16.mxu0 0
        %2314 = vmatpush1.bf16.msra.mxu0 %v2294
        %2315 = vmatprep.subr.bf16.mxu0 0
        %2316 = vmatpush2.bf16.msra.mxu0 0
        %2317 = vmatprep.subr.bf16.mxu0 0
        %2318 = vmatpush2.bf16.msra.mxu0 0
        %2319 = vmatprep.subr.bf16.mxu0 0
        %2320 = vmatpush2.bf16.msra.mxu0 0
        %2321 = vmatprep.subr.bf16.mxu0 0
        %2322 = vmatpush2.bf16.msra.mxu0 0
        %2323 = vmatprep.subr.bf16.mxu0 0
        %2324 = vmatpush2.bf16.msra.mxu0 0
        %2325 = vmatprep.subr.bf16.mxu0 0
        %2326 = vmatpush2.bf16.msra.mxu0 0
        %2327 = vmatprep.subr.bf16.mxu0 0
        %2328 = vmatpush2.bf16.msra.mxu0 0
        %2329 = vmatprep.subr.bf16.mxu0 0
        %2330 = vmatpush2.bf16.msra.mxu0 0
        %2331 = vmatprep.mubr.bf16.mxu0 0
        %2332 = vmatmul.mubr.bf16.gmra.mxu0 %v2297
        %v2333 = vpop.f32.mrf.mxu0
        %v2334 = vadd.f32 0.0, %v2333
        %v2335 = vpop.f32.mrf.mxu0
        %v2336 = vpop.f32.mrf.mxu0
        %v2337 = vadd.f32 0.0, %v2336
        %v2338 = vpop.f32.mrf.mxu0
        %2339 = vdwg.mxu0
        %v2340 = vadd.f32 %v2280, %v2334
        %v2341 = vadd.f32 %v2283, %v2337
        %v2342 = vpack.c.bf16 %v2080, %v2077
        %s2343 = scalar_lea.vmem %s7, 24
        %v2344 = vld [vmem:[%s2343] sm:$0xf]
        %v2345 = vld [vmem:[%s2343 + $0x4] sm:$0xf]
        %v2348 = vunpack.c.l.b16 %v2344
        %v2349 = vunpack.c.l.b16 %v2345
        %v2350 = vpack.c.b16 %v2349, %v2348
        %v2353 = vsel %vm1822, %v2342, 0
        %2355 = vmatprep.subr.bf16.mxu0 0
        %2356 = vmatpush1.bf16.msra.mxu0 0
        %2357 = vmatprep.subr.bf16.mxu0 0
        %2358 = vmatpush1.bf16.msra.mxu0 0
        %2359 = vmatprep.subr.bf16.mxu0 0
        %2360 = vmatpush1.bf16.msra.mxu0 0
        %2361 = vmatprep.subr.bf16.mxu0 0
        %2362 = vmatpush1.bf16.msra.mxu0 0
        %2363 = vmatprep.subr.bf16.mxu0 0
        %2364 = vmatpush1.bf16.msra.mxu0 0
        %2365 = vmatprep.subr.bf16.mxu0 0
        %2366 = vmatpush1.bf16.msra.mxu0 0
        %2367 = vmatprep.subr.bf16.mxu0 0
        %2368 = vmatpush1.bf16.msra.mxu0 0
        %2369 = vmatprep.subr.bf16.mxu0 0
        %2370 = vmatpush1.bf16.msra.mxu0 %v2350
        %2371 = vmatprep.subr.bf16.mxu0 0
        %2372 = vmatpush2.bf16.msra.mxu0 0
        %2373 = vmatprep.subr.bf16.mxu0 0
        %2374 = vmatpush2.bf16.msra.mxu0 0
        %2375 = vmatprep.subr.bf16.mxu0 0
        %2376 = vmatpush2.bf16.msra.mxu0 0
        %2377 = vmatprep.subr.bf16.mxu0 0
        %2378 = vmatpush2.bf16.msra.mxu0 0
        %2379 = vmatprep.subr.bf16.mxu0 0
        %2380 = vmatpush2.bf16.msra.mxu0 0
        %2381 = vmatprep.subr.bf16.mxu0 0
        %2382 = vmatpush2.bf16.msra.mxu0 0
        %2383 = vmatprep.subr.bf16.mxu0 0
        %2384 = vmatpush2.bf16.msra.mxu0 0
        %2385 = vmatprep.subr.bf16.mxu0 0
        %2386 = vmatpush2.bf16.msra.mxu0 0
        %2387 = vmatprep.mubr.bf16.mxu0 0
        %2388 = vmatmul.mubr.bf16.gmra.mxu0 %v2353
        %v2389 = vpop.f32.mrf.mxu0
        %v2390 = vadd.f32 0.0, %v2389
        %v2391 = vpop.f32.mrf.mxu0
        %v2392 = vpop.f32.mrf.mxu0
        %v2393 = vadd.f32 0.0, %v2392
        %v2394 = vpop.f32.mrf.mxu0
        %2395 = vdwg.mxu0
        %v2396 = vadd.f32 %v2340, %v2390
        %v2397 = vadd.f32 %v2341, %v2393
        %v2398 = vpack.c.bf16 %v2088, %v2085
        %s2399 = scalar_lea.vmem %s7, 32
        %v2400 = vld [vmem:[%s2399] sm:$0xf]
        %v2401 = vld [vmem:[%s2399 + $0x4] sm:$0xf]
        %v2404 = vunpack.c.l.b16 %v2400
        %v2405 = vunpack.c.l.b16 %v2401
        %v2406 = vpack.c.b16 %v2405, %v2404
        %v2409 = vsel %vm1822, %v2398, 0
        %2411 = vmatprep.subr.bf16.mxu0 0
        %2412 = vmatpush1.bf16.msra.mxu0 0
        %2413 = vmatprep.subr.bf16.mxu0 0
        %2414 = vmatpush1.bf16.msra.mxu0 0
        %2415 = vmatprep.subr.bf16.mxu0 0
        %2416 = vmatpush1.bf16.msra.mxu0 0
        %2417 = vmatprep.subr.bf16.mxu0 0
        %2418 = vmatpush1.bf16.msra.mxu0 0
        %2419 = vmatprep.subr.bf16.mxu0 0
        %2420 = vmatpush1.bf16.msra.mxu0 0
        %2421 = vmatprep.subr.bf16.mxu0 0
        %2422 = vmatpush1.bf16.msra.mxu0 0
        %2423 = vmatprep.subr.bf16.mxu0 0
        %2424 = vmatpush1.bf16.msra.mxu0 0
        %2425 = vmatprep.subr.bf16.mxu0 0
        %2426 = vmatpush1.bf16.msra.mxu0 %v2406
        %2427 = vmatprep.subr.bf16.mxu0 0
        %2428 = vmatpush2.bf16.msra.mxu0 0
        %2429 = vmatprep.subr.bf16.mxu0 0
        %2430 = vmatpush2.bf16.msra.mxu0 0
        %2431 = vmatprep.subr.bf16.mxu0 0
        %2432 = vmatpush2.bf16.msra.mxu0 0
        %2433 = vmatprep.subr.bf16.mxu0 0
        %2434 = vmatpush2.bf16.msra.mxu0 0
        %2435 = vmatprep.subr.bf16.mxu0 0
        %2436 = vmatpush2.bf16.msra.mxu0 0
        %2437 = vmatprep.subr.bf16.mxu0 0
        %2438 = vmatpush2.bf16.msra.mxu0 0
        %2439 = vmatprep.subr.bf16.mxu0 0
        %2440 = vmatpush2.bf16.msra.mxu0 0
        %2441 = vmatprep.subr.bf16.mxu0 0
        %2442 = vmatpush2.bf16.msra.mxu0 0
        %2443 = vmatprep.mubr.bf16.mxu0 0
        %2444 = vmatmul.mubr.bf16.gmra.mxu0 %v2409
        %v2445 = vpop.f32.mrf.mxu0
        %v2446 = vadd.f32 0.0, %v2445
        %v2447 = vpop.f32.mrf.mxu0
        %v2448 = vpop.f32.mrf.mxu0
        %v2449 = vadd.f32 0.0, %v2448
        %v2450 = vpop.f32.mrf.mxu0
        %2451 = vdwg.mxu0
        %v2452 = vadd.f32 %v2396, %v2446
        %v2453 = vadd.f32 %v2397, %v2449
        %v2454 = vpack.c.bf16 %v2096, %v2093
        %s2455 = scalar_lea.vmem %s7, 40
        %v2456 = vld [vmem:[%s2455] sm:$0xf]
        %v2457 = vld [vmem:[%s2455 + $0x4] sm:$0xf]
        %v2460 = vunpack.c.l.b16 %v2456
        %v2461 = vunpack.c.l.b16 %v2457
        %v2462 = vpack.c.b16 %v2461, %v2460
        %v2465 = vsel %vm1822, %v2454, 0
        %2467 = vmatprep.subr.bf16.mxu0 0
        %2468 = vmatpush1.bf16.msra.mxu0 0
        %2469 = vmatprep.subr.bf16.mxu0 0
        %2470 = vmatpush1.bf16.msra.mxu0 0
        %2471 = vmatprep.subr.bf16.mxu0 0
        %2472 = vmatpush1.bf16.msra.mxu0 0
        %2473 = vmatprep.subr.bf16.mxu0 0
        %2474 = vmatpush1.bf16.msra.mxu0 0
        %2475 = vmatprep.subr.bf16.mxu0 0
        %2476 = vmatpush1.bf16.msra.mxu0 0
        %2477 = vmatprep.subr.bf16.mxu0 0
        %2478 = vmatpush1.bf16.msra.mxu0 0
        %2479 = vmatprep.subr.bf16.mxu0 0
        %2480 = vmatpush1.bf16.msra.mxu0 0
        %2481 = vmatprep.subr.bf16.mxu0 0
        %2482 = vmatpush1.bf16.msra.mxu0 %v2462
        %2483 = vmatprep.subr.bf16.mxu0 0
        %2484 = vmatpush2.bf16.msra.mxu0 0
        %2485 = vmatprep.subr.bf16.mxu0 0
        %2486 = vmatpush2.bf16.msra.mxu0 0
        %2487 = vmatprep.subr.bf16.mxu0 0
        %2488 = vmatpush2.bf16.msra.mxu0 0
        %2489 = vmatprep.subr.bf16.mxu0 0
        %2490 = vmatpush2.bf16.msra.mxu0 0
        %2491 = vmatprep.subr.bf16.mxu0 0
        %2492 = vmatpush2.bf16.msra.mxu0 0
        %2493 = vmatprep.subr.bf16.mxu0 0
        %2494 = vmatpush2.bf16.msra.mxu0 0
        %2495 = vmatprep.subr.bf16.mxu0 0
        %2496 = vmatpush2.bf16.msra.mxu0 0
        %2497 = vmatprep.subr.bf16.mxu0 0
        %2498 = vmatpush2.bf16.msra.mxu0 0
        %2499 = vmatprep.mubr.bf16.mxu0 0
        %2500 = vmatmul.mubr.bf16.gmra.mxu0 %v2465
        %v2501 = vpop.f32.mrf.mxu0
        %v2502 = vadd.f32 0.0, %v2501
        %v2503 = vpop.f32.mrf.mxu0
        %v2504 = vpop.f32.mrf.mxu0
        %v2505 = vadd.f32 0.0, %v2504
        %v2506 = vpop.f32.mrf.mxu0
        %2507 = vdwg.mxu0
        %v2508 = vadd.f32 %v2452, %v2502
        %v2509 = vadd.f32 %v2453, %v2505
        %v2510 = vpack.c.bf16 %v2104, %v2101
        %s2511 = scalar_lea.vmem %s7, 48
        %v2512 = vld [vmem:[%s2511] sm:$0xf]
        %v2513 = vld [vmem:[%s2511 + $0x4] sm:$0xf]
        %v2516 = vunpack.c.l.b16 %v2512
        %v2517 = vunpack.c.l.b16 %v2513
        %v2518 = vpack.c.b16 %v2517, %v2516
        %v2521 = vsel %vm1822, %v2510, 0
        %2523 = vmatprep.subr.bf16.mxu0 0
        %2524 = vmatpush1.bf16.msra.mxu0 0
        %2525 = vmatprep.subr.bf16.mxu0 0
        %2526 = vmatpush1.bf16.msra.mxu0 0
        %2527 = vmatprep.subr.bf16.mxu0 0
        %2528 = vmatpush1.bf16.msra.mxu0 0
        %2529 = vmatprep.subr.bf16.mxu0 0
        %2530 = vmatpush1.bf16.msra.mxu0 0
        %2531 = vmatprep.subr.bf16.mxu0 0
        %2532 = vmatpush1.bf16.msra.mxu0 0
        %2533 = vmatprep.subr.bf16.mxu0 0
        %2534 = vmatpush1.bf16.msra.mxu0 0
        %2535 = vmatprep.subr.bf16.mxu0 0
        %2536 = vmatpush1.bf16.msra.mxu0 0
        %2537 = vmatprep.subr.bf16.mxu0 0
        %2538 = vmatpush1.bf16.msra.mxu0 %v2518
        %2539 = vmatprep.subr.bf16.mxu0 0
        %2540 = vmatpush2.bf16.msra.mxu0 0
        %2541 = vmatprep.subr.bf16.mxu0 0
        %2542 = vmatpush2.bf16.msra.mxu0 0
        %2543 = vmatprep.subr.bf16.mxu0 0
        %2544 = vmatpush2.bf16.msra.mxu0 0
        %2545 = vmatprep.subr.bf16.mxu0 0
        %2546 = vmatpush2.bf16.msra.mxu0 0
        %2547 = vmatprep.subr.bf16.mxu0 0
        %2548 = vmatpush2.bf16.msra.mxu0 0
        %2549 = vmatprep.subr.bf16.mxu0 0
        %2550 = vmatpush2.bf16.msra.mxu0 0
        %2551 = vmatprep.subr.bf16.mxu0 0
        %2552 = vmatpush2.bf16.msra.mxu0 0
        %2553 = vmatprep.subr.bf16.mxu0 0
        %2554 = vmatpush2.bf16.msra.mxu0 0
        %2555 = vmatprep.mubr.bf16.mxu0 0
        %2556 = vmatmul.mubr.bf16.gmra.mxu0 %v2521
        %v2557 = vpop.f32.mrf.mxu0
        %v2558 = vadd.f32 0.0, %v2557
        %v2559 = vpop.f32.mrf.mxu0
        %v2560 = vpop.f32.mrf.mxu0
        %v2561 = vadd.f32 0.0, %v2560
        %v2562 = vpop.f32.mrf.mxu0
        %2563 = vdwg.mxu0
        %v2564 = vadd.f32 %v2508, %v2558
        %v2565 = vadd.f32 %v2509, %v2561
        %v2566 = vpack.c.bf16 %v2112, %v2109
        %s2567 = scalar_lea.vmem %s7, 56
        %v2568 = vld [vmem:[%s2567] sm:$0xf]
        %v2569 = vld [vmem:[%s2567 + $0x4] sm:$0xf]
        %v2572 = vunpack.c.l.b16 %v2568
        %v2573 = vunpack.c.l.b16 %v2569
        %v2574 = vpack.c.b16 %v2573, %v2572
        %v2577 = vsel %vm1822, %v2566, 0
        %2579 = vmatprep.subr.bf16.mxu0 0
        %2580 = vmatpush1.bf16.msra.mxu0 0
        %2581 = vmatprep.subr.bf16.mxu0 0
        %2582 = vmatpush1.bf16.msra.mxu0 0
        %2583 = vmatprep.subr.bf16.mxu0 0
        %2584 = vmatpush1.bf16.msra.mxu0 0
        %2585 = vmatprep.subr.bf16.mxu0 0
        %2586 = vmatpush1.bf16.msra.mxu0 0
        %2587 = vmatprep.subr.bf16.mxu0 0
        %2588 = vmatpush1.bf16.msra.mxu0 0
        %2589 = vmatprep.subr.bf16.mxu0 0
        %2590 = vmatpush1.bf16.msra.mxu0 0
        %2591 = vmatprep.subr.bf16.mxu0 0
        %2592 = vmatpush1.bf16.msra.mxu0 0
        %2593 = vmatprep.subr.bf16.mxu0 0
        %2594 = vmatpush1.bf16.msra.mxu0 %v2574
        %2595 = vmatprep.subr.bf16.mxu0 0
        %2596 = vmatpush2.bf16.msra.mxu0 0
        %2597 = vmatprep.subr.bf16.mxu0 0
        %2598 = vmatpush2.bf16.msra.mxu0 0
        %2599 = vmatprep.subr.bf16.mxu0 0
        %2600 = vmatpush2.bf16.msra.mxu0 0
        %2601 = vmatprep.subr.bf16.mxu0 0
        %2602 = vmatpush2.bf16.msra.mxu0 0
        %2603 = vmatprep.subr.bf16.mxu0 0
        %2604 = vmatpush2.bf16.msra.mxu0 0
        %2605 = vmatprep.subr.bf16.mxu0 0
        %2606 = vmatpush2.bf16.msra.mxu0 0
        %2607 = vmatprep.subr.bf16.mxu0 0
        %2608 = vmatpush2.bf16.msra.mxu0 0
        %2609 = vmatprep.subr.bf16.mxu0 0
        %2610 = vmatpush2.bf16.msra.mxu0 0
        %2611 = vmatprep.mubr.bf16.mxu0 0
        %2612 = vmatmul.mubr.bf16.gmra.mxu0 %v2577
        %v2613 = vpop.f32.mrf.mxu0
        %v2614 = vadd.f32 0.0, %v2613
        %v2615 = vpop.f32.mrf.mxu0
        %v2616 = vpop.f32.mrf.mxu0
        %v2617 = vadd.f32 0.0, %v2616
        %v2618 = vpop.f32.mrf.mxu0
        %2619 = vdwg.mxu0
        %v2620 = vadd.f32 %v2564, %v2614
        %v2621 = vadd.f32 %v2565, %v2617
        %v2622 = vpack.c.bf16 %v2120, %v2117
        %s2623 = scalar_lea.vmem %s7, 64
        %v2624 = vld [vmem:[%s2623] sm:$0xf]
        %v2625 = vld [vmem:[%s2623 + $0x4] sm:$0xf]
        %v2628 = vunpack.c.l.b16 %v2624
        %v2629 = vunpack.c.l.b16 %v2625
        %v2630 = vpack.c.b16 %v2629, %v2628
        %v2633 = vsel %vm1822, %v2622, 0
        %2635 = vmatprep.subr.bf16.mxu0 0
        %2636 = vmatpush1.bf16.msra.mxu0 0
        %2637 = vmatprep.subr.bf16.mxu0 0
        %2638 = vmatpush1.bf16.msra.mxu0 0
        %2639 = vmatprep.subr.bf16.mxu0 0
        %2640 = vmatpush1.bf16.msra.mxu0 0
        %2641 = vmatprep.subr.bf16.mxu0 0
        %2642 = vmatpush1.bf16.msra.mxu0 0
        %2643 = vmatprep.subr.bf16.mxu0 0
        %2644 = vmatpush1.bf16.msra.mxu0 0
        %2645 = vmatprep.subr.bf16.mxu0 0
        %2646 = vmatpush1.bf16.msra.mxu0 0
        %2647 = vmatprep.subr.bf16.mxu0 0
        %2648 = vmatpush1.bf16.msra.mxu0 0
        %2649 = vmatprep.subr.bf16.mxu0 0
        %2650 = vmatpush1.bf16.msra.mxu0 %v2630
        %2651 = vmatprep.subr.bf16.mxu0 0
        %2652 = vmatpush2.bf16.msra.mxu0 0
        %2653 = vmatprep.subr.bf16.mxu0 0
        %2654 = vmatpush2.bf16.msra.mxu0 0
        %2655 = vmatprep.subr.bf16.mxu0 0
        %2656 = vmatpush2.bf16.msra.mxu0 0
        %2657 = vmatprep.subr.bf16.mxu0 0
        %2658 = vmatpush2.bf16.msra.mxu0 0
        %2659 = vmatprep.subr.bf16.mxu0 0
        %2660 = vmatpush2.bf16.msra.mxu0 0
        %2661 = vmatprep.subr.bf16.mxu0 0
        %2662 = vmatpush2.bf16.msra.mxu0 0
        %2663 = vmatprep.subr.bf16.mxu0 0
        %2664 = vmatpush2.bf16.msra.mxu0 0
        %2665 = vmatprep.subr.bf16.mxu0 0
        %2666 = vmatpush2.bf16.msra.mxu0 0
        %2667 = vmatprep.mubr.bf16.mxu0 0
        %2668 = vmatmul.mubr.bf16.gmra.mxu0 %v2633
        %v2669 = vpop.f32.mrf.mxu0
        %v2670 = vadd.f32 0.0, %v2669
        %v2671 = vpop.f32.mrf.mxu0
        %v2672 = vpop.f32.mrf.mxu0
        %v2673 = vadd.f32 0.0, %v2672
        %v2674 = vpop.f32.mrf.mxu0
        %2675 = vdwg.mxu0
        %v2676 = vadd.f32 %v2620, %v2670
        %v2677 = vadd.f32 %v2621, %v2673
        %v2678 = vpack.c.bf16 %v2128, %v2125
        %s2679 = scalar_lea.vmem %s7, 72
        %v2680 = vld [vmem:[%s2679] sm:$0xf]
        %v2681 = vld [vmem:[%s2679 + $0x4] sm:$0xf]
        %v2684 = vunpack.c.l.b16 %v2680
        %v2685 = vunpack.c.l.b16 %v2681
        %v2686 = vpack.c.b16 %v2685, %v2684
        %v2689 = vsel %vm1822, %v2678, 0
        %2691 = vmatprep.subr.bf16.mxu0 0
        %2692 = vmatpush1.bf16.msra.mxu0 0
        %2693 = vmatprep.subr.bf16.mxu0 0
        %2694 = vmatpush1.bf16.msra.mxu0 0
        %2695 = vmatprep.subr.bf16.mxu0 0
        %2696 = vmatpush1.bf16.msra.mxu0 0
        %2697 = vmatprep.subr.bf16.mxu0 0
        %2698 = vmatpush1.bf16.msra.mxu0 0
        %2699 = vmatprep.subr.bf16.mxu0 0
        %2700 = vmatpush1.bf16.msra.mxu0 0
        %2701 = vmatprep.subr.bf16.mxu0 0
        %2702 = vmatpush1.bf16.msra.mxu0 0
        %2703 = vmatprep.subr.bf16.mxu0 0
        %2704 = vmatpush1.bf16.msra.mxu0 0
        %2705 = vmatprep.subr.bf16.mxu0 0
        %2706 = vmatpush1.bf16.msra.mxu0 %v2686
        %2707 = vmatprep.subr.bf16.mxu0 0
        %2708 = vmatpush2.bf16.msra.mxu0 0
        %2709 = vmatprep.subr.bf16.mxu0 0
        %2710 = vmatpush2.bf16.msra.mxu0 0
        %2711 = vmatprep.subr.bf16.mxu0 0
        %2712 = vmatpush2.bf16.msra.mxu0 0
        %2713 = vmatprep.subr.bf16.mxu0 0
        %2714 = vmatpush2.bf16.msra.mxu0 0
        %2715 = vmatprep.subr.bf16.mxu0 0
        %2716 = vmatpush2.bf16.msra.mxu0 0
        %2717 = vmatprep.subr.bf16.mxu0 0
        %2718 = vmatpush2.bf16.msra.mxu0 0
        %2719 = vmatprep.subr.bf16.mxu0 0
        %2720 = vmatpush2.bf16.msra.mxu0 0
        %2721 = vmatprep.subr.bf16.mxu0 0
        %2722 = vmatpush2.bf16.msra.mxu0 0
        %2723 = vmatprep.mubr.bf16.mxu0 0
        %2724 = vmatmul.mubr.bf16.gmra.mxu0 %v2689
        %v2725 = vpop.f32.mrf.mxu0
        %v2726 = vadd.f32 0.0, %v2725
        %v2727 = vpop.f32.mrf.mxu0
        %v2728 = vpop.f32.mrf.mxu0
        %v2729 = vadd.f32 0.0, %v2728
        %v2730 = vpop.f32.mrf.mxu0
        %2731 = vdwg.mxu0
        %v2732 = vadd.f32 %v2676, %v2726
        %v2733 = vadd.f32 %v2677, %v2729
        %v2734 = vpack.c.bf16 %v2136, %v2133
        %s2735 = scalar_lea.vmem %s7, 80
        %v2736 = vld [vmem:[%s2735] sm:$0xf]
        %v2737 = vld [vmem:[%s2735 + $0x4] sm:$0xf]
        %v2740 = vunpack.c.l.b16 %v2736
        %v2741 = vunpack.c.l.b16 %v2737
        %v2742 = vpack.c.b16 %v2741, %v2740
        %v2745 = vsel %vm1822, %v2734, 0
        %2747 = vmatprep.subr.bf16.mxu0 0
        %2748 = vmatpush1.bf16.msra.mxu0 0
        %2749 = vmatprep.subr.bf16.mxu0 0
        %2750 = vmatpush1.bf16.msra.mxu0 0
        %2751 = vmatprep.subr.bf16.mxu0 0
        %2752 = vmatpush1.bf16.msra.mxu0 0
        %2753 = vmatprep.subr.bf16.mxu0 0
        %2754 = vmatpush1.bf16.msra.mxu0 0
        %2755 = vmatprep.subr.bf16.mxu0 0
        %2756 = vmatpush1.bf16.msra.mxu0 0
        %2757 = vmatprep.subr.bf16.mxu0 0
        %2758 = vmatpush1.bf16.msra.mxu0 0
        %2759 = vmatprep.subr.bf16.mxu0 0
        %2760 = vmatpush1.bf16.msra.mxu0 0
        %2761 = vmatprep.subr.bf16.mxu0 0
        %2762 = vmatpush1.bf16.msra.mxu0 %v2742
        %2763 = vmatprep.subr.bf16.mxu0 0
        %2764 = vmatpush2.bf16.msra.mxu0 0
        %2765 = vmatprep.subr.bf16.mxu0 0
        %2766 = vmatpush2.bf16.msra.mxu0 0
        %2767 = vmatprep.subr.bf16.mxu0 0
        %2768 = vmatpush2.bf16.msra.mxu0 0
        %2769 = vmatprep.subr.bf16.mxu0 0
        %2770 = vmatpush2.bf16.msra.mxu0 0
        %2771 = vmatprep.subr.bf16.mxu0 0
        %2772 = vmatpush2.bf16.msra.mxu0 0
        %2773 = vmatprep.subr.bf16.mxu0 0
        %2774 = vmatpush2.bf16.msra.mxu0 0
        %2775 = vmatprep.subr.bf16.mxu0 0
        %2776 = vmatpush2.bf16.msra.mxu0 0
        %2777 = vmatprep.subr.bf16.mxu0 0
        %2778 = vmatpush2.bf16.msra.mxu0 0
        %2779 = vmatprep.mubr.bf16.mxu0 0
        %2780 = vmatmul.mubr.bf16.gmra.mxu0 %v2745
        %v2781 = vpop.f32.mrf.mxu0
        %v2782 = vadd.f32 0.0, %v2781
        %v2783 = vpop.f32.mrf.mxu0
        %v2784 = vpop.f32.mrf.mxu0
        %v2785 = vadd.f32 0.0, %v2784
        %v2786 = vpop.f32.mrf.mxu0
        %2787 = vdwg.mxu0
        %v2788 = vadd.f32 %v2732, %v2782
        %v2789 = vadd.f32 %v2733, %v2785
        %v2790 = vpack.c.bf16 %v2144, %v2141
        %s2791 = scalar_lea.vmem %s7, 88
        %v2792 = vld [vmem:[%s2791] sm:$0xf]
        %v2793 = vld [vmem:[%s2791 + $0x4] sm:$0xf]
        %v2796 = vunpack.c.l.b16 %v2792
        %v2797 = vunpack.c.l.b16 %v2793
        %v2798 = vpack.c.b16 %v2797, %v2796
        %v2801 = vsel %vm1822, %v2790, 0
        %2803 = vmatprep.subr.bf16.mxu0 0
        %2804 = vmatpush1.bf16.msra.mxu0 0
        %2805 = vmatprep.subr.bf16.mxu0 0
        %2806 = vmatpush1.bf16.msra.mxu0 0
        %2807 = vmatprep.subr.bf16.mxu0 0
        %2808 = vmatpush1.bf16.msra.mxu0 0
        %2809 = vmatprep.subr.bf16.mxu0 0
        %2810 = vmatpush1.bf16.msra.mxu0 0
        %2811 = vmatprep.subr.bf16.mxu0 0
        %2812 = vmatpush1.bf16.msra.mxu0 0
        %2813 = vmatprep.subr.bf16.mxu0 0
        %2814 = vmatpush1.bf16.msra.mxu0 0
        %2815 = vmatprep.subr.bf16.mxu0 0
        %2816 = vmatpush1.bf16.msra.mxu0 0
        %2817 = vmatprep.subr.bf16.mxu0 0
        %2818 = vmatpush1.bf16.msra.mxu0 %v2798
        %2819 = vmatprep.subr.bf16.mxu0 0
        %2820 = vmatpush2.bf16.msra.mxu0 0
        %2821 = vmatprep.subr.bf16.mxu0 0
        %2822 = vmatpush2.bf16.msra.mxu0 0
        %2823 = vmatprep.subr.bf16.mxu0 0
        %2824 = vmatpush2.bf16.msra.mxu0 0
        %2825 = vmatprep.subr.bf16.mxu0 0
        %2826 = vmatpush2.bf16.msra.mxu0 0
        %2827 = vmatprep.subr.bf16.mxu0 0
        %2828 = vmatpush2.bf16.msra.mxu0 0
        %2829 = vmatprep.subr.bf16.mxu0 0
        %2830 = vmatpush2.bf16.msra.mxu0 0
        %2831 = vmatprep.subr.bf16.mxu0 0
        %2832 = vmatpush2.bf16.msra.mxu0 0
        %2833 = vmatprep.subr.bf16.mxu0 0
        %2834 = vmatpush2.bf16.msra.mxu0 0
        %2835 = vmatprep.mubr.bf16.mxu0 0
        %2836 = vmatmul.mubr.bf16.gmra.mxu0 %v2801
        %v2837 = vpop.f32.mrf.mxu0
        %v2838 = vadd.f32 0.0, %v2837
        %v2839 = vpop.f32.mrf.mxu0
        %v2840 = vpop.f32.mrf.mxu0
        %v2841 = vadd.f32 0.0, %v2840
        %v2842 = vpop.f32.mrf.mxu0
        %2843 = vdwg.mxu0
        %v2844 = vadd.f32 %v2788, %v2838
        %v2845 = vadd.f32 %v2789, %v2841
        %v2846 = vpack.c.bf16 %v2152, %v2149
        %s2847 = scalar_lea.vmem %s7, 96
        %v2848 = vld [vmem:[%s2847] sm:$0xf]
        %v2849 = vld [vmem:[%s2847 + $0x4] sm:$0xf]
        %v2852 = vunpack.c.l.b16 %v2848
        %v2853 = vunpack.c.l.b16 %v2849
        %v2854 = vpack.c.b16 %v2853, %v2852
        %v2857 = vsel %vm1822, %v2846, 0
        %2859 = vmatprep.subr.bf16.mxu0 0
        %2860 = vmatpush1.bf16.msra.mxu0 0
        %2861 = vmatprep.subr.bf16.mxu0 0
        %2862 = vmatpush1.bf16.msra.mxu0 0
        %2863 = vmatprep.subr.bf16.mxu0 0
        %2864 = vmatpush1.bf16.msra.mxu0 0
        %2865 = vmatprep.subr.bf16.mxu0 0
        %2866 = vmatpush1.bf16.msra.mxu0 0
        %2867 = vmatprep.subr.bf16.mxu0 0
        %2868 = vmatpush1.bf16.msra.mxu0 0
        %2869 = vmatprep.subr.bf16.mxu0 0
        %2870 = vmatpush1.bf16.msra.mxu0 0
        %2871 = vmatprep.subr.bf16.mxu0 0
        %2872 = vmatpush1.bf16.msra.mxu0 0
        %2873 = vmatprep.subr.bf16.mxu0 0
        %2874 = vmatpush1.bf16.msra.mxu0 %v2854
        %2875 = vmatprep.subr.bf16.mxu0 0
        %2876 = vmatpush2.bf16.msra.mxu0 0
        %2877 = vmatprep.subr.bf16.mxu0 0
        %2878 = vmatpush2.bf16.msra.mxu0 0
        %2879 = vmatprep.subr.bf16.mxu0 0
        %2880 = vmatpush2.bf16.msra.mxu0 0
        %2881 = vmatprep.subr.bf16.mxu0 0
        %2882 = vmatpush2.bf16.msra.mxu0 0
        %2883 = vmatprep.subr.bf16.mxu0 0
        %2884 = vmatpush2.bf16.msra.mxu0 0
        %2885 = vmatprep.subr.bf16.mxu0 0
        %2886 = vmatpush2.bf16.msra.mxu0 0
        %2887 = vmatprep.subr.bf16.mxu0 0
        %2888 = vmatpush2.bf16.msra.mxu0 0
        %2889 = vmatprep.subr.bf16.mxu0 0
        %2890 = vmatpush2.bf16.msra.mxu0 0
        %2891 = vmatprep.mubr.bf16.mxu0 0
        %2892 = vmatmul.mubr.bf16.gmra.mxu0 %v2857
        %v2893 = vpop.f32.mrf.mxu0
        %v2894 = vadd.f32 0.0, %v2893
        %v2895 = vpop.f32.mrf.mxu0
        %v2896 = vpop.f32.mrf.mxu0
        %v2897 = vadd.f32 0.0, %v2896
        %v2898 = vpop.f32.mrf.mxu0
        %2899 = vdwg.mxu0
        %v2900 = vadd.f32 %v2844, %v2894
        %v2901 = vadd.f32 %v2845, %v2897
        %v2902 = vpack.c.bf16 %v2160, %v2157
        %s2903 = scalar_lea.vmem %s7, 104
        %v2904 = vld [vmem:[%s2903] sm:$0xf]
        %v2905 = vld [vmem:[%s2903 + $0x4] sm:$0xf]
        %v2908 = vunpack.c.l.b16 %v2904
        %v2909 = vunpack.c.l.b16 %v2905
        %v2910 = vpack.c.b16 %v2909, %v2908
        %v2913 = vsel %vm1822, %v2902, 0
        %2915 = vmatprep.subr.bf16.mxu0 0
        %2916 = vmatpush1.bf16.msra.mxu0 0
        %2917 = vmatprep.subr.bf16.mxu0 0
        %2918 = vmatpush1.bf16.msra.mxu0 0
        %2919 = vmatprep.subr.bf16.mxu0 0
        %2920 = vmatpush1.bf16.msra.mxu0 0
        %2921 = vmatprep.subr.bf16.mxu0 0
        %2922 = vmatpush1.bf16.msra.mxu0 0
        %2923 = vmatprep.subr.bf16.mxu0 0
        %2924 = vmatpush1.bf16.msra.mxu0 0
        %2925 = vmatprep.subr.bf16.mxu0 0
        %2926 = vmatpush1.bf16.msra.mxu0 0
        %2927 = vmatprep.subr.bf16.mxu0 0
        %2928 = vmatpush1.bf16.msra.mxu0 0
        %2929 = vmatprep.subr.bf16.mxu0 0
        %2930 = vmatpush1.bf16.msra.mxu0 %v2910
        %2931 = vmatprep.subr.bf16.mxu0 0
        %2932 = vmatpush2.bf16.msra.mxu0 0
        %2933 = vmatprep.subr.bf16.mxu0 0
        %2934 = vmatpush2.bf16.msra.mxu0 0
        %2935 = vmatprep.subr.bf16.mxu0 0
        %2936 = vmatpush2.bf16.msra.mxu0 0
        %2937 = vmatprep.subr.bf16.mxu0 0
        %2938 = vmatpush2.bf16.msra.mxu0 0
        %2939 = vmatprep.subr.bf16.mxu0 0
        %2940 = vmatpush2.bf16.msra.mxu0 0
        %2941 = vmatprep.subr.bf16.mxu0 0
        %2942 = vmatpush2.bf16.msra.mxu0 0
        %2943 = vmatprep.subr.bf16.mxu0 0
        %2944 = vmatpush2.bf16.msra.mxu0 0
        %2945 = vmatprep.subr.bf16.mxu0 0
        %2946 = vmatpush2.bf16.msra.mxu0 0
        %2947 = vmatprep.mubr.bf16.mxu0 0
        %2948 = vmatmul.mubr.bf16.gmra.mxu0 %v2913
        %v2949 = vpop.f32.mrf.mxu0
        %v2950 = vadd.f32 0.0, %v2949
        %v2951 = vpop.f32.mrf.mxu0
        %v2952 = vpop.f32.mrf.mxu0
        %v2953 = vadd.f32 0.0, %v2952
        %v2954 = vpop.f32.mrf.mxu0
        %2955 = vdwg.mxu0
        %v2956 = vadd.f32 %v2900, %v2950
        %v2957 = vadd.f32 %v2901, %v2953
        %v2958 = vpack.c.bf16 %v2168, %v2165
        %s2959 = scalar_lea.vmem %s7, 112
        %v2960 = vld [vmem:[%s2959] sm:$0xf]
        %v2961 = vld [vmem:[%s2959 + $0x4] sm:$0xf]
        %v2964 = vunpack.c.l.b16 %v2960
        %v2965 = vunpack.c.l.b16 %v2961
        %v2966 = vpack.c.b16 %v2965, %v2964
        %v2969 = vsel %vm1822, %v2958, 0
        %2971 = vmatprep.subr.bf16.mxu0 0
        %2972 = vmatpush1.bf16.msra.mxu0 0
        %2973 = vmatprep.subr.bf16.mxu0 0
        %2974 = vmatpush1.bf16.msra.mxu0 0
        %2975 = vmatprep.subr.bf16.mxu0 0
        %2976 = vmatpush1.bf16.msra.mxu0 0
        %2977 = vmatprep.subr.bf16.mxu0 0
        %2978 = vmatpush1.bf16.msra.mxu0 0
        %2979 = vmatprep.subr.bf16.mxu0 0
        %2980 = vmatpush1.bf16.msra.mxu0 0
        %2981 = vmatprep.subr.bf16.mxu0 0
        %2982 = vmatpush1.bf16.msra.mxu0 0
        %2983 = vmatprep.subr.bf16.mxu0 0
        %2984 = vmatpush1.bf16.msra.mxu0 0
        %2985 = vmatprep.subr.bf16.mxu0 0
        %2986 = vmatpush1.bf16.msra.mxu0 %v2966
        %2987 = vmatprep.subr.bf16.mxu0 0
        %2988 = vmatpush2.bf16.msra.mxu0 0
        %2989 = vmatprep.subr.bf16.mxu0 0
        %2990 = vmatpush2.bf16.msra.mxu0 0
        %2991 = vmatprep.subr.bf16.mxu0 0
        %2992 = vmatpush2.bf16.msra.mxu0 0
        %2993 = vmatprep.subr.bf16.mxu0 0
        %2994 = vmatpush2.bf16.msra.mxu0 0
        %2995 = vmatprep.subr.bf16.mxu0 0
        %2996 = vmatpush2.bf16.msra.mxu0 0
        %2997 = vmatprep.subr.bf16.mxu0 0
        %2998 = vmatpush2.bf16.msra.mxu0 0
        %2999 = vmatprep.subr.bf16.mxu0 0
        %3000 = vmatpush2.bf16.msra.mxu0 0
        %3001 = vmatprep.subr.bf16.mxu0 0
        %3002 = vmatpush2.bf16.msra.mxu0 0
        %3003 = vmatprep.mubr.bf16.mxu0 0
        %3004 = vmatmul.mubr.bf16.gmra.mxu0 %v2969
        %v3005 = vpop.f32.mrf.mxu0
        %v3006 = vadd.f32 0.0, %v3005
        %v3007 = vpop.f32.mrf.mxu0
        %v3008 = vpop.f32.mrf.mxu0
        %v3009 = vadd.f32 0.0, %v3008
        %v3010 = vpop.f32.mrf.mxu0
        %3011 = vdwg.mxu0
        %v3012 = vadd.f32 %v2956, %v3006
        %v3013 = vadd.f32 %v2957, %v3009
        %v3014 = vpack.c.bf16 %v2176, %v2173
        %s3015 = scalar_lea.vmem %s7, 120
        %v3016 = vld [vmem:[%s3015] sm:$0xf]
        %v3017 = vld [vmem:[%s3015 + $0x4] sm:$0xf]
        %v3020 = vunpack.c.l.b16 %v3016
        %v3021 = vunpack.c.l.b16 %v3017
        %v3022 = vpack.c.b16 %v3021, %v3020
        %v3025 = vsel %vm1822, %v3014, 0
        %3027 = vmatprep.subr.bf16.mxu0 0
        %3028 = vmatpush1.bf16.msra.mxu0 0
        %3029 = vmatprep.subr.bf16.mxu0 0
        %3030 = vmatpush1.bf16.msra.mxu0 0
        %3031 = vmatprep.subr.bf16.mxu0 0
        %3032 = vmatpush1.bf16.msra.mxu0 0
        %3033 = vmatprep.subr.bf16.mxu0 0
        %3034 = vmatpush1.bf16.msra.mxu0 0
        %3035 = vmatprep.subr.bf16.mxu0 0
        %3036 = vmatpush1.bf16.msra.mxu0 0
        %3037 = vmatprep.subr.bf16.mxu0 0
        %3038 = vmatpush1.bf16.msra.mxu0 0
        %3039 = vmatprep.subr.bf16.mxu0 0
        %3040 = vmatpush1.bf16.msra.mxu0 0
        %3041 = vmatprep.subr.bf16.mxu0 0
        %3042 = vmatpush1.bf16.msra.mxu0 %v3022
        %3043 = vmatprep.subr.bf16.mxu0 0
        %3044 = vmatpush2.bf16.msra.mxu0 0
        %3045 = vmatprep.subr.bf16.mxu0 0
        %3046 = vmatpush2.bf16.msra.mxu0 0
        %3047 = vmatprep.subr.bf16.mxu0 0
        %3048 = vmatpush2.bf16.msra.mxu0 0
        %3049 = vmatprep.subr.bf16.mxu0 0
        %3050 = vmatpush2.bf16.msra.mxu0 0
        %3051 = vmatprep.subr.bf16.mxu0 0
        %3052 = vmatpush2.bf16.msra.mxu0 0
        %3053 = vmatprep.subr.bf16.mxu0 0
        %3054 = vmatpush2.bf16.msra.mxu0 0
        %3055 = vmatprep.subr.bf16.mxu0 0
        %3056 = vmatpush2.bf16.msra.mxu0 0
        %3057 = vmatprep.subr.bf16.mxu0 0
        %3058 = vmatpush2.bf16.msra.mxu0 0
        %3059 = vmatprep.mubr.bf16.mxu0 0
        %3060 = vmatmul.mubr.bf16.gmra.mxu0 %v3025
        %v3061 = vpop.f32.mrf.mxu0
        %v3062 = vadd.f32 0.0, %v3061
        %v3063 = vpop.f32.mrf.mxu0
        %v3064 = vpop.f32.mrf.mxu0
        %v3065 = vadd.f32 0.0, %v3064
        %v3066 = vpop.f32.mrf.mxu0
        %3067 = vdwg.mxu0
        %v3068 = vadd.f32 %v3012, %v3062
        %v3069 = vadd.f32 %v3013, %v3065
        %v3070 = vld [vmem:[%s8] sm:$0x1]
        %v3071 = vlaneseq
        %v3072 = vshrl.u32 %v3071, 7
        %v3073 = vadd.s32 %v3072, 8
        %vm3074 = vcmp.lt.s32.totalorder %v3072, 9
        %vm3075 = vcmp.lt.s32.totalorder %v3073, 9
        %v3076 = vsel %vm3074, 1, 0
        %v3077 = vsel %vm3075, 1, 0
        %v3078 = vcvt.s32.f32 %v3076
        %v3079 = vcvt.s32.f32 %v3077
        %v3081 = vlaneseq
        %v3082 = vshrl.u32 %v3081, 7
        %v3083 = vsub.s32 0, %v3082
        %v3084 = vrot.slane %v3070, %v3083
        %v3086 = vmul.f32 %v3084, %v3078
        %v3087 = vmul.f32 %v3084, %v3079
        %v3088 = vadd.f32 %v3068, %v3086
        %v3089 = vadd.f32 %v3069, %v3087
        %vm3090 = vcmask 261120
        %v3091 = vsel %vm3090, %v3088, 0.0
        %v3092 = vsel %vm3090, %v3089, 0.0
        %v3093 = vadd.f32 %v3091, %v3092
        %v3094 = vrot.slane %v3093, 4
        %v3095 = vadd.f32 %v3093, %v3094
        %v3096 = vrot.slane %v3095, 2
        %v3097 = vadd.f32 %v3095, %v3096
        %v3098 = vrot.slane %v3097, 1
        %v3099 = vadd.f32 %v3097, %v3098
        %v3100 = vmul.f32 %v3099, 0.11111111
        %v3101 = vsub.f32 %v3088, %v3100
        %v3102 = vsub.f32 %v3089, %v3100
        %v3103 = vmul.f32 %v3101, %v3078
        %v3104 = vmul.f32 %v3102, %v3079
        %v3105 = vmul.f32 %v3103, %v3103
        %v3106 = vmul.f32 %v3104, %v3104
        %v3107 = vsel %vm3090, %v3105, 0.0
        %v3108 = vsel %vm3090, %v3106, 0.0
        %v3109 = vadd.f32 %v3107, %v3108
        %v3110 = vrot.slane %v3109, 4
        %v3111 = vadd.f32 %v3109, %v3110
        %v3112 = vrot.slane %v3111, 2
        %v3113 = vadd.f32 %v3111, %v3112
        %v3114 = vrot.slane %v3113, 1
        %v3115 = vadd.f32 %v3113, %v3114
        %v3116 = vmul.f32 %v3115, 0.11111111
        %v3117 = vadd.f32 %v3116, 1e-05
        %v3118 = vrsqrt.pop %v3117
        %v3119 = vmul.f32 %v3103, %v3118
        %v3120 = vmul.f32 %v3104, %v3118
        %vm3121 = vcmp.gt.f32.partialorder %v3119, 0.0
        %vm3122 = vcmp.gt.f32.partialorder %v3120, 0.0
        %v3123 = vmul.f32 %v3119, 0.2
        %v3124 = vmul.f32 %v3120, 0.2
        %v3125 = vsel %vm3121, %v3119, %v3123
        %v3126 = vsel %vm3122, %v3120, %v3124
        %v3127 = vld [vmem:[%s9] sm:$0xf]
        %v3128 = vld [vmem:[%s9 + $0x4] sm:$0xf]
        %v3129 = vld [vmem:[%s9 + $0x8] sm:$0xf]
        %v3130 = vld [vmem:[%s9 + $0xc] sm:$0xf]
        %v3131 = vld [vmem:[%s9 + $0x10] sm:$0xf]
        %v3132 = vld [vmem:[%s9 + $0x14] sm:$0xf]
        %v3133 = vld [vmem:[%s9 + $0x18] sm:$0xf]
        %v3134 = vld [vmem:[%s9 + $0x1c] sm:$0xf]
        %v3135 = vld [vmem:[%s9 + $0x20] sm:$0xf]
        %v3136 = vld [vmem:[%s9 + $0x24] sm:$0xf]
        %v3137 = vld [vmem:[%s9 + $0x28] sm:$0xf]
        %v3138 = vld [vmem:[%s9 + $0x2c] sm:$0xf]
        %v3139 = vld [vmem:[%s9 + $0x30] sm:$0xf]
        %v3140 = vld [vmem:[%s9 + $0x34] sm:$0xf]
        %v3141 = vld [vmem:[%s9 + $0x38] sm:$0xf]
        %v3142 = vld [vmem:[%s9 + $0x3c] sm:$0xf]
        %v3143 = vpack.c.bf16 %v3126, %v3125
        %v3160 = vunpack.c.l.b16 %v3127
        %v3161 = vunpack.c.l.b16 %v3128
        %v3162 = vunpack.c.l.b16 %v3129
        %v3163 = vunpack.c.l.b16 %v3130
        %v3164 = vunpack.c.l.b16 %v3131
        %v3165 = vunpack.c.l.b16 %v3132
        %v3166 = vunpack.c.l.b16 %v3133
        %v3167 = vunpack.c.l.b16 %v3134
        %v3168 = vunpack.c.l.b16 %v3135
        %v3169 = vunpack.c.l.b16 %v3136
        %v3170 = vunpack.c.l.b16 %v3137
        %v3171 = vunpack.c.l.b16 %v3138
        %v3172 = vunpack.c.l.b16 %v3139
        %v3173 = vunpack.c.l.b16 %v3140
        %v3174 = vunpack.c.l.b16 %v3141
        %v3175 = vunpack.c.l.b16 %v3142
        %v3176 = vpack.c.b16 %v3161, %v3160
        %v3177 = vpack.c.b16 %v3163, %v3162
        %v3178 = vpack.c.b16 %v3165, %v3164
        %v3179 = vpack.c.b16 %v3167, %v3166
        %v3180 = vpack.c.b16 %v3169, %v3168
        %v3181 = vpack.c.b16 %v3171, %v3170
        %v3182 = vpack.c.b16 %v3173, %v3172
        %v3183 = vpack.c.b16 %v3175, %v3174
        %v3185 = vsel %vm1822, %v3176, 0
        %v3188 = vsel %vm1822, %v3177, 0
        %v3191 = vsel %vm1822, %v3178, 0
        %v3194 = vsel %vm1822, %v3179, 0
        %v3197 = vsel %vm1822, %v3180, 0
        %v3200 = vsel %vm1822, %v3181, 0
        %v3203 = vsel %vm1822, %v3182, 0
        %v3206 = vsel %vm1822, %v3183, 0
        %3208 = vmatprep.subr.bf16.mxu0 0
        %3209 = vmatpush1.bf16.msra.mxu0 0
        %3210 = vmatprep.subr.bf16.mxu0 0
        %3211 = vmatpush1.bf16.msra.mxu0 0
        %3212 = vmatprep.subr.bf16.mxu0 0
        %3213 = vmatpush1.bf16.msra.mxu0 0
        %3214 = vmatprep.subr.bf16.mxu0 0
        %3215 = vmatpush1.bf16.msra.mxu0 0
        %3216 = vmatprep.subr.bf16.mxu0 0
        %3217 = vmatpush1.bf16.msra.mxu0 0
        %3218 = vmatprep.subr.bf16.mxu0 0
        %3219 = vmatpush1.bf16.msra.mxu0 0
        %3220 = vmatprep.subr.bf16.mxu0 0
        %3221 = vmatpush1.bf16.msra.mxu0 0
        %3222 = vmatprep.subr.bf16.mxu0 0
        %3223 = vmatpush1.bf16.msra.mxu0 %v3143
        %3224 = vmatprep.subr.bf16.mxu0 0
        %3225 = vmatpush2.bf16.msra.mxu0 0
        %3226 = vmatprep.subr.bf16.mxu0 0
        %3227 = vmatpush2.bf16.msra.mxu0 0
        %3228 = vmatprep.subr.bf16.mxu0 0
        %3229 = vmatpush2.bf16.msra.mxu0 0
        %3230 = vmatprep.subr.bf16.mxu0 0
        %3231 = vmatpush2.bf16.msra.mxu0 0
        %3232 = vmatprep.subr.bf16.mxu0 0
        %3233 = vmatpush2.bf16.msra.mxu0 0
        %3234 = vmatprep.subr.bf16.mxu0 0
        %3235 = vmatpush2.bf16.msra.mxu0 0
        %3236 = vmatprep.subr.bf16.mxu0 0
        %3237 = vmatpush2.bf16.msra.mxu0 0
        %3238 = vmatprep.subr.bf16.mxu0 0
        %3239 = vmatpush2.bf16.msra.mxu0 0
        %3240 = vmatprep.mubr.bf16.mxu0 0
        %3241 = vmatmul.mubr.bf16.gmra.mxu0 %v3185
        %v3242 = vpop.f32.mrf.mxu0
        %v3243 = vadd.f32 0.0, %v3242
        %v3244 = vpop.f32.mrf.mxu0
        %v3245 = vpop.f32.mrf.mxu0
        %v3246 = vadd.f32 0.0, %v3245
        %v3247 = vpop.f32.mrf.mxu0
        %3248 = vmatprep.mubr.bf16.mxu0 0
        %3249 = vmatmul.mubr.bf16.gmra.mxu0 %v3188
        %v3250 = vpop.f32.mrf.mxu0
        %v3251 = vadd.f32 0.0, %v3250
        %v3252 = vpop.f32.mrf.mxu0
        %v3253 = vpop.f32.mrf.mxu0
        %v3254 = vadd.f32 0.0, %v3253
        %v3255 = vpop.f32.mrf.mxu0
        %3256 = vmatprep.mubr.bf16.mxu0 0
        %3257 = vmatmul.mubr.bf16.gmra.mxu0 %v3191
        %v3258 = vpop.f32.mrf.mxu0
        %v3259 = vadd.f32 0.0, %v3258
        %v3260 = vpop.f32.mrf.mxu0
        %v3261 = vpop.f32.mrf.mxu0
        %v3262 = vadd.f32 0.0, %v3261
        %v3263 = vpop.f32.mrf.mxu0
        %3264 = vmatprep.mubr.bf16.mxu0 0
        %3265 = vmatmul.mubr.bf16.gmra.mxu0 %v3194
        %v3266 = vpop.f32.mrf.mxu0
        %v3267 = vadd.f32 0.0, %v3266
        %v3268 = vpop.f32.mrf.mxu0
        %v3269 = vpop.f32.mrf.mxu0
        %v3270 = vadd.f32 0.0, %v3269
        %v3271 = vpop.f32.mrf.mxu0
        %3272 = vmatprep.mubr.bf16.mxu0 0
        %3273 = vmatmul.mubr.bf16.gmra.mxu0 %v3197
        %v3274 = vpop.f32.mrf.mxu0
        %v3275 = vadd.f32 0.0, %v3274
        %v3276 = vpop.f32.mrf.mxu0
        %v3277 = vpop.f32.mrf.mxu0
        %v3278 = vadd.f32 0.0, %v3277
        %v3279 = vpop.f32.mrf.mxu0
        %3280 = vmatprep.mubr.bf16.mxu0 0
        %3281 = vmatmul.mubr.bf16.gmra.mxu0 %v3200
        %v3282 = vpop.f32.mrf.mxu0
        %v3283 = vadd.f32 0.0, %v3282
        %v3284 = vpop.f32.mrf.mxu0
        %v3285 = vpop.f32.mrf.mxu0
        %v3286 = vadd.f32 0.0, %v3285
        %v3287 = vpop.f32.mrf.mxu0
        %3288 = vmatprep.mubr.bf16.mxu0 0
        %3289 = vmatmul.mubr.bf16.gmra.mxu0 %v3203
        %v3290 = vpop.f32.mrf.mxu0
        %v3291 = vadd.f32 0.0, %v3290
        %v3292 = vpop.f32.mrf.mxu0
        %v3293 = vpop.f32.mrf.mxu0
        %v3294 = vadd.f32 0.0, %v3293
        %v3295 = vpop.f32.mrf.mxu0
        %3296 = vmatprep.mubr.bf16.mxu0 0
        %3297 = vmatmul.mubr.bf16.gmra.mxu0 %v3206
        %v3298 = vpop.f32.mrf.mxu0
        %v3299 = vadd.f32 0.0, %v3298
        %v3300 = vpop.f32.mrf.mxu0
        %v3301 = vpop.f32.mrf.mxu0
        %v3302 = vadd.f32 0.0, %v3301
        %v3303 = vpop.f32.mrf.mxu0
        %3304 = vdwg.mxu0
        %v3305 = vpack.c.bf16 %v3243, %v3243
        %v3306 = vld [vmem:[%s10] sm:$0xf]
        %v3307 = vld [vmem:[%s10 + $0x4] sm:$0xf]
        %v3308 = vld [vmem:[%s10 + $0x8] sm:$0xf]
        %v3309 = vld [vmem:[%s10 + $0xc] sm:$0xf]
        %v3310 = vpack.c.bf16 %v3246, %v3246
        %s3311 = scalar_lea.vmem %s10, 16
        %v3312 = vld [vmem:[%s3311] sm:$0xf]
        %v3313 = vld [vmem:[%s3311 + $0x4] sm:$0xf]
        %v3314 = vld [vmem:[%s3311 + $0x8] sm:$0xf]
        %v3315 = vld [vmem:[%s3311 + $0xc] sm:$0xf]
        %v3320 = vunpack.c.l.b16 %v3312
        %v3321 = vunpack.c.l.b16 %v3313
        %v3322 = vunpack.c.l.b16 %v3314
        %v3323 = vunpack.c.l.b16 %v3315
        %v3324 = vpack.c.b16 %v3321, %v3320
        %v3325 = vpack.c.b16 %v3323, %v3322
        %v3329 = vsel %vm3090, %v3310, 0
        %3331 = vmatprep.subr.bf16.mxu0 0
        %3332 = vmatpush1.bf16.msra.mxu0 0
        %3333 = vmatprep.subr.bf16.mxu0 0
        %3334 = vmatpush1.bf16.msra.mxu0 0
        %3335 = vmatprep.subr.bf16.mxu0 0
        %3336 = vmatpush1.bf16.msra.mxu0 0
        %3337 = vmatprep.subr.bf16.mxu0 0
        %3338 = vmatpush1.bf16.msra.mxu0 0
        %3339 = vmatprep.subr.bf16.mxu0 0
        %3340 = vmatpush1.bf16.msra.mxu0 0
        %3341 = vmatprep.subr.bf16.mxu0 0
        %3342 = vmatpush1.bf16.msra.mxu0 0
        %3343 = vmatprep.subr.bf16.mxu0 0
        %3344 = vmatpush1.bf16.msra.mxu0 %v3325
        %3345 = vmatprep.subr.bf16.mxu0 0
        %3346 = vmatpush1.bf16.msra.mxu0 %v3324
        %3347 = vmatprep.subr.bf16.mxu0 0
        %3348 = vmatpush2.bf16.msra.mxu0 0
        %3349 = vmatprep.subr.bf16.mxu0 0
        %3350 = vmatpush2.bf16.msra.mxu0 0
        %3351 = vmatprep.subr.bf16.mxu0 0
        %3352 = vmatpush2.bf16.msra.mxu0 0
        %3353 = vmatprep.subr.bf16.mxu0 0
        %3354 = vmatpush2.bf16.msra.mxu0 0
        %3355 = vmatprep.subr.bf16.mxu0 0
        %3356 = vmatpush2.bf16.msra.mxu0 0
        %3357 = vmatprep.subr.bf16.mxu0 0
        %3358 = vmatpush2.bf16.msra.mxu0 0
        %3359 = vmatprep.subr.bf16.mxu0 0
        %3360 = vmatpush2.bf16.msra.mxu0 0
        %3361 = vmatprep.subr.bf16.mxu0 0
        %3362 = vmatpush2.bf16.msra.mxu0 0
        %3363 = vmatprep.mubr.bf16.mxu0 0
        %3364 = vmatmul.mubr.bf16.gmra.mxu0 %v3329
        %v3365 = vpop.f32.mrf.mxu0
        %v3366 = vadd.f32 0.0, %v3365
        %v3367 = vpop.f32.mrf.mxu0
        %v3368 = vpop.f32.mrf.mxu0
        %v3369 = vpop.f32.mrf.mxu0
        %3370 = vdwg.mxu0
        %v3375 = vunpack.c.l.b16 %v3306
        %v3376 = vunpack.c.l.b16 %v3307
        %v3377 = vunpack.c.l.b16 %v3308
        %v3378 = vunpack.c.l.b16 %v3309
        %v3379 = vpack.c.b16 %v3376, %v3375
        %v3380 = vpack.c.b16 %v3378, %v3377
        %v3384 = vsel %vm3090, %v3305, 0
        %3386 = vmatprep.subr.bf16.mxu0 0
        %3387 = vmatpush1.bf16.msra.mxu0 0
        %3388 = vmatprep.subr.bf16.mxu0 0
        %3389 = vmatpush1.bf16.msra.mxu0 0
        %3390 = vmatprep.subr.bf16.mxu0 0
        %3391 = vmatpush1.bf16.msra.mxu0 0
        %3392 = vmatprep.subr.bf16.mxu0 0
        %3393 = vmatpush1.bf16.msra.mxu0 0
        %3394 = vmatprep.subr.bf16.mxu0 0
        %3395 = vmatpush1.bf16.msra.mxu0 0
        %3396 = vmatprep.subr.bf16.mxu0 0
        %3397 = vmatpush1.bf16.msra.mxu0 0
        %3398 = vmatprep.subr.bf16.mxu0 0
        %3399 = vmatpush1.bf16.msra.mxu0 %v3380
        %3400 = vmatprep.subr.bf16.mxu0 0
        %3401 = vmatpush1.bf16.msra.mxu0 %v3379
        %3402 = vmatprep.subr.bf16.mxu0 0
        %3403 = vmatpush2.bf16.msra.mxu0 0
        %3404 = vmatprep.subr.bf16.mxu0 0
        %3405 = vmatpush2.bf16.msra.mxu0 0
        %3406 = vmatprep.subr.bf16.mxu0 0
        %3407 = vmatpush2.bf16.msra.mxu0 0
        %3408 = vmatprep.subr.bf16.mxu0 0
        %3409 = vmatpush2.bf16.msra.mxu0 0
        %3410 = vmatprep.subr.bf16.mxu0 0
        %3411 = vmatpush2.bf16.msra.mxu0 0
        %3412 = vmatprep.subr.bf16.mxu0 0
        %3413 = vmatpush2.bf16.msra.mxu0 0
        %3414 = vmatprep.subr.bf16.mxu0 0
        %3415 = vmatpush2.bf16.msra.mxu0 0
        %3416 = vmatprep.subr.bf16.mxu0 0
        %3417 = vmatpush2.bf16.msra.mxu0 0
        %3418 = vmatprep.mubr.bf16.mxu0 0
        %3419 = vmatmul.mubr.bf16.gmra.mxu0 %v3384
        %v3420 = vpop.f32.mrf.mxu0
        %v3421 = vadd.f32 %v3366, %v3420
        %v3422 = vpop.f32.mrf.mxu0
        %v3423 = vpop.f32.mrf.mxu0
        %v3424 = vpop.f32.mrf.mxu0
        %3425 = vdwg.mxu0
        %v3426 = vpack.c.bf16 %v3251, %v3251
        %s3427 = scalar_lea.vmem %s10, 32
        %v3428 = vld [vmem:[%s3427] sm:$0xf]
        %v3429 = vld [vmem:[%s3427 + $0x4] sm:$0xf]
        %v3430 = vld [vmem:[%s3427 + $0x8] sm:$0xf]
        %v3431 = vld [vmem:[%s3427 + $0xc] sm:$0xf]
        %v3436 = vunpack.c.l.b16 %v3428
        %v3437 = vunpack.c.l.b16 %v3429
        %v3438 = vunpack.c.l.b16 %v3430
        %v3439 = vunpack.c.l.b16 %v3431
        %v3440 = vpack.c.b16 %v3437, %v3436
        %v3441 = vpack.c.b16 %v3439, %v3438
        %v3445 = vsel %vm3090, %v3426, 0
        %3447 = vmatprep.subr.bf16.mxu0 0
        %3448 = vmatpush1.bf16.msra.mxu0 0
        %3449 = vmatprep.subr.bf16.mxu0 0
        %3450 = vmatpush1.bf16.msra.mxu0 0
        %3451 = vmatprep.subr.bf16.mxu0 0
        %3452 = vmatpush1.bf16.msra.mxu0 0
        %3453 = vmatprep.subr.bf16.mxu0 0
        %3454 = vmatpush1.bf16.msra.mxu0 0
        %3455 = vmatprep.subr.bf16.mxu0 0
        %3456 = vmatpush1.bf16.msra.mxu0 0
        %3457 = vmatprep.subr.bf16.mxu0 0
        %3458 = vmatpush1.bf16.msra.mxu0 0
        %3459 = vmatprep.subr.bf16.mxu0 0
        %3460 = vmatpush1.bf16.msra.mxu0 %v3441
        %3461 = vmatprep.subr.bf16.mxu0 0
        %3462 = vmatpush1.bf16.msra.mxu0 %v3440
        %3463 = vmatprep.subr.bf16.mxu0 0
        %3464 = vmatpush2.bf16.msra.mxu0 0
        %3465 = vmatprep.subr.bf16.mxu0 0
        %3466 = vmatpush2.bf16.msra.mxu0 0
        %3467 = vmatprep.subr.bf16.mxu0 0
        %3468 = vmatpush2.bf16.msra.mxu0 0
        %3469 = vmatprep.subr.bf16.mxu0 0
        %3470 = vmatpush2.bf16.msra.mxu0 0
        %3471 = vmatprep.subr.bf16.mxu0 0
        %3472 = vmatpush2.bf16.msra.mxu0 0
        %3473 = vmatprep.subr.bf16.mxu0 0
        %3474 = vmatpush2.bf16.msra.mxu0 0
        %3475 = vmatprep.subr.bf16.mxu0 0
        %3476 = vmatpush2.bf16.msra.mxu0 0
        %3477 = vmatprep.subr.bf16.mxu0 0
        %3478 = vmatpush2.bf16.msra.mxu0 0
        %3479 = vmatprep.mubr.bf16.mxu0 0
        %3480 = vmatmul.mubr.bf16.gmra.mxu0 %v3445
        %v3481 = vpop.f32.mrf.mxu0
        %v3482 = vadd.f32 0.0, %v3481
        %v3483 = vpop.f32.mrf.mxu0
        %v3484 = vpop.f32.mrf.mxu0
        %v3485 = vpop.f32.mrf.mxu0
        %3486 = vdwg.mxu0
        %v3487 = vadd.f32 %v3421, %v3482
        %v3488 = vpack.c.bf16 %v3254, %v3254
        %s3489 = scalar_lea.vmem %s10, 48
        %v3490 = vld [vmem:[%s3489] sm:$0xf]
        %v3491 = vld [vmem:[%s3489 + $0x4] sm:$0xf]
        %v3492 = vld [vmem:[%s3489 + $0x8] sm:$0xf]
        %v3493 = vld [vmem:[%s3489 + $0xc] sm:$0xf]
        %v3498 = vunpack.c.l.b16 %v3490
        %v3499 = vunpack.c.l.b16 %v3491
        %v3500 = vunpack.c.l.b16 %v3492
        %v3501 = vunpack.c.l.b16 %v3493
        %v3502 = vpack.c.b16 %v3499, %v3498
        %v3503 = vpack.c.b16 %v3501, %v3500
        %v3507 = vsel %vm3090, %v3488, 0
        %3509 = vmatprep.subr.bf16.mxu0 0
        %3510 = vmatpush1.bf16.msra.mxu0 0
        %3511 = vmatprep.subr.bf16.mxu0 0
        %3512 = vmatpush1.bf16.msra.mxu0 0
        %3513 = vmatprep.subr.bf16.mxu0 0
        %3514 = vmatpush1.bf16.msra.mxu0 0
        %3515 = vmatprep.subr.bf16.mxu0 0
        %3516 = vmatpush1.bf16.msra.mxu0 0
        %3517 = vmatprep.subr.bf16.mxu0 0
        %3518 = vmatpush1.bf16.msra.mxu0 0
        %3519 = vmatprep.subr.bf16.mxu0 0
        %3520 = vmatpush1.bf16.msra.mxu0 0
        %3521 = vmatprep.subr.bf16.mxu0 0
        %3522 = vmatpush1.bf16.msra.mxu0 %v3503
        %3523 = vmatprep.subr.bf16.mxu0 0
        %3524 = vmatpush1.bf16.msra.mxu0 %v3502
        %3525 = vmatprep.subr.bf16.mxu0 0
        %3526 = vmatpush2.bf16.msra.mxu0 0
        %3527 = vmatprep.subr.bf16.mxu0 0
        %3528 = vmatpush2.bf16.msra.mxu0 0
        %3529 = vmatprep.subr.bf16.mxu0 0
        %3530 = vmatpush2.bf16.msra.mxu0 0
        %3531 = vmatprep.subr.bf16.mxu0 0
        %3532 = vmatpush2.bf16.msra.mxu0 0
        %3533 = vmatprep.subr.bf16.mxu0 0
        %3534 = vmatpush2.bf16.msra.mxu0 0
        %3535 = vmatprep.subr.bf16.mxu0 0
        %3536 = vmatpush2.bf16.msra.mxu0 0
        %3537 = vmatprep.subr.bf16.mxu0 0
        %3538 = vmatpush2.bf16.msra.mxu0 0
        %3539 = vmatprep.subr.bf16.mxu0 0
        %3540 = vmatpush2.bf16.msra.mxu0 0
        %3541 = vmatprep.mubr.bf16.mxu0 0
        %3542 = vmatmul.mubr.bf16.gmra.mxu0 %v3507
        %v3543 = vpop.f32.mrf.mxu0
        %v3544 = vadd.f32 0.0, %v3543
        %v3545 = vpop.f32.mrf.mxu0
        %v3546 = vpop.f32.mrf.mxu0
        %v3547 = vpop.f32.mrf.mxu0
        %3548 = vdwg.mxu0
        %v3549 = vadd.f32 %v3487, %v3544
        %v3550 = vpack.c.bf16 %v3259, %v3259
        %s3551 = scalar_lea.vmem %s10, 64
        %v3552 = vld [vmem:[%s3551] sm:$0xf]
        %v3553 = vld [vmem:[%s3551 + $0x4] sm:$0xf]
        %v3554 = vld [vmem:[%s3551 + $0x8] sm:$0xf]
        %v3555 = vld [vmem:[%s3551 + $0xc] sm:$0xf]
        %v3560 = vunpack.c.l.b16 %v3552
        %v3561 = vunpack.c.l.b16 %v3553
        %v3562 = vunpack.c.l.b16 %v3554
        %v3563 = vunpack.c.l.b16 %v3555
        %v3564 = vpack.c.b16 %v3561, %v3560
        %v3565 = vpack.c.b16 %v3563, %v3562
        %v3569 = vsel %vm3090, %v3550, 0
        %3571 = vmatprep.subr.bf16.mxu0 0
        %3572 = vmatpush1.bf16.msra.mxu0 0
        %3573 = vmatprep.subr.bf16.mxu0 0
        %3574 = vmatpush1.bf16.msra.mxu0 0
        %3575 = vmatprep.subr.bf16.mxu0 0
        %3576 = vmatpush1.bf16.msra.mxu0 0
        %3577 = vmatprep.subr.bf16.mxu0 0
        %3578 = vmatpush1.bf16.msra.mxu0 0
        %3579 = vmatprep.subr.bf16.mxu0 0
        %3580 = vmatpush1.bf16.msra.mxu0 0
        %3581 = vmatprep.subr.bf16.mxu0 0
        %3582 = vmatpush1.bf16.msra.mxu0 0
        %3583 = vmatprep.subr.bf16.mxu0 0
        %3584 = vmatpush1.bf16.msra.mxu0 %v3565
        %3585 = vmatprep.subr.bf16.mxu0 0
        %3586 = vmatpush1.bf16.msra.mxu0 %v3564
        %3587 = vmatprep.subr.bf16.mxu0 0
        %3588 = vmatpush2.bf16.msra.mxu0 0
        %3589 = vmatprep.subr.bf16.mxu0 0
        %3590 = vmatpush2.bf16.msra.mxu0 0
        %3591 = vmatprep.subr.bf16.mxu0 0
        %3592 = vmatpush2.bf16.msra.mxu0 0
        %3593 = vmatprep.subr.bf16.mxu0 0
        %3594 = vmatpush2.bf16.msra.mxu0 0
        %3595 = vmatprep.subr.bf16.mxu0 0
        %3596 = vmatpush2.bf16.msra.mxu0 0
        %3597 = vmatprep.subr.bf16.mxu0 0
        %3598 = vmatpush2.bf16.msra.mxu0 0
        %3599 = vmatprep.subr.bf16.mxu0 0
        %3600 = vmatpush2.bf16.msra.mxu0 0
        %3601 = vmatprep.subr.bf16.mxu0 0
        %3602 = vmatpush2.bf16.msra.mxu0 0
        %3603 = vmatprep.mubr.bf16.mxu0 0
        %3604 = vmatmul.mubr.bf16.gmra.mxu0 %v3569
        %v3605 = vpop.f32.mrf.mxu0
        %v3606 = vadd.f32 0.0, %v3605
        %v3607 = vpop.f32.mrf.mxu0
        %v3608 = vpop.f32.mrf.mxu0
        %v3609 = vpop.f32.mrf.mxu0
        %3610 = vdwg.mxu0
        %v3611 = vadd.f32 %v3549, %v3606
        %v3612 = vpack.c.bf16 %v3262, %v3262
        %s3613 = scalar_lea.vmem %s10, 80
        %v3614 = vld [vmem:[%s3613] sm:$0xf]
        %v3615 = vld [vmem:[%s3613 + $0x4] sm:$0xf]
        %v3616 = vld [vmem:[%s3613 + $0x8] sm:$0xf]
        %v3617 = vld [vmem:[%s3613 + $0xc] sm:$0xf]
        %v3622 = vunpack.c.l.b16 %v3614
        %v3623 = vunpack.c.l.b16 %v3615
        %v3624 = vunpack.c.l.b16 %v3616
        %v3625 = vunpack.c.l.b16 %v3617
        %v3626 = vpack.c.b16 %v3623, %v3622
        %v3627 = vpack.c.b16 %v3625, %v3624
        %v3631 = vsel %vm3090, %v3612, 0
        %3633 = vmatprep.subr.bf16.mxu0 0
        %3634 = vmatpush1.bf16.msra.mxu0 0
        %3635 = vmatprep.subr.bf16.mxu0 0
        %3636 = vmatpush1.bf16.msra.mxu0 0
        %3637 = vmatprep.subr.bf16.mxu0 0
        %3638 = vmatpush1.bf16.msra.mxu0 0
        %3639 = vmatprep.subr.bf16.mxu0 0
        %3640 = vmatpush1.bf16.msra.mxu0 0
        %3641 = vmatprep.subr.bf16.mxu0 0
        %3642 = vmatpush1.bf16.msra.mxu0 0
        %3643 = vmatprep.subr.bf16.mxu0 0
        %3644 = vmatpush1.bf16.msra.mxu0 0
        %3645 = vmatprep.subr.bf16.mxu0 0
        %3646 = vmatpush1.bf16.msra.mxu0 %v3627
        %3647 = vmatprep.subr.bf16.mxu0 0
        %3648 = vmatpush1.bf16.msra.mxu0 %v3626
        %3649 = vmatprep.subr.bf16.mxu0 0
        %3650 = vmatpush2.bf16.msra.mxu0 0
        %3651 = vmatprep.subr.bf16.mxu0 0
        %3652 = vmatpush2.bf16.msra.mxu0 0
        %3653 = vmatprep.subr.bf16.mxu0 0
        %3654 = vmatpush2.bf16.msra.mxu0 0
        %3655 = vmatprep.subr.bf16.mxu0 0
        %3656 = vmatpush2.bf16.msra.mxu0 0
        %3657 = vmatprep.subr.bf16.mxu0 0
        %3658 = vmatpush2.bf16.msra.mxu0 0
        %3659 = vmatprep.subr.bf16.mxu0 0
        %3660 = vmatpush2.bf16.msra.mxu0 0
        %3661 = vmatprep.subr.bf16.mxu0 0
        %3662 = vmatpush2.bf16.msra.mxu0 0
        %3663 = vmatprep.subr.bf16.mxu0 0
        %3664 = vmatpush2.bf16.msra.mxu0 0
        %3665 = vmatprep.mubr.bf16.mxu0 0
        %3666 = vmatmul.mubr.bf16.gmra.mxu0 %v3631
        %v3667 = vpop.f32.mrf.mxu0
        %v3668 = vadd.f32 0.0, %v3667
        %v3669 = vpop.f32.mrf.mxu0
        %v3670 = vpop.f32.mrf.mxu0
        %v3671 = vpop.f32.mrf.mxu0
        %3672 = vdwg.mxu0
        %v3673 = vadd.f32 %v3611, %v3668
        %v3674 = vpack.c.bf16 %v3267, %v3267
        %s3675 = scalar_lea.vmem %s10, 96
        %v3676 = vld [vmem:[%s3675] sm:$0xf]
        %v3677 = vld [vmem:[%s3675 + $0x4] sm:$0xf]
        %v3678 = vld [vmem:[%s3675 + $0x8] sm:$0xf]
        %v3679 = vld [vmem:[%s3675 + $0xc] sm:$0xf]
        %v3684 = vunpack.c.l.b16 %v3676
        %v3685 = vunpack.c.l.b16 %v3677
        %v3686 = vunpack.c.l.b16 %v3678
        %v3687 = vunpack.c.l.b16 %v3679
        %v3688 = vpack.c.b16 %v3685, %v3684
        %v3689 = vpack.c.b16 %v3687, %v3686
        %v3693 = vsel %vm3090, %v3674, 0
        %3695 = vmatprep.subr.bf16.mxu0 0
        %3696 = vmatpush1.bf16.msra.mxu0 0
        %3697 = vmatprep.subr.bf16.mxu0 0
        %3698 = vmatpush1.bf16.msra.mxu0 0
        %3699 = vmatprep.subr.bf16.mxu0 0
        %3700 = vmatpush1.bf16.msra.mxu0 0
        %3701 = vmatprep.subr.bf16.mxu0 0
        %3702 = vmatpush1.bf16.msra.mxu0 0
        %3703 = vmatprep.subr.bf16.mxu0 0
        %3704 = vmatpush1.bf16.msra.mxu0 0
        %3705 = vmatprep.subr.bf16.mxu0 0
        %3706 = vmatpush1.bf16.msra.mxu0 0
        %3707 = vmatprep.subr.bf16.mxu0 0
        %3708 = vmatpush1.bf16.msra.mxu0 %v3689
        %3709 = vmatprep.subr.bf16.mxu0 0
        %3710 = vmatpush1.bf16.msra.mxu0 %v3688
        %3711 = vmatprep.subr.bf16.mxu0 0
        %3712 = vmatpush2.bf16.msra.mxu0 0
        %3713 = vmatprep.subr.bf16.mxu0 0
        %3714 = vmatpush2.bf16.msra.mxu0 0
        %3715 = vmatprep.subr.bf16.mxu0 0
        %3716 = vmatpush2.bf16.msra.mxu0 0
        %3717 = vmatprep.subr.bf16.mxu0 0
        %3718 = vmatpush2.bf16.msra.mxu0 0
        %3719 = vmatprep.subr.bf16.mxu0 0
        %3720 = vmatpush2.bf16.msra.mxu0 0
        %3721 = vmatprep.subr.bf16.mxu0 0
        %3722 = vmatpush2.bf16.msra.mxu0 0
        %3723 = vmatprep.subr.bf16.mxu0 0
        %3724 = vmatpush2.bf16.msra.mxu0 0
        %3725 = vmatprep.subr.bf16.mxu0 0
        %3726 = vmatpush2.bf16.msra.mxu0 0
        %3727 = vmatprep.mubr.bf16.mxu0 0
        %3728 = vmatmul.mubr.bf16.gmra.mxu0 %v3693
        %v3729 = vpop.f32.mrf.mxu0
        %v3730 = vadd.f32 0.0, %v3729
        %v3731 = vpop.f32.mrf.mxu0
        %v3732 = vpop.f32.mrf.mxu0
        %v3733 = vpop.f32.mrf.mxu0
        %3734 = vdwg.mxu0
        %v3735 = vadd.f32 %v3673, %v3730
        %v3736 = vpack.c.bf16 %v3270, %v3270
        %s3737 = scalar_lea.vmem %s10, 112
        %v3738 = vld [vmem:[%s3737] sm:$0xf]
        %v3739 = vld [vmem:[%s3737 + $0x4] sm:$0xf]
        %v3740 = vld [vmem:[%s3737 + $0x8] sm:$0xf]
        %v3741 = vld [vmem:[%s3737 + $0xc] sm:$0xf]
        %v3746 = vunpack.c.l.b16 %v3738
        %v3747 = vunpack.c.l.b16 %v3739
        %v3748 = vunpack.c.l.b16 %v3740
        %v3749 = vunpack.c.l.b16 %v3741
        %v3750 = vpack.c.b16 %v3747, %v3746
        %v3751 = vpack.c.b16 %v3749, %v3748
        %v3755 = vsel %vm3090, %v3736, 0
        %3757 = vmatprep.subr.bf16.mxu0 0
        %3758 = vmatpush1.bf16.msra.mxu0 0
        %3759 = vmatprep.subr.bf16.mxu0 0
        %3760 = vmatpush1.bf16.msra.mxu0 0
        %3761 = vmatprep.subr.bf16.mxu0 0
        %3762 = vmatpush1.bf16.msra.mxu0 0
        %3763 = vmatprep.subr.bf16.mxu0 0
        %3764 = vmatpush1.bf16.msra.mxu0 0
        %3765 = vmatprep.subr.bf16.mxu0 0
        %3766 = vmatpush1.bf16.msra.mxu0 0
        %3767 = vmatprep.subr.bf16.mxu0 0
        %3768 = vmatpush1.bf16.msra.mxu0 0
        %3769 = vmatprep.subr.bf16.mxu0 0
        %3770 = vmatpush1.bf16.msra.mxu0 %v3751
        %3771 = vmatprep.subr.bf16.mxu0 0
        %3772 = vmatpush1.bf16.msra.mxu0 %v3750
        %3773 = vmatprep.subr.bf16.mxu0 0
        %3774 = vmatpush2.bf16.msra.mxu0 0
        %3775 = vmatprep.subr.bf16.mxu0 0
        %3776 = vmatpush2.bf16.msra.mxu0 0
        %3777 = vmatprep.subr.bf16.mxu0 0
        %3778 = vmatpush2.bf16.msra.mxu0 0
        %3779 = vmatprep.subr.bf16.mxu0 0
        %3780 = vmatpush2.bf16.msra.mxu0 0
        %3781 = vmatprep.subr.bf16.mxu0 0
        %3782 = vmatpush2.bf16.msra.mxu0 0
        %3783 = vmatprep.subr.bf16.mxu0 0
        %3784 = vmatpush2.bf16.msra.mxu0 0
        %3785 = vmatprep.subr.bf16.mxu0 0
        %3786 = vmatpush2.bf16.msra.mxu0 0
        %3787 = vmatprep.subr.bf16.mxu0 0
        %3788 = vmatpush2.bf16.msra.mxu0 0
        %3789 = vmatprep.mubr.bf16.mxu0 0
        %3790 = vmatmul.mubr.bf16.gmra.mxu0 %v3755
        %v3791 = vpop.f32.mrf.mxu0
        %v3792 = vadd.f32 0.0, %v3791
        %v3793 = vpop.f32.mrf.mxu0
        %v3794 = vpop.f32.mrf.mxu0
        %v3795 = vpop.f32.mrf.mxu0
        %3796 = vdwg.mxu0
        %v3797 = vadd.f32 %v3735, %v3792
        %v3798 = vpack.c.bf16 %v3275, %v3275
        %s3799 = scalar_lea.vmem %s10, 128
        %v3800 = vld [vmem:[%s3799] sm:$0xf]
        %v3801 = vld [vmem:[%s3799 + $0x4] sm:$0xf]
        %v3802 = vld [vmem:[%s3799 + $0x8] sm:$0xf]
        %v3803 = vld [vmem:[%s3799 + $0xc] sm:$0xf]
        %v3808 = vunpack.c.l.b16 %v3800
        %v3809 = vunpack.c.l.b16 %v3801
        %v3810 = vunpack.c.l.b16 %v3802
        %v3811 = vunpack.c.l.b16 %v3803
        %v3812 = vpack.c.b16 %v3809, %v3808
        %v3813 = vpack.c.b16 %v3811, %v3810
        %v3817 = vsel %vm3090, %v3798, 0
        %3819 = vmatprep.subr.bf16.mxu0 0
        %3820 = vmatpush1.bf16.msra.mxu0 0
        %3821 = vmatprep.subr.bf16.mxu0 0
        %3822 = vmatpush1.bf16.msra.mxu0 0
        %3823 = vmatprep.subr.bf16.mxu0 0
        %3824 = vmatpush1.bf16.msra.mxu0 0
        %3825 = vmatprep.subr.bf16.mxu0 0
        %3826 = vmatpush1.bf16.msra.mxu0 0
        %3827 = vmatprep.subr.bf16.mxu0 0
        %3828 = vmatpush1.bf16.msra.mxu0 0
        %3829 = vmatprep.subr.bf16.mxu0 0
        %3830 = vmatpush1.bf16.msra.mxu0 0
        %3831 = vmatprep.subr.bf16.mxu0 0
        %3832 = vmatpush1.bf16.msra.mxu0 %v3813
        %3833 = vmatprep.subr.bf16.mxu0 0
        %3834 = vmatpush1.bf16.msra.mxu0 %v3812
        %3835 = vmatprep.subr.bf16.mxu0 0
        %3836 = vmatpush2.bf16.msra.mxu0 0
        %3837 = vmatprep.subr.bf16.mxu0 0
        %3838 = vmatpush2.bf16.msra.mxu0 0
        %3839 = vmatprep.subr.bf16.mxu0 0
        %3840 = vmatpush2.bf16.msra.mxu0 0
        %3841 = vmatprep.subr.bf16.mxu0 0
        %3842 = vmatpush2.bf16.msra.mxu0 0
        %3843 = vmatprep.subr.bf16.mxu0 0
        %3844 = vmatpush2.bf16.msra.mxu0 0
        %3845 = vmatprep.subr.bf16.mxu0 0
        %3846 = vmatpush2.bf16.msra.mxu0 0
        %3847 = vmatprep.subr.bf16.mxu0 0
        %3848 = vmatpush2.bf16.msra.mxu0 0
        %3849 = vmatprep.subr.bf16.mxu0 0
        %3850 = vmatpush2.bf16.msra.mxu0 0
        %3851 = vmatprep.mubr.bf16.mxu0 0
        %3852 = vmatmul.mubr.bf16.gmra.mxu0 %v3817
        %v3853 = vpop.f32.mrf.mxu0
        %v3854 = vadd.f32 0.0, %v3853
        %v3855 = vpop.f32.mrf.mxu0
        %v3856 = vpop.f32.mrf.mxu0
        %v3857 = vpop.f32.mrf.mxu0
        %3858 = vdwg.mxu0
        %v3859 = vadd.f32 %v3797, %v3854
        %v3860 = vpack.c.bf16 %v3278, %v3278
        %s3861 = scalar_lea.vmem %s10, 144
        %v3862 = vld [vmem:[%s3861] sm:$0xf]
        %v3863 = vld [vmem:[%s3861 + $0x4] sm:$0xf]
        %v3864 = vld [vmem:[%s3861 + $0x8] sm:$0xf]
        %v3865 = vld [vmem:[%s3861 + $0xc] sm:$0xf]
        %v3870 = vunpack.c.l.b16 %v3862
        %v3871 = vunpack.c.l.b16 %v3863
        %v3872 = vunpack.c.l.b16 %v3864
        %v3873 = vunpack.c.l.b16 %v3865
        %v3874 = vpack.c.b16 %v3871, %v3870
        %v3875 = vpack.c.b16 %v3873, %v3872
        %v3879 = vsel %vm3090, %v3860, 0
        %3881 = vmatprep.subr.bf16.mxu0 0
        %3882 = vmatpush1.bf16.msra.mxu0 0
        %3883 = vmatprep.subr.bf16.mxu0 0
        %3884 = vmatpush1.bf16.msra.mxu0 0
        %3885 = vmatprep.subr.bf16.mxu0 0
        %3886 = vmatpush1.bf16.msra.mxu0 0
        %3887 = vmatprep.subr.bf16.mxu0 0
        %3888 = vmatpush1.bf16.msra.mxu0 0
        %3889 = vmatprep.subr.bf16.mxu0 0
        %3890 = vmatpush1.bf16.msra.mxu0 0
        %3891 = vmatprep.subr.bf16.mxu0 0
        %3892 = vmatpush1.bf16.msra.mxu0 0
        %3893 = vmatprep.subr.bf16.mxu0 0
        %3894 = vmatpush1.bf16.msra.mxu0 %v3875
        %3895 = vmatprep.subr.bf16.mxu0 0
        %3896 = vmatpush1.bf16.msra.mxu0 %v3874
        %3897 = vmatprep.subr.bf16.mxu0 0
        %3898 = vmatpush2.bf16.msra.mxu0 0
        %3899 = vmatprep.subr.bf16.mxu0 0
        %3900 = vmatpush2.bf16.msra.mxu0 0
        %3901 = vmatprep.subr.bf16.mxu0 0
        %3902 = vmatpush2.bf16.msra.mxu0 0
        %3903 = vmatprep.subr.bf16.mxu0 0
        %3904 = vmatpush2.bf16.msra.mxu0 0
        %3905 = vmatprep.subr.bf16.mxu0 0
        %3906 = vmatpush2.bf16.msra.mxu0 0
        %3907 = vmatprep.subr.bf16.mxu0 0
        %3908 = vmatpush2.bf16.msra.mxu0 0
        %3909 = vmatprep.subr.bf16.mxu0 0
        %3910 = vmatpush2.bf16.msra.mxu0 0
        %3911 = vmatprep.subr.bf16.mxu0 0
        %3912 = vmatpush2.bf16.msra.mxu0 0
        %3913 = vmatprep.mubr.bf16.mxu0 0
        %3914 = vmatmul.mubr.bf16.gmra.mxu0 %v3879
        %v3915 = vpop.f32.mrf.mxu0
        %v3916 = vadd.f32 0.0, %v3915
        %v3917 = vpop.f32.mrf.mxu0
        %v3918 = vpop.f32.mrf.mxu0
        %v3919 = vpop.f32.mrf.mxu0
        %3920 = vdwg.mxu0
        %v3921 = vadd.f32 %v3859, %v3916
        %v3922 = vpack.c.bf16 %v3283, %v3283
        %s3923 = scalar_lea.vmem %s10, 160
        %v3924 = vld [vmem:[%s3923] sm:$0xf]
        %v3925 = vld [vmem:[%s3923 + $0x4] sm:$0xf]
        %v3926 = vld [vmem:[%s3923 + $0x8] sm:$0xf]
        %v3927 = vld [vmem:[%s3923 + $0xc] sm:$0xf]
        %v3932 = vunpack.c.l.b16 %v3924
        %v3933 = vunpack.c.l.b16 %v3925
        %v3934 = vunpack.c.l.b16 %v3926
        %v3935 = vunpack.c.l.b16 %v3927
        %v3936 = vpack.c.b16 %v3933, %v3932
        %v3937 = vpack.c.b16 %v3935, %v3934
        %v3941 = vsel %vm3090, %v3922, 0
        %3943 = vmatprep.subr.bf16.mxu0 0
        %3944 = vmatpush1.bf16.msra.mxu0 0
        %3945 = vmatprep.subr.bf16.mxu0 0
        %3946 = vmatpush1.bf16.msra.mxu0 0
        %3947 = vmatprep.subr.bf16.mxu0 0
        %3948 = vmatpush1.bf16.msra.mxu0 0
        %3949 = vmatprep.subr.bf16.mxu0 0
        %3950 = vmatpush1.bf16.msra.mxu0 0
        %3951 = vmatprep.subr.bf16.mxu0 0
        %3952 = vmatpush1.bf16.msra.mxu0 0
        %3953 = vmatprep.subr.bf16.mxu0 0
        %3954 = vmatpush1.bf16.msra.mxu0 0
        %3955 = vmatprep.subr.bf16.mxu0 0
        %3956 = vmatpush1.bf16.msra.mxu0 %v3937
        %3957 = vmatprep.subr.bf16.mxu0 0
        %3958 = vmatpush1.bf16.msra.mxu0 %v3936
        %3959 = vmatprep.subr.bf16.mxu0 0
        %3960 = vmatpush2.bf16.msra.mxu0 0
        %3961 = vmatprep.subr.bf16.mxu0 0
        %3962 = vmatpush2.bf16.msra.mxu0 0
        %3963 = vmatprep.subr.bf16.mxu0 0
        %3964 = vmatpush2.bf16.msra.mxu0 0
        %3965 = vmatprep.subr.bf16.mxu0 0
        %3966 = vmatpush2.bf16.msra.mxu0 0
        %3967 = vmatprep.subr.bf16.mxu0 0
        %3968 = vmatpush2.bf16.msra.mxu0 0
        %3969 = vmatprep.subr.bf16.mxu0 0
        %3970 = vmatpush2.bf16.msra.mxu0 0
        %3971 = vmatprep.subr.bf16.mxu0 0
        %3972 = vmatpush2.bf16.msra.mxu0 0
        %3973 = vmatprep.subr.bf16.mxu0 0
        %3974 = vmatpush2.bf16.msra.mxu0 0
        %3975 = vmatprep.mubr.bf16.mxu0 0
        %3976 = vmatmul.mubr.bf16.gmra.mxu0 %v3941
        %v3977 = vpop.f32.mrf.mxu0
        %v3978 = vadd.f32 0.0, %v3977
        %v3979 = vpop.f32.mrf.mxu0
        %v3980 = vpop.f32.mrf.mxu0
        %v3981 = vpop.f32.mrf.mxu0
        %3982 = vdwg.mxu0
        %v3983 = vadd.f32 %v3921, %v3978
        %v3984 = vpack.c.bf16 %v3286, %v3286
        %s3985 = scalar_lea.vmem %s10, 176
        %v3986 = vld [vmem:[%s3985] sm:$0xf]
        %v3987 = vld [vmem:[%s3985 + $0x4] sm:$0xf]
        %v3988 = vld [vmem:[%s3985 + $0x8] sm:$0xf]
        %v3989 = vld [vmem:[%s3985 + $0xc] sm:$0xf]
        %v3994 = vunpack.c.l.b16 %v3986
        %v3995 = vunpack.c.l.b16 %v3987
        %v3996 = vunpack.c.l.b16 %v3988
        %v3997 = vunpack.c.l.b16 %v3989
        %v3998 = vpack.c.b16 %v3995, %v3994
        %v3999 = vpack.c.b16 %v3997, %v3996
        %v4003 = vsel %vm3090, %v3984, 0
        %4005 = vmatprep.subr.bf16.mxu0 0
        %4006 = vmatpush1.bf16.msra.mxu0 0
        %4007 = vmatprep.subr.bf16.mxu0 0
        %4008 = vmatpush1.bf16.msra.mxu0 0
        %4009 = vmatprep.subr.bf16.mxu0 0
        %4010 = vmatpush1.bf16.msra.mxu0 0
        %4011 = vmatprep.subr.bf16.mxu0 0
        %4012 = vmatpush1.bf16.msra.mxu0 0
        %4013 = vmatprep.subr.bf16.mxu0 0
        %4014 = vmatpush1.bf16.msra.mxu0 0
        %4015 = vmatprep.subr.bf16.mxu0 0
        %4016 = vmatpush1.bf16.msra.mxu0 0
        %4017 = vmatprep.subr.bf16.mxu0 0
        %4018 = vmatpush1.bf16.msra.mxu0 %v3999
        %4019 = vmatprep.subr.bf16.mxu0 0
        %4020 = vmatpush1.bf16.msra.mxu0 %v3998
        %4021 = vmatprep.subr.bf16.mxu0 0
        %4022 = vmatpush2.bf16.msra.mxu0 0
        %4023 = vmatprep.subr.bf16.mxu0 0
        %4024 = vmatpush2.bf16.msra.mxu0 0
        %4025 = vmatprep.subr.bf16.mxu0 0
        %4026 = vmatpush2.bf16.msra.mxu0 0
        %4027 = vmatprep.subr.bf16.mxu0 0
        %4028 = vmatpush2.bf16.msra.mxu0 0
        %4029 = vmatprep.subr.bf16.mxu0 0
        %4030 = vmatpush2.bf16.msra.mxu0 0
        %4031 = vmatprep.subr.bf16.mxu0 0
        %4032 = vmatpush2.bf16.msra.mxu0 0
        %4033 = vmatprep.subr.bf16.mxu0 0
        %4034 = vmatpush2.bf16.msra.mxu0 0
        %4035 = vmatprep.subr.bf16.mxu0 0
        %4036 = vmatpush2.bf16.msra.mxu0 0
        %4037 = vmatprep.mubr.bf16.mxu0 0
        %4038 = vmatmul.mubr.bf16.gmra.mxu0 %v4003
        %v4039 = vpop.f32.mrf.mxu0
        %v4040 = vadd.f32 0.0, %v4039
        %v4041 = vpop.f32.mrf.mxu0
        %v4042 = vpop.f32.mrf.mxu0
        %v4043 = vpop.f32.mrf.mxu0
        %4044 = vdwg.mxu0
        %v4045 = vadd.f32 %v3983, %v4040
        %v4046 = vpack.c.bf16 %v3291, %v3291
        %s4047 = scalar_lea.vmem %s10, 192
        %v4048 = vld [vmem:[%s4047] sm:$0xf]
        %v4049 = vld [vmem:[%s4047 + $0x4] sm:$0xf]
        %v4050 = vld [vmem:[%s4047 + $0x8] sm:$0xf]
        %v4051 = vld [vmem:[%s4047 + $0xc] sm:$0xf]
        %v4056 = vunpack.c.l.b16 %v4048
        %v4057 = vunpack.c.l.b16 %v4049
        %v4058 = vunpack.c.l.b16 %v4050
        %v4059 = vunpack.c.l.b16 %v4051
        %v4060 = vpack.c.b16 %v4057, %v4056
        %v4061 = vpack.c.b16 %v4059, %v4058
        %v4065 = vsel %vm3090, %v4046, 0
        %4067 = vmatprep.subr.bf16.mxu0 0
        %4068 = vmatpush1.bf16.msra.mxu0 0
        %4069 = vmatprep.subr.bf16.mxu0 0
        %4070 = vmatpush1.bf16.msra.mxu0 0
        %4071 = vmatprep.subr.bf16.mxu0 0
        %4072 = vmatpush1.bf16.msra.mxu0 0
        %4073 = vmatprep.subr.bf16.mxu0 0
        %4074 = vmatpush1.bf16.msra.mxu0 0
        %4075 = vmatprep.subr.bf16.mxu0 0
        %4076 = vmatpush1.bf16.msra.mxu0 0
        %4077 = vmatprep.subr.bf16.mxu0 0
        %4078 = vmatpush1.bf16.msra.mxu0 0
        %4079 = vmatprep.subr.bf16.mxu0 0
        %4080 = vmatpush1.bf16.msra.mxu0 %v4061
        %4081 = vmatprep.subr.bf16.mxu0 0
        %4082 = vmatpush1.bf16.msra.mxu0 %v4060
        %4083 = vmatprep.subr.bf16.mxu0 0
        %4084 = vmatpush2.bf16.msra.mxu0 0
        %4085 = vmatprep.subr.bf16.mxu0 0
        %4086 = vmatpush2.bf16.msra.mxu0 0
        %4087 = vmatprep.subr.bf16.mxu0 0
        %4088 = vmatpush2.bf16.msra.mxu0 0
        %4089 = vmatprep.subr.bf16.mxu0 0
        %4090 = vmatpush2.bf16.msra.mxu0 0
        %4091 = vmatprep.subr.bf16.mxu0 0
        %4092 = vmatpush2.bf16.msra.mxu0 0
        %4093 = vmatprep.subr.bf16.mxu0 0
        %4094 = vmatpush2.bf16.msra.mxu0 0
        %4095 = vmatprep.subr.bf16.mxu0 0
        %4096 = vmatpush2.bf16.msra.mxu0 0
        %4097 = vmatprep.subr.bf16.mxu0 0
        %4098 = vmatpush2.bf16.msra.mxu0 0
        %4099 = vmatprep.mubr.bf16.mxu0 0
        %4100 = vmatmul.mubr.bf16.gmra.mxu0 %v4065
        %v4101 = vpop.f32.mrf.mxu0
        %v4102 = vadd.f32 0.0, %v4101
        %v4103 = vpop.f32.mrf.mxu0
        %v4104 = vpop.f32.mrf.mxu0
        %v4105 = vpop.f32.mrf.mxu0
        %4106 = vdwg.mxu0
        %v4107 = vadd.f32 %v4045, %v4102
        %v4108 = vpack.c.bf16 %v3294, %v3294
        %s4109 = scalar_lea.vmem %s10, 208
        %v4110 = vld [vmem:[%s4109] sm:$0xf]
        %v4111 = vld [vmem:[%s4109 + $0x4] sm:$0xf]
        %v4112 = vld [vmem:[%s4109 + $0x8] sm:$0xf]
        %v4113 = vld [vmem:[%s4109 + $0xc] sm:$0xf]
        %v4118 = vunpack.c.l.b16 %v4110
        %v4119 = vunpack.c.l.b16 %v4111
        %v4120 = vunpack.c.l.b16 %v4112
        %v4121 = vunpack.c.l.b16 %v4113
        %v4122 = vpack.c.b16 %v4119, %v4118
        %v4123 = vpack.c.b16 %v4121, %v4120
        %v4127 = vsel %vm3090, %v4108, 0
        %4129 = vmatprep.subr.bf16.mxu0 0
        %4130 = vmatpush1.bf16.msra.mxu0 0
        %4131 = vmatprep.subr.bf16.mxu0 0
        %4132 = vmatpush1.bf16.msra.mxu0 0
        %4133 = vmatprep.subr.bf16.mxu0 0
        %4134 = vmatpush1.bf16.msra.mxu0 0
        %4135 = vmatprep.subr.bf16.mxu0 0
        %4136 = vmatpush1.bf16.msra.mxu0 0
        %4137 = vmatprep.subr.bf16.mxu0 0
        %4138 = vmatpush1.bf16.msra.mxu0 0
        %4139 = vmatprep.subr.bf16.mxu0 0
        %4140 = vmatpush1.bf16.msra.mxu0 0
        %4141 = vmatprep.subr.bf16.mxu0 0
        %4142 = vmatpush1.bf16.msra.mxu0 %v4123
        %4143 = vmatprep.subr.bf16.mxu0 0
        %4144 = vmatpush1.bf16.msra.mxu0 %v4122
        %4145 = vmatprep.subr.bf16.mxu0 0
        %4146 = vmatpush2.bf16.msra.mxu0 0
        %4147 = vmatprep.subr.bf16.mxu0 0
        %4148 = vmatpush2.bf16.msra.mxu0 0
        %4149 = vmatprep.subr.bf16.mxu0 0
        %4150 = vmatpush2.bf16.msra.mxu0 0
        %4151 = vmatprep.subr.bf16.mxu0 0
        %4152 = vmatpush2.bf16.msra.mxu0 0
        %4153 = vmatprep.subr.bf16.mxu0 0
        %4154 = vmatpush2.bf16.msra.mxu0 0
        %4155 = vmatprep.subr.bf16.mxu0 0
        %4156 = vmatpush2.bf16.msra.mxu0 0
        %4157 = vmatprep.subr.bf16.mxu0 0
        %4158 = vmatpush2.bf16.msra.mxu0 0
        %4159 = vmatprep.subr.bf16.mxu0 0
        %4160 = vmatpush2.bf16.msra.mxu0 0
        %4161 = vmatprep.mubr.bf16.mxu0 0
        %4162 = vmatmul.mubr.bf16.gmra.mxu0 %v4127
        %v4163 = vpop.f32.mrf.mxu0
        %v4164 = vadd.f32 0.0, %v4163
        %v4165 = vpop.f32.mrf.mxu0
        %v4166 = vpop.f32.mrf.mxu0
        %v4167 = vpop.f32.mrf.mxu0
        %4168 = vdwg.mxu0
        %v4169 = vadd.f32 %v4107, %v4164
        %v4170 = vpack.c.bf16 %v3299, %v3299
        %s4171 = scalar_lea.vmem %s10, 224
        %v4172 = vld [vmem:[%s4171] sm:$0xf]
        %v4173 = vld [vmem:[%s4171 + $0x4] sm:$0xf]
        %v4174 = vld [vmem:[%s4171 + $0x8] sm:$0xf]
        %v4175 = vld [vmem:[%s4171 + $0xc] sm:$0xf]
        %v4180 = vunpack.c.l.b16 %v4172
        %v4181 = vunpack.c.l.b16 %v4173
        %v4182 = vunpack.c.l.b16 %v4174
        %v4183 = vunpack.c.l.b16 %v4175
        %v4184 = vpack.c.b16 %v4181, %v4180
        %v4185 = vpack.c.b16 %v4183, %v4182
        %v4189 = vsel %vm3090, %v4170, 0
        %4191 = vmatprep.subr.bf16.mxu0 0
        %4192 = vmatpush1.bf16.msra.mxu0 0
        %4193 = vmatprep.subr.bf16.mxu0 0
        %4194 = vmatpush1.bf16.msra.mxu0 0
        %4195 = vmatprep.subr.bf16.mxu0 0
        %4196 = vmatpush1.bf16.msra.mxu0 0
        %4197 = vmatprep.subr.bf16.mxu0 0
        %4198 = vmatpush1.bf16.msra.mxu0 0
        %4199 = vmatprep.subr.bf16.mxu0 0
        %4200 = vmatpush1.bf16.msra.mxu0 0
        %4201 = vmatprep.subr.bf16.mxu0 0
        %4202 = vmatpush1.bf16.msra.mxu0 0
        %4203 = vmatprep.subr.bf16.mxu0 0
        %4204 = vmatpush1.bf16.msra.mxu0 %v4185
        %4205 = vmatprep.subr.bf16.mxu0 0
        %4206 = vmatpush1.bf16.msra.mxu0 %v4184
        %4207 = vmatprep.subr.bf16.mxu0 0
        %4208 = vmatpush2.bf16.msra.mxu0 0
        %4209 = vmatprep.subr.bf16.mxu0 0
        %4210 = vmatpush2.bf16.msra.mxu0 0
        %4211 = vmatprep.subr.bf16.mxu0 0
        %4212 = vmatpush2.bf16.msra.mxu0 0
        %4213 = vmatprep.subr.bf16.mxu0 0
        %4214 = vmatpush2.bf16.msra.mxu0 0
        %4215 = vmatprep.subr.bf16.mxu0 0
        %4216 = vmatpush2.bf16.msra.mxu0 0
        %4217 = vmatprep.subr.bf16.mxu0 0
        %4218 = vmatpush2.bf16.msra.mxu0 0
        %4219 = vmatprep.subr.bf16.mxu0 0
        %4220 = vmatpush2.bf16.msra.mxu0 0
        %4221 = vmatprep.subr.bf16.mxu0 0
        %4222 = vmatpush2.bf16.msra.mxu0 0
        %4223 = vmatprep.mubr.bf16.mxu0 0
        %4224 = vmatmul.mubr.bf16.gmra.mxu0 %v4189
        %v4225 = vpop.f32.mrf.mxu0
        %v4226 = vadd.f32 0.0, %v4225
        %v4227 = vpop.f32.mrf.mxu0
        %v4228 = vpop.f32.mrf.mxu0
        %v4229 = vpop.f32.mrf.mxu0
        %4230 = vdwg.mxu0
        %v4231 = vadd.f32 %v4169, %v4226
        %v4232 = vpack.c.bf16 %v3302, %v3302
        %s4233 = scalar_lea.vmem %s10, 240
        %v4234 = vld [vmem:[%s4233] sm:$0xf]
        %v4235 = vld [vmem:[%s4233 + $0x4] sm:$0xf]
        %v4236 = vld [vmem:[%s4233 + $0x8] sm:$0xf]
        %v4237 = vld [vmem:[%s4233 + $0xc] sm:$0xf]
        %v4242 = vunpack.c.l.b16 %v4234
        %v4243 = vunpack.c.l.b16 %v4235
        %v4244 = vunpack.c.l.b16 %v4236
        %v4245 = vunpack.c.l.b16 %v4237
        %v4246 = vpack.c.b16 %v4243, %v4242
        %v4247 = vpack.c.b16 %v4245, %v4244
        %v4251 = vsel %vm3090, %v4232, 0
        %4253 = vmatprep.subr.bf16.mxu0 0
        %4254 = vmatpush1.bf16.msra.mxu0 0
        %4255 = vmatprep.subr.bf16.mxu0 0
        %4256 = vmatpush1.bf16.msra.mxu0 0
        %4257 = vmatprep.subr.bf16.mxu0 0
        %4258 = vmatpush1.bf16.msra.mxu0 0
        %4259 = vmatprep.subr.bf16.mxu0 0
        %4260 = vmatpush1.bf16.msra.mxu0 0
        %4261 = vmatprep.subr.bf16.mxu0 0
        %4262 = vmatpush1.bf16.msra.mxu0 0
        %4263 = vmatprep.subr.bf16.mxu0 0
        %4264 = vmatpush1.bf16.msra.mxu0 0
        %4265 = vmatprep.subr.bf16.mxu0 0
        %4266 = vmatpush1.bf16.msra.mxu0 %v4247
        %4267 = vmatprep.subr.bf16.mxu0 0
        %4268 = vmatpush1.bf16.msra.mxu0 %v4246
        %4269 = vmatprep.subr.bf16.mxu0 0
        %4270 = vmatpush2.bf16.msra.mxu0 0
        %4271 = vmatprep.subr.bf16.mxu0 0
        %4272 = vmatpush2.bf16.msra.mxu0 0
        %4273 = vmatprep.subr.bf16.mxu0 0
        %4274 = vmatpush2.bf16.msra.mxu0 0
        %4275 = vmatprep.subr.bf16.mxu0 0
        %4276 = vmatpush2.bf16.msra.mxu0 0
        %4277 = vmatprep.subr.bf16.mxu0 0
        %4278 = vmatpush2.bf16.msra.mxu0 0
        %4279 = vmatprep.subr.bf16.mxu0 0
        %4280 = vmatpush2.bf16.msra.mxu0 0
        %4281 = vmatprep.subr.bf16.mxu0 0
        %4282 = vmatpush2.bf16.msra.mxu0 0
        %4283 = vmatprep.subr.bf16.mxu0 0
        %4284 = vmatpush2.bf16.msra.mxu0 0
        %4285 = vmatprep.mubr.bf16.mxu0 0
        %4286 = vmatmul.mubr.bf16.gmra.mxu0 %v4251
        %v4287 = vpop.f32.mrf.mxu0
        %v4288 = vadd.f32 0.0, %v4287
        %v4289 = vpop.f32.mrf.mxu0
        %v4290 = vpop.f32.mrf.mxu0
        %v4291 = vpop.f32.mrf.mxu0
        %4292 = vdwg.mxu0
        %v4293 = vadd.f32 %v4231, %v4288
        %v4294 = vld [vmem:[%s11] sm:$0x1]
        %vm4295 = vcmp.lt.s32.totalorder %v3072, 4
        %v4296 = vsel %vm4295, 1, 0
        %v4297 = vcvt.s32.f32 %v4296
        %v4299 = vlaneseq
        %v4300 = vshrl.u32 %v4299, 7
        %v4301 = vsub.s32 0, %v4300
        %v4302 = vrot.slane %v4294, %v4301
        %v4304 = vmul.f32 %v4302, %v4297
        %v4305 = vadd.f32 %v4293, %v4304
        %v4306 = vrot.slane %v4305, 4
        %v4307 = vadd.f32 %v4305, %v4306
        %v4308 = vrot.slane %v4307, 2
        %v4309 = vadd.f32 %v4307, %v4308
        %v4310 = vrot.slane %v4309, 1
        %v4311 = vadd.f32 %v4309, %v4310
        %v4312 = vmul.f32 %v4311, 0.25
        %4313 = vst [vmem:[%s405] sm:$0x1] %v4312
        %s4314 = sand.u32 %s291, 1
        %s4315 = scalar_lea.sflag [#allocation3], %s4314
        %s4316 = sand.u32 %s291, 1
        %s4317 = scalar_lea.vmem [#allocation2], %s4316
        // Predicated region
        $region69: #{discriminator_forward.1} parent=67 // pred_check
          %p4318 = pneg %p301
        $region70: #{discriminator_forward.1} parent=67 // pred_check_branch
          %4320 = sbr.rel (%p4318) target = $region72
        $region71: #{discriminator_forward.1} parent=67 // pred_region
          %s4322 = ssub.s32 16, 16
          %4323 = vsyncadd %s4315, %s4322
          %s4324 = smul.addr %s26, 16
          %s4325 = scalar_lea.hbm %s12, %s4324
          %s4327 = sshll.u32 %s4317, 4
          %s4328 = int_to_ptr.vmem [resolvable:$true] %s4327
          %4330 = dma.vmem_to_hbm [thread:$0]  %s4328, 16, %s4325, %s4315
        $region72: #{discriminator_forward.1} parent=67 // pred_fallthru
          _
      $region68: #{discriminator_forward.1} parent=5 // pred_fallthru
        _
      %p4331 = scmp.le.s32.totalorder 2, %s21
      // Predicated region
      $region73: #{discriminator_forward.1} parent=5 // pred_check
        %p4332 = pneg %p4331
      $region74: #{discriminator_forward.1} parent=5 // pred_check_branch
        %4334 = sbr.rel (%p4332) target = $region76
      $region75: #{discriminator_forward.1} parent=5 // pred_region
        %s4335 = ssub.s32 %s21, 2
        // Predicated region
        $region77: #{discriminator_forward.1} parent=75 // pred_check
          %p4336 = pneg %p307
        $region78: #{discriminator_forward.1} parent=75 // pred_check_branch
          %4338 = sbr.rel (%p4336) target = $region80
        $region79: #{discriminator_forward.1} parent=75 // pred_region
          %s4339 = sand.u32 %s292, 1
          %s4340 = scalar_lea.sflag [#allocation3], %s4339
          %s4341 = sand.u32 %s292, 1
          %s4342 = scalar_lea.vmem [#allocation2], %s4341
          %4343 = dma.done %s4340, 16
        $region80: #{discriminator_forward.1} parent=75 // pred_fallthru
          _
      $region76: #{discriminator_forward.1} parent=5 // pred_fallthru
        _
    $region6: #{discriminator_forward.1} parent=1 // loop_footer
      %s25 = sadd.s32 1, %s21
    $region7: #{discriminator_forward.1} parent=1 // loop_footer_branch
      %20 = sbr.rel target = $region3
    $region8: #{discriminator_forward.1} parent=1 // loop_exit
      _
    %4344 = vsyncpa [#allocation3], 1
    %s4345 = scalar_lea.sflag [#allocation3], 1
    %4346 = vsyncpa %s4345, 1

</llo_original>
